<compile_context>
chip_gen: v6e
topology: v6e:2x2x1
jax: 0.10.0
libtpu: 0.0.40
codegen_flags: <defaults>
</compile_context>

<pallas_src>
import functools
import math

import jax
import jax.numpy as jnp
from jax import lax
from jax.experimental import pallas as pl
from jax.experimental.pallas import tpu as pltpu


# ----------------------------------------------------------------------------
# Fused kernel: entNOT transport map + egNOT ULA sampling loop.
# Layout: columns = pixels (lanes), rows = channels / hidden units (sublanes).
# ----------------------------------------------------------------------------
def _egnot_entnot_kernel(
    x_ref,        # (C, Tn)   f32  tile of x, pixels on lanes
    noise_ref,    # (S, C, Tn)     pre-drawn Gaussian noise, one slab per ULA step
    t_w1t_ref,    # (Hh, C)        entNOT layer-1 weight, transposed
    t_b1_ref,     # (Hh, 1)        entNOT layer-1 bias (column)
    t_w2t_ref,    # (C, Hh)        entNOT layer-2 weight, transposed
    t_b2_ref,     # (C, 1)         entNOT layer-2 bias (column)
    f_w1t_ref,    # (Hh, C)        f_net W1^T  (for  h = tanh(W1^T z + b1))
    f_w1_ref,     # (C, Hh)        f_net W1    (for  grad_f = W1 s)
    f_b1_ref,     # (Hh, 1)        f_net b1 (column)
    f_w2_ref,     # (Hh, 1)        f_net readout weight (column)
    z_out_ref,    # (C, Tn)   f32  sampled y tile
    *,
    eps: float,
    eta: float,
    ula_steps: int,
):
    x = x_ref[...]                                           # (C, Tn)

    # ---- entNOT: proposal_z = T(x) -----------------------------------------
    h0 = jnp.maximum(
        jnp.dot(t_w1t_ref[...], x, preferred_element_type=jnp.float32)
        + t_b1_ref[...],
        0.0,
    )                                                        # (Hh, Tn)
    z = (
        jnp.dot(t_w2t_ref[...], h0, preferred_element_type=jnp.float32)
        + t_b2_ref[...]
    )                                                        # (C, Tn)

    # ---- egNOT.sample: ULA on  f(z) - ||z - x||^2 / (2*eps) -----------------
    # Loop-invariant weights hoisted once (no transposes/broadcast re-emitted
    # per iteration).
    w1t = f_w1t_ref[...]
    w1 = f_w1_ref[...]
    b1 = f_b1_ref[...]
    w2 = f_w2_ref[...]
    inv_eps = 1.0 / eps
    noise_scale = math.sqrt(2.0 * eta)

    def ula_step(k, z):
        # f(z) = sum_pixels w2 . tanh(W1^T z + b1); analytic per-pixel gradient.
        h = jnp.tanh(
            jnp.dot(w1t, z, preferred_element_type=jnp.float32) + b1
        )                                                    # (Hh, Tn)
        s = (1.0 - h * h) * w2                               # (Hh, Tn)
        grad_f = jnp.dot(w1, s, preferred_element_type=jnp.float32)   # (C, Tn)
        grad = grad_f - (z - x) * inv_eps
        return z + eta * grad + noise_scale * noise_ref[k]

    # Static trip count -> fully unrolled for cross-iteration scheduling.
    z = lax.fori_loop(0, ula_steps, ula_step, z, unroll=True)
    z_out_ref[...] = z


# ----------------------------------------------------------------------------
# Wrapper: NCHW <-> (channels, pixels) plumbing + tiled pallas_call.
# ----------------------------------------------------------------------------
def egnot_with_entnot_forward(
    x_nchw, params, noise_scn, *, eps, eta, ula_steps, tile_n=256
):
    B, C, H, W = x_nchw.shape
    N = B * H * W
    assert noise_scn.shape == (ula_steps, C, N), noise_scn.shape

    tile_n = min(tile_n, N)
    assert N % tile_n == 0, (N, tile_n)
    n_tiles = N // tile_n

    # Pixels-on-lanes layout: (C, N).
    x_cn = jnp.transpose(x_nchw, (1, 0, 2, 3)).reshape(C, N).astype(jnp.float32)

    # Re-orient weights once in the wrapper so the kernel loop needs no
    # transposes (layout plumbing, not compute).
    t_w1, t_b1, t_w2, t_b2, f_w1, f_b1, f_w2 = params
    kparams = (
        t_w1.T,   # (Hh, C)
        t_b1.T,   # (Hh, 1)
        t_w2.T,   # (C, Hh)
        t_b2.T,   # (C, 1)
        f_w1.T,   # (Hh, C)
        f_w1,     # (C, Hh)
        f_b1.T,   # (Hh, 1)
        f_w2.T,   # (Hh, 1)
    )

    kernel = functools.partial(
        _egnot_entnot_kernel, eps=eps, eta=eta, ula_steps=ula_steps
    )

    # Weights: full-array blocks, same block for every grid step.
    weight_specs = [pl.BlockSpec(p.shape, lambda i: (0, 0)) for p in kparams]

    z_cn = pl.pallas_call(
        kernel,
        out_shape=jax.ShapeDtypeStruct((C, N), jnp.float32),
        grid=(n_tiles,),
        in_specs=[
            pl.BlockSpec((C, tile_n), lambda i: (0, i)),              # x tile
            pl.BlockSpec((ula_steps, C, tile_n), lambda i: (0, 0, i)),  # noise
        ]
        + weight_specs,
        out_specs=pl.BlockSpec((C, tile_n), lambda i: (0, i)),
        compiler_params=pltpu.CompilerParams(
            dimension_semantics=("parallel",),   # megacore-shard tiles on v7x
        ),
    )(x_cn, noise_scn.astype(jnp.float32), *kparams)

    return jnp.transpose(z_cn.reshape(C, B, H, W), (1, 0, 2, 3))


# ----------------------------------------------------------------------------
# Deterministic parameter construction (synthetic weights, no checkpoint).
# ----------------------------------------------------------------------------
def make_params(key, channels, hidden):
    ks = jax.random.split(key, 6)
    sC = 1.0 / math.sqrt(channels)
    sH = 1.0 / math.sqrt(hidden)
    t_w1 = jax.random.normal(ks[0], (channels, hidden), jnp.float32) * sC
    t_b1 = jnp.zeros((1, hidden), jnp.float32)
    t_w2 = jax.random.normal(ks[1], (hidden, channels), jnp.float32) * sH
    t_b2 = jnp.zeros((1, channels), jnp.float32)
    f_w1 = jax.random.normal(ks[2], (channels, hidden), jnp.float32) * sC
    f_b1 = jax.random.normal(ks[3], (1, hidden), jnp.float32) * 0.01
    f_w2 = jax.random.normal(ks[4], (1, hidden), jnp.float32) * sH
    return (t_w1, t_b1, t_w2, t_b2, f_w1, f_b1, f_w2)


if __name__ == "__main__":
    # Small shapes consistent with an image-to-image NOT model.
    B, C, H, W = 2, 4, 16, 16
    HIDDEN = 32
    ULA_STEPS = 10
    EPS = 1.0      # egNOT.eps
    ETA = 0.05     # sample() default step size

    key = jax.random.PRNGKey(0)
    k_x, k_p, k_n = jax.random.split(key, 3)

    x = jax.random.normal(k_x, (B, C, H, W), jnp.float32)
    params = make_params(k_p, C, HIDDEN)
    # Noise drawn directly in the kernel's (steps, channels, pixels) layout.
    noise = jax.random.normal(k_n, (ULA_STEPS, C, B * H * W), jnp.float32)

    y = egnot_with_entnot_forward(
        x, params, noise, eps=EPS, eta=ETA, ula_steps=ULA_STEPS
    )
    y = jax.block_until_ready(y)

    assert y.shape == (B, C, H, W), y.shape
    assert jnp.all(jnp.isfinite(y))
    print("KERNEL_OK")
</pallas_src>

<mosaic_0001>
module attributes {stable_mosaic.version = 11 : i64} {
  func.func @_egnot_entnot_kernel(%arg0: i32, %arg1: memref<4x256xf32, #tpu.memory_space<vmem>>, %arg2: memref<10x4x256xf32, #tpu.memory_space<vmem>>, %arg3: memref<32x4xf32, #tpu.memory_space<vmem>>, %arg4: memref<32x1xf32, #tpu.memory_space<vmem>>, %arg5: memref<4x32xf32, #tpu.memory_space<vmem>>, %arg6: memref<4x1xf32, #tpu.memory_space<vmem>>, %arg7: memref<32x4xf32, #tpu.memory_space<vmem>>, %arg8: memref<4x32xf32, #tpu.memory_space<vmem>>, %arg9: memref<32x1xf32, #tpu.memory_space<vmem>>, %arg10: memref<32x1xf32, #tpu.memory_space<vmem>>, %arg11: memref<4x256xf32, #tpu.memory_space<vmem>>) attributes {dimension_semantics = [#tpu.dimension_semantics<parallel>], iteration_bounds = array<i64: 2>, scalar_prefetch = 0 : i64, scratch_operands = 0 : i64, tpu.core_type = #tpu.core_type<tc>, window_params = [{transform_indices = @transform_0, window_bounds = array<i64: 4, 256>}, {transform_indices = @transform_1, window_bounds = array<i64: 10, 4, 256>}, {pipeline_mode = #tpu.pipeline_mode<synchronous>, transform_indices = @transform_2, window_bounds = array<i64: 32, 4>}, {pipeline_mode = #tpu.pipeline_mode<synchronous>, transform_indices = @transform_3, window_bounds = array<i64: 32, 1>}, {pipeline_mode = #tpu.pipeline_mode<synchronous>, transform_indices = @transform_4, window_bounds = array<i64: 4, 32>}, {pipeline_mode = #tpu.pipeline_mode<synchronous>, transform_indices = @transform_5, window_bounds = array<i64: 4, 1>}, {pipeline_mode = #tpu.pipeline_mode<synchronous>, transform_indices = @transform_6, window_bounds = array<i64: 32, 4>}, {pipeline_mode = #tpu.pipeline_mode<synchronous>, transform_indices = @transform_7, window_bounds = array<i64: 4, 32>}, {pipeline_mode = #tpu.pipeline_mode<synchronous>, transform_indices = @transform_8, window_bounds = array<i64: 32, 1>}, {pipeline_mode = #tpu.pipeline_mode<synchronous>, transform_indices = @transform_9, window_bounds = array<i64: 32, 1>}, {transform_indices = @transform_10, window_bounds = array<i64: 4, 256>}]} {
    %c0 = arith.constant 0 : index
    %c0_0 = arith.constant 0 : index
    %0 = vector.load %arg1[%c0, %c0_0] : memref<4x256xf32, #tpu.memory_space<vmem>>, vector<4x256xf32>
    %c0_1 = arith.constant 0 : index
    %c0_2 = arith.constant 0 : index
    %1 = vector.load %arg3[%c0_1, %c0_2] : memref<32x4xf32, #tpu.memory_space<vmem>>, vector<32x4xf32>
    %cst = arith.constant dense<0.000000e+00> : vector<32x256xf32>
    %2 = tpu.matmul %1, %0, %cst {dimension_numbers = #tpu.dot_dimension_numbers<[1], [0], [0], [1], [0, 0, 1, 1], [], []>} : vector<32x4xf32>, vector<4x256xf32>, vector<32x256xf32> -> vector<32x256xf32>
    %c0_3 = arith.constant 0 : index
    %c0_4 = arith.constant 0 : index
    %3 = vector.load %arg4[%c0_3, %c0_4] : memref<32x1xf32, #tpu.memory_space<vmem>>, vector<32x1xf32>
    %4 = vector.broadcast %3 : vector<32x1xf32> to vector<32x256xf32>
    %5 = arith.addf %2, %4 : vector<32x256xf32>
    %cst_5 = arith.constant 0.000000e+00 : f32
    %6 = vector.broadcast %cst_5 : f32 to vector<32x256xf32>
    %7 = arith.maximumf %5, %6 : vector<32x256xf32>
    %c0_6 = arith.constant 0 : index
    %c0_7 = arith.constant 0 : index
    %8 = vector.load %arg5[%c0_6, %c0_7] : memref<4x32xf32, #tpu.memory_space<vmem>>, vector<4x32xf32>
    %cst_8 = arith.constant dense<0.000000e+00> : vector<4x256xf32>
    %9 = tpu.matmul %8, %7, %cst_8 {dimension_numbers = #tpu.dot_dimension_numbers<[1], [0], [0], [1], [0, 0, 1, 1], [], []>} : vector<4x32xf32>, vector<32x256xf32>, vector<4x256xf32> -> vector<4x256xf32>
    %c0_9 = arith.constant 0 : index
    %c0_10 = arith.constant 0 : index
    %10 = vector.load %arg6[%c0_9, %c0_10] : memref<4x1xf32, #tpu.memory_space<vmem>>, vector<4x1xf32>
    %11 = vector.broadcast %10 : vector<4x1xf32> to vector<4x256xf32>
    %12 = arith.addf %9, %11 : vector<4x256xf32>
    %c0_11 = arith.constant 0 : index
    %c0_12 = arith.constant 0 : index
    %13 = vector.load %arg7[%c0_11, %c0_12] : memref<32x4xf32, #tpu.memory_space<vmem>>, vector<32x4xf32>
    %c0_13 = arith.constant 0 : index
    %c0_14 = arith.constant 0 : index
    %14 = vector.load %arg8[%c0_13, %c0_14] : memref<4x32xf32, #tpu.memory_space<vmem>>, vector<4x32xf32>
    %c0_15 = arith.constant 0 : index
    %c0_16 = arith.constant 0 : index
    %15 = vector.load %arg9[%c0_15, %c0_16] : memref<32x1xf32, #tpu.memory_space<vmem>>, vector<32x1xf32>
    %c0_17 = arith.constant 0 : index
    %c0_18 = arith.constant 0 : index
    %16 = vector.load %arg10[%c0_17, %c0_18] : memref<32x1xf32, #tpu.memory_space<vmem>>, vector<32x1xf32>
    %c0_i32 = arith.constant 0 : i32
    %cst_19 = arith.constant dense<0.000000e+00> : vector<32x256xf32>
    %17 = tpu.matmul %13, %12, %cst_19 {dimension_numbers = #tpu.dot_dimension_numbers<[1], [0], [0], [1], [0, 0, 1, 1], [], []>} : vector<32x4xf32>, vector<4x256xf32>, vector<32x256xf32> -> vector<32x256xf32>
    %18 = vector.broadcast %15 : vector<32x1xf32> to vector<32x256xf32>
    %19 = arith.addf %17, %18 : vector<32x256xf32>
    %20 = math.tanh %19 : vector<32x256xf32>
    %21 = arith.mulf %20, %20 : vector<32x256xf32>
    %cst_20 = arith.constant 1.000000e+00 : f32
    %22 = vector.broadcast %cst_20 : f32 to vector<32x256xf32>
    %23 = arith.subf %22, %21 : vector<32x256xf32>
    %24 = vector.broadcast %16 : vector<32x1xf32> to vector<32x256xf32>
    %25 = arith.mulf %23, %24 : vector<32x256xf32>
    %cst_21 = arith.constant dense<0.000000e+00> : vector<4x256xf32>
    %26 = tpu.matmul %14, %25, %cst_21 {dimension_numbers = #tpu.dot_dimension_numbers<[1], [0], [0], [1], [0, 0, 1, 1], [], []>} : vector<4x32xf32>, vector<32x256xf32>, vector<4x256xf32> -> vector<4x256xf32>
    %27 = arith.subf %12, %0 : vector<4x256xf32>
    %cst_22 = arith.constant 1.000000e+00 : f32
    %28 = vector.broadcast %cst_22 : f32 to vector<4x256xf32>
    %29 = arith.mulf %27, %28 : vector<4x256xf32>
    %30 = arith.subf %26, %29 : vector<4x256xf32>
    %cst_23 = arith.constant 5.000000e-02 : f32
    %31 = vector.broadcast %cst_23 : f32 to vector<4x256xf32>
    %32 = arith.mulf %31, %30 : vector<4x256xf32>
    %33 = arith.addf %12, %32 : vector<4x256xf32>
    %34 = arith.index_cast %c0_i32 : i32 to index
    %c0_24 = arith.constant 0 : index
    %c0_25 = arith.constant 0 : index
    %35 = vector.load %arg2[%34, %c0_24, %c0_25] : memref<10x4x256xf32, #tpu.memory_space<vmem>>, vector<1x4x256xf32>
    %36 = vector.shape_cast %35 : vector<1x4x256xf32> to vector<4x256xf32>
    %cst_26 = arith.constant 0.316227764 : f32
    %37 = vector.broadcast %cst_26 : f32 to vector<4x256xf32>
    %38 = arith.mulf %37, %36 : vector<4x256xf32>
    %39 = arith.addf %33, %38 : vector<4x256xf32>
    %c1_i32 = arith.constant 1 : i32
    %cst_27 = arith.constant dense<0.000000e+00> : vector<32x256xf32>
    %40 = tpu.matmul %13, %39, %cst_27 {dimension_numbers = #tpu.dot_dimension_numbers<[1], [0], [0], [1], [0, 0, 1, 1], [], []>} : vector<32x4xf32>, vector<4x256xf32>, vector<32x256xf32> -> vector<32x256xf32>
    %41 = vector.broadcast %15 : vector<32x1xf32> to vector<32x256xf32>
    %42 = arith.addf %40, %41 : vector<32x256xf32>
    %43 = math.tanh %42 : vector<32x256xf32>
    %44 = arith.mulf %43, %43 : vector<32x256xf32>
    %cst_28 = arith.constant 1.000000e+00 : f32
    %45 = vector.broadcast %cst_28 : f32 to vector<32x256xf32>
    %46 = arith.subf %45, %44 : vector<32x256xf32>
    %47 = vector.broadcast %16 : vector<32x1xf32> to vector<32x256xf32>
    %48 = arith.mulf %46, %47 : vector<32x256xf32>
    %cst_29 = arith.constant dense<0.000000e+00> : vector<4x256xf32>
    %49 = tpu.matmul %14, %48, %cst_29 {dimension_numbers = #tpu.dot_dimension_numbers<[1], [0], [0], [1], [0, 0, 1, 1], [], []>} : vector<4x32xf32>, vector<32x256xf32>, vector<4x256xf32> -> vector<4x256xf32>
    %50 = arith.subf %39, %0 : vector<4x256xf32>
    %cst_30 = arith.constant 1.000000e+00 : f32
    %51 = vector.broadcast %cst_30 : f32 to vector<4x256xf32>
    %52 = arith.mulf %50, %51 : vector<4x256xf32>
    %53 = arith.subf %49, %52 : vector<4x256xf32>
    %cst_31 = arith.constant 5.000000e-02 : f32
    %54 = vector.broadcast %cst_31 : f32 to vector<4x256xf32>
    %55 = arith.mulf %54, %53 : vector<4x256xf32>
    %56 = arith.addf %39, %55 : vector<4x256xf32>
    %57 = arith.index_cast %c1_i32 : i32 to index
    %c0_32 = arith.constant 0 : index
    %c0_33 = arith.constant 0 : index
    %58 = vector.load %arg2[%57, %c0_32, %c0_33] : memref<10x4x256xf32, #tpu.memory_space<vmem>>, vector<1x4x256xf32>
    %59 = vector.shape_cast %58 : vector<1x4x256xf32> to vector<4x256xf32>
    %cst_34 = arith.constant 0.316227764 : f32
    %60 = vector.broadcast %cst_34 : f32 to vector<4x256xf32>
    %61 = arith.mulf %60, %59 : vector<4x256xf32>
    %62 = arith.addf %56, %61 : vector<4x256xf32>
    %c2_i32 = arith.constant 2 : i32
    %cst_35 = arith.constant dense<0.000000e+00> : vector<32x256xf32>
    %63 = tpu.matmul %13, %62, %cst_35 {dimension_numbers = #tpu.dot_dimension_numbers<[1], [0], [0], [1], [0, 0, 1, 1], [], []>} : vector<32x4xf32>, vector<4x256xf32>, vector<32x256xf32> -> vector<32x256xf32>
    %64 = vector.broadcast %15 : vector<32x1xf32> to vector<32x256xf32>
    %65 = arith.addf %63, %64 : vector<32x256xf32>
    %66 = math.tanh %65 : vector<32x256xf32>
    %67 = arith.mulf %66, %66 : vector<32x256xf32>
    %cst_36 = arith.constant 1.000000e+00 : f32
    %68 = vector.broadcast %cst_36 : f32 to vector<32x256xf32>
    %69 = arith.subf %68, %67 : vector<32x256xf32>
    %70 = vector.broadcast %16 : vector<32x1xf32> to vector<32x256xf32>
    %71 = arith.mulf %69, %70 : vector<32x256xf32>
    %cst_37 = arith.constant dense<0.000000e+00> : vector<4x256xf32>
    %72 = tpu.matmul %14, %71, %cst_37 {dimension_numbers = #tpu.dot_dimension_numbers<[1], [0], [0], [1], [0, 0, 1, 1], [], []>} : vector<4x32xf32>, vector<32x256xf32>, vector<4x256xf32> -> vector<4x256xf32>
    %73 = arith.subf %62, %0 : vector<4x256xf32>
    %cst_38 = arith.constant 1.000000e+00 : f32
    %74 = vector.broadcast %cst_38 : f32 to vector<4x256xf32>
    %75 = arith.mulf %73, %74 : vector<4x256xf32>
    %76 = arith.subf %72, %75 : vector<4x256xf32>
    %cst_39 = arith.constant 5.000000e-02 : f32
    %77 = vector.broadcast %cst_39 : f32 to vector<4x256xf32>
    %78 = arith.mulf %77, %76 : vector<4x256xf32>
    %79 = arith.addf %62, %78 : vector<4x256xf32>
    %80 = arith.index_cast %c2_i32 : i32 to index
    %c0_40 = arith.constant 0 : index
    %c0_41 = arith.constant 0 : index
    %81 = vector.load %arg2[%80, %c0_40, %c0_41] : memref<10x4x256xf32, #tpu.memory_space<vmem>>, vector<1x4x256xf32>
    %82 = vector.shape_cast %81 : vector<1x4x256xf32> to vector<4x256xf32>
    %cst_42 = arith.constant 0.316227764 : f32
    %83 = vector.broadcast %cst_42 : f32 to vector<4x256xf32>
    %84 = arith.mulf %83, %82 : vector<4x256xf32>
    %85 = arith.addf %79, %84 : vector<4x256xf32>
    %c3_i32 = arith.constant 3 : i32
    %cst_43 = arith.constant dense<0.000000e+00> : vector<32x256xf32>
    %86 = tpu.matmul %13, %85, %cst_43 {dimension_numbers = #tpu.dot_dimension_numbers<[1], [0], [0], [1], [0, 0, 1, 1], [], []>} : vector<32x4xf32>, vector<4x256xf32>, vector<32x256xf32> -> vector<32x256xf32>
    %87 = vector.broadcast %15 : vector<32x1xf32> to vector<32x256xf32>
    %88 = arith.addf %86, %87 : vector<32x256xf32>
    %89 = math.tanh %88 : vector<32x256xf32>
    %90 = arith.mulf %89, %89 : vector<32x256xf32>
    %cst_44 = arith.constant 1.000000e+00 : f32
    %91 = vector.broadcast %cst_44 : f32 to vector<32x256xf32>
    %92 = arith.subf %91, %90 : vector<32x256xf32>
    %93 = vector.broadcast %16 : vector<32x1xf32> to vector<32x256xf32>
    %94 = arith.mulf %92, %93 : vector<32x256xf32>
    %cst_45 = arith.constant dense<0.000000e+00> : vector<4x256xf32>
    %95 = tpu.matmul %14, %94, %cst_45 {dimension_numbers = #tpu.dot_dimension_numbers<[1], [0], [0], [1], [0, 0, 1, 1], [], []>} : vector<4x32xf32>, vector<32x256xf32>, vector<4x256xf32> -> vector<4x256xf32>
    %96 = arith.subf %85, %0 : vector<4x256xf32>
    %cst_46 = arith.constant 1.000000e+00 : f32
    %97 = vector.broadcast %cst_46 : f32 to vector<4x256xf32>
    %98 = arith.mulf %96, %97 : vector<4x256xf32>
    %99 = arith.subf %95, %98 : vector<4x256xf32>
    %cst_47 = arith.constant 5.000000e-02 : f32
    %100 = vector.broadcast %cst_47 : f32 to vector<4x256xf32>
    %101 = arith.mulf %100, %99 : vector<4x256xf32>
    %102 = arith.addf %85, %101 : vector<4x256xf32>
    %103 = arith.index_cast %c3_i32 : i32 to index
    %c0_48 = arith.constant 0 : index
    %c0_49 = arith.constant 0 : index
    %104 = vector.load %arg2[%103, %c0_48, %c0_49] : memref<10x4x256xf32, #tpu.memory_space<vmem>>, vector<1x4x256xf32>
    %105 = vector.shape_cast %104 : vector<1x4x256xf32> to vector<4x256xf32>
    %cst_50 = arith.constant 0.316227764 : f32
    %106 = vector.broadcast %cst_50 : f32 to vector<4x256xf32>
    %107 = arith.mulf %106, %105 : vector<4x256xf32>
    %108 = arith.addf %102, %107 : vector<4x256xf32>
    %c4_i32 = arith.constant 4 : i32
    %cst_51 = arith.constant dense<0.000000e+00> : vector<32x256xf32>
    %109 = tpu.matmul %13, %108, %cst_51 {dimension_numbers = #tpu.dot_dimension_numbers<[1], [0], [0], [1], [0, 0, 1, 1], [], []>} : vector<32x4xf32>, vector<4x256xf32>, vector<32x256xf32> -> vector<32x256xf32>
    %110 = vector.broadcast %15 : vector<32x1xf32> to vector<32x256xf32>
    %111 = arith.addf %109, %110 : vector<32x256xf32>
    %112 = math.tanh %111 : vector<32x256xf32>
    %113 = arith.mulf %112, %112 : vector<32x256xf32>
    %cst_52 = arith.constant 1.000000e+00 : f32
    %114 = vector.broadcast %cst_52 : f32 to vector<32x256xf32>
    %115 = arith.subf %114, %113 : vector<32x256xf32>
    %116 = vector.broadcast %16 : vector<32x1xf32> to vector<32x256xf32>
    %117 = arith.mulf %115, %116 : vector<32x256xf32>
    %cst_53 = arith.constant dense<0.000000e+00> : vector<4x256xf32>
    %118 = tpu.matmul %14, %117, %cst_53 {dimension_numbers = #tpu.dot_dimension_numbers<[1], [0], [0], [1], [0, 0, 1, 1], [], []>} : vector<4x32xf32>, vector<32x256xf32>, vector<4x256xf32> -> vector<4x256xf32>
    %119 = arith.subf %108, %0 : vector<4x256xf32>
    %cst_54 = arith.constant 1.000000e+00 : f32
    %120 = vector.broadcast %cst_54 : f32 to vector<4x256xf32>
    %121 = arith.mulf %119, %120 : vector<4x256xf32>
    %122 = arith.subf %118, %121 : vector<4x256xf32>
    %cst_55 = arith.constant 5.000000e-02 : f32
    %123 = vector.broadcast %cst_55 : f32 to vector<4x256xf32>
    %124 = arith.mulf %123, %122 : vector<4x256xf32>
    %125 = arith.addf %108, %124 : vector<4x256xf32>
    %126 = arith.index_cast %c4_i32 : i32 to index
    %c0_56 = arith.constant 0 : index
    %c0_57 = arith.constant 0 : index
    %127 = vector.load %arg2[%126, %c0_56, %c0_57] : memref<10x4x256xf32, #tpu.memory_space<vmem>>, vector<1x4x256xf32>
    %128 = vector.shape_cast %127 : vector<1x4x256xf32> to vector<4x256xf32>
    %cst_58 = arith.constant 0.316227764 : f32
    %129 = vector.broadcast %cst_58 : f32 to vector<4x256xf32>
    %130 = arith.mulf %129, %128 : vector<4x256xf32>
    %131 = arith.addf %125, %130 : vector<4x256xf32>
    %c5_i32 = arith.constant 5 : i32
    %cst_59 = arith.constant dense<0.000000e+00> : vector<32x256xf32>
    %132 = tpu.matmul %13, %131, %cst_59 {dimension_numbers = #tpu.dot_dimension_numbers<[1], [0], [0], [1], [0, 0, 1, 1], [], []>} : vector<32x4xf32>, vector<4x256xf32>, vector<32x256xf32> -> vector<32x256xf32>
    %133 = vector.broadcast %15 : vector<32x1xf32> to vector<32x256xf32>
    %134 = arith.addf %132, %133 : vector<32x256xf32>
    %135 = math.tanh %134 : vector<32x256xf32>
    %136 = arith.mulf %135, %135 : vector<32x256xf32>
    %cst_60 = arith.constant 1.000000e+00 : f32
    %137 = vector.broadcast %cst_60 : f32 to vector<32x256xf32>
    %138 = arith.subf %137, %136 : vector<32x256xf32>
    %139 = vector.broadcast %16 : vector<32x1xf32> to vector<32x256xf32>
    %140 = arith.mulf %138, %139 : vector<32x256xf32>
    %cst_61 = arith.constant dense<0.000000e+00> : vector<4x256xf32>
    %141 = tpu.matmul %14, %140, %cst_61 {dimension_numbers = #tpu.dot_dimension_numbers<[1], [0], [0], [1], [0, 0, 1, 1], [], []>} : vector<4x32xf32>, vector<32x256xf32>, vector<4x256xf32> -> vector<4x256xf32>
    %142 = arith.subf %131, %0 : vector<4x256xf32>
    %cst_62 = arith.constant 1.000000e+00 : f32
    %143 = vector.broadcast %cst_62 : f32 to vector<4x256xf32>
    %144 = arith.mulf %142, %143 : vector<4x256xf32>
    %145 = arith.subf %141, %144 : vector<4x256xf32>
    %cst_63 = arith.constant 5.000000e-02 : f32
    %146 = vector.broadcast %cst_63 : f32 to vector<4x256xf32>
    %147 = arith.mulf %146, %145 : vector<4x256xf32>
    %148 = arith.addf %131, %147 : vector<4x256xf32>
    %149 = arith.index_cast %c5_i32 : i32 to index
    %c0_64 = arith.constant 0 : index
    %c0_65 = arith.constant 0 : index
    %150 = vector.load %arg2[%149, %c0_64, %c0_65] : memref<10x4x256xf32, #tpu.memory_space<vmem>>, vector<1x4x256xf32>
    %151 = vector.shape_cast %150 : vector<1x4x256xf32> to vector<4x256xf32>
    %cst_66 = arith.constant 0.316227764 : f32
    %152 = vector.broadcast %cst_66 : f32 to vector<4x256xf32>
    %153 = arith.mulf %152, %151 : vector<4x256xf32>
    %154 = arith.addf %148, %153 : vector<4x256xf32>
    %c6_i32 = arith.constant 6 : i32
    %cst_67 = arith.constant dense<0.000000e+00> : vector<32x256xf32>
    %155 = tpu.matmul %13, %154, %cst_67 {dimension_numbers = #tpu.dot_dimension_numbers<[1], [0], [0], [1], [0, 0, 1, 1], [], []>} : vector<32x4xf32>, vector<4x256xf32>, vector<32x256xf32> -> vector<32x256xf32>
    %156 = vector.broadcast %15 : vector<32x1xf32> to vector<32x256xf32>
    %157 = arith.addf %155, %156 : vector<32x256xf32>
    %158 = math.tanh %157 : vector<32x256xf32>
    %159 = arith.mulf %158, %158 : vector<32x256xf32>
    %cst_68 = arith.constant 1.000000e+00 : f32
    %160 = vector.broadcast %cst_68 : f32 to vector<32x256xf32>
    %161 = arith.subf %160, %159 : vector<32x256xf32>
    %162 = vector.broadcast %16 : vector<32x1xf32> to vector<32x256xf32>
    %163 = arith.mulf %161, %162 : vector<32x256xf32>
    %cst_69 = arith.constant dense<0.000000e+00> : vector<4x256xf32>
    %164 = tpu.matmul %14, %163, %cst_69 {dimension_numbers = #tpu.dot_dimension_numbers<[1], [0], [0], [1], [0, 0, 1, 1], [], []>} : vector<4x32xf32>, vector<32x256xf32>, vector<4x256xf32> -> vector<4x256xf32>
    %165 = arith.subf %154, %0 : vector<4x256xf32>
    %cst_70 = arith.constant 1.000000e+00 : f32
    %166 = vector.broadcast %cst_70 : f32 to vector<4x256xf32>
    %167 = arith.mulf %165, %166 : vector<4x256xf32>
    %168 = arith.subf %164, %167 : vector<4x256xf32>
    %cst_71 = arith.constant 5.000000e-02 : f32
    %169 = vector.broadcast %cst_71 : f32 to vector<4x256xf32>
    %170 = arith.mulf %169, %168 : vector<4x256xf32>
    %171 = arith.addf %154, %170 : vector<4x256xf32>
    %172 = arith.index_cast %c6_i32 : i32 to index
    %c0_72 = arith.constant 0 : index
    %c0_73 = arith.constant 0 : index
    %173 = vector.load %arg2[%172, %c0_72, %c0_73] : memref<10x4x256xf32, #tpu.memory_space<vmem>>, vector<1x4x256xf32>
    %174 = vector.shape_cast %173 : vector<1x4x256xf32> to vector<4x256xf32>
    %cst_74 = arith.constant 0.316227764 : f32
    %175 = vector.broadcast %cst_74 : f32 to vector<4x256xf32>
    %176 = arith.mulf %175, %174 : vector<4x256xf32>
    %177 = arith.addf %171, %176 : vector<4x256xf32>
    %c7_i32 = arith.constant 7 : i32
    %cst_75 = arith.constant dense<0.000000e+00> : vector<32x256xf32>
    %178 = tpu.matmul %13, %177, %cst_75 {dimension_numbers = #tpu.dot_dimension_numbers<[1], [0], [0], [1], [0, 0, 1, 1], [], []>} : vector<32x4xf32>, vector<4x256xf32>, vector<32x256xf32> -> vector<32x256xf32>
    %179 = vector.broadcast %15 : vector<32x1xf32> to vector<32x256xf32>
    %180 = arith.addf %178, %179 : vector<32x256xf32>
    %181 = math.tanh %180 : vector<32x256xf32>
    %182 = arith.mulf %181, %181 : vector<32x256xf32>
    %cst_76 = arith.constant 1.000000e+00 : f32
    %183 = vector.broadcast %cst_76 : f32 to vector<32x256xf32>
    %184 = arith.subf %183, %182 : vector<32x256xf32>
    %185 = vector.broadcast %16 : vector<32x1xf32> to vector<32x256xf32>
    %186 = arith.mulf %184, %185 : vector<32x256xf32>
    %cst_77 = arith.constant dense<0.000000e+00> : vector<4x256xf32>
    %187 = tpu.matmul %14, %186, %cst_77 {dimension_numbers = #tpu.dot_dimension_numbers<[1], [0], [0], [1], [0, 0, 1, 1], [], []>} : vector<4x32xf32>, vector<32x256xf32>, vector<4x256xf32> -> vector<4x256xf32>
    %188 = arith.subf %177, %0 : vector<4x256xf32>
    %cst_78 = arith.constant 1.000000e+00 : f32
    %189 = vector.broadcast %cst_78 : f32 to vector<4x256xf32>
    %190 = arith.mulf %188, %189 : vector<4x256xf32>
    %191 = arith.subf %187, %190 : vector<4x256xf32>
    %cst_79 = arith.constant 5.000000e-02 : f32
    %192 = vector.broadcast %cst_79 : f32 to vector<4x256xf32>
    %193 = arith.mulf %192, %191 : vector<4x256xf32>
    %194 = arith.addf %177, %193 : vector<4x256xf32>
    %195 = arith.index_cast %c7_i32 : i32 to index
    %c0_80 = arith.constant 0 : index
    %c0_81 = arith.constant 0 : index
    %196 = vector.load %arg2[%195, %c0_80, %c0_81] : memref<10x4x256xf32, #tpu.memory_space<vmem>>, vector<1x4x256xf32>
    %197 = vector.shape_cast %196 : vector<1x4x256xf32> to vector<4x256xf32>
    %cst_82 = arith.constant 0.316227764 : f32
    %198 = vector.broadcast %cst_82 : f32 to vector<4x256xf32>
    %199 = arith.mulf %198, %197 : vector<4x256xf32>
    %200 = arith.addf %194, %199 : vector<4x256xf32>
    %c8_i32 = arith.constant 8 : i32
    %cst_83 = arith.constant dense<0.000000e+00> : vector<32x256xf32>
    %201 = tpu.matmul %13, %200, %cst_83 {dimension_numbers = #tpu.dot_dimension_numbers<[1], [0], [0], [1], [0, 0, 1, 1], [], []>} : vector<32x4xf32>, vector<4x256xf32>, vector<32x256xf32> -> vector<32x256xf32>
    %202 = vector.broadcast %15 : vector<32x1xf32> to vector<32x256xf32>
    %203 = arith.addf %201, %202 : vector<32x256xf32>
    %204 = math.tanh %203 : vector<32x256xf32>
    %205 = arith.mulf %204, %204 : vector<32x256xf32>
    %cst_84 = arith.constant 1.000000e+00 : f32
    %206 = vector.broadcast %cst_84 : f32 to vector<32x256xf32>
    %207 = arith.subf %206, %205 : vector<32x256xf32>
    %208 = vector.broadcast %16 : vector<32x1xf32> to vector<32x256xf32>
    %209 = arith.mulf %207, %208 : vector<32x256xf32>
    %cst_85 = arith.constant dense<0.000000e+00> : vector<4x256xf32>
    %210 = tpu.matmul %14, %209, %cst_85 {dimension_numbers = #tpu.dot_dimension_numbers<[1], [0], [0], [1], [0, 0, 1, 1], [], []>} : vector<4x32xf32>, vector<32x256xf32>, vector<4x256xf32> -> vector<4x256xf32>
    %211 = arith.subf %200, %0 : vector<4x256xf32>
    %cst_86 = arith.constant 1.000000e+00 : f32
    %212 = vector.broadcast %cst_86 : f32 to vector<4x256xf32>
    %213 = arith.mulf %211, %212 : vector<4x256xf32>
    %214 = arith.subf %210, %213 : vector<4x256xf32>
    %cst_87 = arith.constant 5.000000e-02 : f32
    %215 = vector.broadcast %cst_87 : f32 to vector<4x256xf32>
    %216 = arith.mulf %215, %214 : vector<4x256xf32>
    %217 = arith.addf %200, %216 : vector<4x256xf32>
    %218 = arith.index_cast %c8_i32 : i32 to index
    %c0_88 = arith.constant 0 : index
    %c0_89 = arith.constant 0 : index
    %219 = vector.load %arg2[%218, %c0_88, %c0_89] : memref<10x4x256xf32, #tpu.memory_space<vmem>>, vector<1x4x256xf32>
    %220 = vector.shape_cast %219 : vector<1x4x256xf32> to vector<4x256xf32>
    %cst_90 = arith.constant 0.316227764 : f32
    %221 = vector.broadcast %cst_90 : f32 to vector<4x256xf32>
    %222 = arith.mulf %221, %220 : vector<4x256xf32>
    %223 = arith.addf %217, %222 : vector<4x256xf32>
    %c9_i32 = arith.constant 9 : i32
    %cst_91 = arith.constant dense<0.000000e+00> : vector<32x256xf32>
    %224 = tpu.matmul %13, %223, %cst_91 {dimension_numbers = #tpu.dot_dimension_numbers<[1], [0], [0], [1], [0, 0, 1, 1], [], []>} : vector<32x4xf32>, vector<4x256xf32>, vector<32x256xf32> -> vector<32x256xf32>
    %225 = vector.broadcast %15 : vector<32x1xf32> to vector<32x256xf32>
    %226 = arith.addf %224, %225 : vector<32x256xf32>
    %227 = math.tanh %226 : vector<32x256xf32>
    %228 = arith.mulf %227, %227 : vector<32x256xf32>
    %cst_92 = arith.constant 1.000000e+00 : f32
    %229 = vector.broadcast %cst_92 : f32 to vector<32x256xf32>
    %230 = arith.subf %229, %228 : vector<32x256xf32>
    %231 = vector.broadcast %16 : vector<32x1xf32> to vector<32x256xf32>
    %232 = arith.mulf %230, %231 : vector<32x256xf32>
    %cst_93 = arith.constant dense<0.000000e+00> : vector<4x256xf32>
    %233 = tpu.matmul %14, %232, %cst_93 {dimension_numbers = #tpu.dot_dimension_numbers<[1], [0], [0], [1], [0, 0, 1, 1], [], []>} : vector<4x32xf32>, vector<32x256xf32>, vector<4x256xf32> -> vector<4x256xf32>
    %234 = arith.subf %223, %0 : vector<4x256xf32>
    %cst_94 = arith.constant 1.000000e+00 : f32
    %235 = vector.broadcast %cst_94 : f32 to vector<4x256xf32>
    %236 = arith.mulf %234, %235 : vector<4x256xf32>
    %237 = arith.subf %233, %236 : vector<4x256xf32>
    %cst_95 = arith.constant 5.000000e-02 : f32
    %238 = vector.broadcast %cst_95 : f32 to vector<4x256xf32>
    %239 = arith.mulf %238, %237 : vector<4x256xf32>
    %240 = arith.addf %223, %239 : vector<4x256xf32>
    %241 = arith.index_cast %c9_i32 : i32 to index
    %c0_96 = arith.constant 0 : index
    %c0_97 = arith.constant 0 : index
    %242 = vector.load %arg2[%241, %c0_96, %c0_97] : memref<10x4x256xf32, #tpu.memory_space<vmem>>, vector<1x4x256xf32>
    %243 = vector.shape_cast %242 : vector<1x4x256xf32> to vector<4x256xf32>
    %cst_98 = arith.constant 0.316227764 : f32
    %244 = vector.broadcast %cst_98 : f32 to vector<4x256xf32>
    %245 = arith.mulf %244, %243 : vector<4x256xf32>
    %246 = arith.addf %240, %245 : vector<4x256xf32>
    %c10_i32 = arith.constant 10 : i32
    %c0_99 = arith.constant 0 : index
    %c0_100 = arith.constant 0 : index
    %247 = vector.load %arg11[%c0_99, %c0_100] : memref<4x256xf32, #tpu.memory_space<vmem>>, vector<4x256xf32>
    tpu.vector_store %arg11[%c0_99, %c0_100], %246 {strides = array<i32>} : memref<4x256xf32, #tpu.memory_space<vmem>>, vector<4x256xf32>,
    return
  }
  func.func @transform_0(%arg0: i32) -> (i32, i32) {
    %c0_i32 = arith.constant 0 : i32
    %c0_i32_0 = arith.constant 0 : i32
    return %c0_i32, %arg0 : i32, i32
  }
  func.func @transform_1(%arg0: i32) -> (i32, i32, i32) {
    %c0_i32 = arith.constant 0 : i32
    %c0_i32_0 = arith.constant 0 : i32
    %c0_i32_1 = arith.constant 0 : i32
    return %c0_i32, %c0_i32_0, %arg0 : i32, i32, i32
  }
  func.func @transform_2(%arg0: i32) -> (i32, i32) {
    %c0_i32 = arith.constant 0 : i32
    %c0_i32_0 = arith.constant 0 : i32
    %c0_i32_1 = arith.constant 0 : i32
    return %c0_i32, %c0_i32_0 : i32, i32
  }
  func.func @transform_3(%arg0: i32) -> (i32, i32) {
    %c0_i32 = arith.constant 0 : i32
    %c0_i32_0 = arith.constant 0 : i32
    %c0_i32_1 = arith.constant 0 : i32
    return %c0_i32, %c0_i32_0 : i32, i32
  }
  func.func @transform_4(%arg0: i32) -> (i32, i32) {
    %c0_i32 = arith.constant 0 : i32
    %c0_i32_0 = arith.constant 0 : i32
    %c0_i32_1 = arith.constant 0 : i32
    return %c0_i32, %c0_i32_0 : i32, i32
  }
  func.func @transform_5(%arg0: i32) -> (i32, i32) {
    %c0_i32 = arith.constant 0 : i32
    %c0_i32_0 = arith.constant 0 : i32
    %c0_i32_1 = arith.constant 0 : i32
    return %c0_i32, %c0_i32_0 : i32, i32
  }
  func.func @transform_6(%arg0: i32) -> (i32, i32) {
    %c0_i32 = arith.constant 0 : i32
    %c0_i32_0 = arith.constant 0 : i32
    %c0_i32_1 = arith.constant 0 : i32
    return %c0_i32, %c0_i32_0 : i32, i32
  }
  func.func @transform_7(%arg0: i32) -> (i32, i32) {
    %c0_i32 = arith.constant 0 : i32
    %c0_i32_0 = arith.constant 0 : i32
    %c0_i32_1 = arith.constant 0 : i32
    return %c0_i32, %c0_i32_0 : i32, i32
  }
  func.func @transform_8(%arg0: i32) -> (i32, i32) {
    %c0_i32 = arith.constant 0 : i32
    %c0_i32_0 = arith.constant 0 : i32
    %c0_i32_1 = arith.constant 0 : i32
    return %c0_i32, %c0_i32_0 : i32, i32
  }
  func.func @transform_9(%arg0: i32) -> (i32, i32) {
    %c0_i32 = arith.constant 0 : i32
    %c0_i32_0 = arith.constant 0 : i32
    %c0_i32_1 = arith.constant 0 : i32
    return %c0_i32, %c0_i32_0 : i32, i32
  }
  func.func @transform_10(%arg0: i32) -> (i32, i32) {
    %c0_i32 = arith.constant 0 : i32
    %c0_i32_0 = arith.constant 0 : i32
    return %c0_i32, %arg0 : i32, i32
  }
}

</mosaic_0001>

<llo_original>
// kernel: tpu_custom_call.1
$region0: #{tpu_custom_call.1}
  #allocation0 [shape = 'u32[]', space=smem, size = 0x4, offset = 0x4, fixed_abs, tag = 'smem constant byte address 0x4 - core index']
  #allocation1 [shape = 'u32[144,128]{1,0:T(1,128)}', space=vmem, size = 0x12000, scoped, tag = 'internal scratch']
  %s0 = inlined_call_operand.vmem [shape: f32[4,512], index: 0, kind: input, shape index: {}]
  %s1 = inlined_call_operand.vmem [shape: f32[10,4,512], index: 1, kind: input, shape index: {}]
  %s2 = inlined_call_operand.vmem [shape: f32[32,4], index: 2, kind: input, shape index: {}]
  %s3 = inlined_call_operand.vmem [shape: f32[32,1], index: 3, kind: input, shape index: {}]
  %s4 = inlined_call_operand.hbm [shape: f32[4,32], index: 4, kind: input, shape index: {}]
  %s5 = inlined_call_operand.vmem [shape: f32[4,1], index: 5, kind: input, shape index: {}]
  %s6 = inlined_call_operand.vmem [shape: f32[32,4], index: 6, kind: input, shape index: {}]
  %s7 = inlined_call_operand.vmem [shape: f32[4,32], index: 7, kind: input, shape index: {}]
  %s8 = inlined_call_operand.vmem [shape: f32[32,1], index: 8, kind: input, shape index: {}]
  %s9 = inlined_call_operand.vmem [shape: f32[32,1], index: 9, kind: input, shape index: {}]
  %s10 = inlined_call_operand.hbm [shape: f32[4,512], index: 10, kind: output, shape index: {}]
  %s11 = sld [smem:[#allocation0]]
  $region115: #{tpu_custom_call.1} parent=0
    _
  %s13 = ssub.s32 1, %s11
  %s14 = scalar_select 0, %s13, %s11
  $region1: #{tpu_custom_call.1} parent=0
    #allocation2 [shape = 'u8[81920]{0}', space=vmem, size = 0x14000, scoped, tag = 'input window, operand 1']
    #allocation3 [shape = 'u8[2048]{0}', space=vmem, size = 0x800, scoped, tag = 'input window, operand 4, single buffered']
    #allocation4 [shape = 's32[2]{0}', space=sflag, size = 0x8, scoped, tag = 'scoped memory for tpu_custom_call.1']
    #allocation5 [shape = 's32[2]{0}', space=sflag, size = 0x8, scoped, tag = 'scoped memory for tpu_custom_call.1']
    #allocation6 [shape = 'u8[8192]{0}', space=vmem, size = 0x2000, scoped, tag = 'output window, operand 0']
    %15 = vsyncpa [#allocation4], 0
    %16 = vsyncpa [#allocation5], 0
    %s17 = scalar_lea.sflag [#allocation5], 1
    %18 = vsyncpa %s17, 0
    loop: start=0, step=1, limit=4
    $region2: #{tpu_custom_call.1} parent=1 // loop_pre_header
      _
    $region3: #{tpu_custom_call.1} parent=1 // loop_header
      %s20 = sphi 0, %s24
      %p21 = scmp.ge.s32.totalorder %s20, 4
      %s30 = sphi 0, %s32
      %s33 = sphi 0, %s30
      %s34 = sphi 0, %s33
      %s50 = sphi 0, %s34
      %s56 = sphi 0, %s58
      %s59 = sphi 0, %s56
      %s60 = sphi 0, %s59
      %s76 = sphi 0, %s60
      %s80 = sphi 0, %s80
      %s82 = sphi 0, %s80
      %s83 = sphi 0, %s82
      %s97 = sphi 0, %s83
      %s101 = sphi 0, %s101
      %s103 = sphi 0, %s101
      %s104 = sphi 0, %s103
      %s118 = sphi 0, %s104
      %s122 = sphi 0, %s122
      %s124 = sphi 0, %s122
      %s125 = sphi 0, %s124
      %s139 = sphi 0, %s125
      %s143 = sphi 0, %s143
      %s145 = sphi 0, %s143
      %s146 = sphi 0, %s145
      %s160 = sphi 0, %s146
      %s164 = sphi 0, %s164
      %s166 = sphi 0, %s164
      %s167 = sphi 0, %s166
      %s181 = sphi 0, %s167
      %s185 = sphi 0, %s185
      %s187 = sphi 0, %s185
      %s188 = sphi 0, %s187
      %s202 = sphi 0, %s188
      %s206 = sphi 0, %s206
      %s208 = sphi 0, %s206
      %s209 = sphi 0, %s208
      %s223 = sphi 0, %s209
      %s227 = sphi 0, %s227
      %s229 = sphi 0, %s227
      %s230 = sphi 0, %s229
      %s244 = sphi 0, %s230
      %s250 = sphi 0, %s252
      %s253 = sphi 0, %s250
      %s254 = sphi 0, %s253
      %s270 = sphi 0, %s254
    $region4: #{tpu_custom_call.1} parent=1 // loop_header_branch
      %23 = sbr.rel (%p21) target = $region8
    $region5: #{tpu_custom_call.1} parent=1 // loop_body
      %s25 = ssub.s32 %s20, 1
      %s26 = ssub.s32 %s20, 2
      %s27 = sadd.s32 %s20, 1
      %s28 = ssub.s32 %s20, %s27
      %p29 = scmp.eq.s32.totalorder %s28, 0
      %s31 = sadd.s32 %s30, 1
      %s32 = scalar_select %p29, %s30, %s31
      %p35 = pneg %p29
      %p36 = scmp.eq.s32.totalorder %s20, 1
      %p37 = por %p35, %p36
      %p38 = scmp.ne.s32.totalorder %s30, %s33
      %p39 = scmp.eq.s32.totalorder %s20, 0
      %p40 = por %p38, %p39
      %p41 = scmp.ne.s32.totalorder %s30, %s33
      %p42 = scmp.eq.s32.totalorder %s25, 1
      %p43 = por %p41, %p42
      %p44 = scmp.ne.s32.totalorder %s33, %s34
      %p45 = scmp.eq.s32.totalorder %s25, 0
      %p46 = por %p44, %p45
      %p47 = scmp.ne.s32.totalorder %s33, %s34
      %p48 = scmp.eq.s32.totalorder %s26, 1
      %p49 = por %p47, %p48
      %p51 = scmp.ne.s32.totalorder %s34, %s50
      %p52 = scmp.eq.s32.totalorder %s26, 0
      %p53 = por %p51, %p52
      %s54 = ssub.s32 %s20, %s27
      %p55 = scmp.eq.s32.totalorder %s54, 0
      %s57 = sadd.s32 %s56, 1
      %s58 = scalar_select %p55, %s56, %s57
      %p61 = pneg %p55
      %p62 = scmp.eq.s32.totalorder %s20, 1
      %p63 = por %p61, %p62
      %p64 = scmp.ne.s32.totalorder %s56, %s59
      %p65 = scmp.eq.s32.totalorder %s20, 0
      %p66 = por %p64, %p65
      %p67 = scmp.ne.s32.totalorder %s56, %s59
      %p68 = scmp.eq.s32.totalorder %s25, 1
      %p69 = por %p67, %p68
      %p70 = scmp.ne.s32.totalorder %s59, %s60
      %p71 = scmp.eq.s32.totalorder %s25, 0
      %p72 = por %p70, %p71
      %p73 = scmp.ne.s32.totalorder %s59, %s60
      %p74 = scmp.eq.s32.totalorder %s26, 1
      %p75 = por %p73, %p74
      %p77 = scmp.ne.s32.totalorder %s60, %s76
      %p78 = scmp.eq.s32.totalorder %s26, 0
      %p79 = por %p77, %p78
      %s81 = sadd.s32 %s80, 1
      %p84 = scmp.eq.s32.totalorder %s20, 1
      %p85 = scmp.ne.s32.totalorder %s80, %s82
      %p86 = scmp.eq.s32.totalorder %s20, 0
      %p87 = por %p85, %p86
      %p88 = scmp.ne.s32.totalorder %s80, %s82
      %p89 = scmp.eq.s32.totalorder %s25, 1
      %p90 = por %p88, %p89
      %p91 = scmp.ne.s32.totalorder %s82, %s83
      %p92 = scmp.eq.s32.totalorder %s25, 0
      %p93 = por %p91, %p92
      %p94 = scmp.ne.s32.totalorder %s82, %s83
      %p95 = scmp.eq.s32.totalorder %s26, 1
      %p96 = por %p94, %p95
      %p98 = scmp.ne.s32.totalorder %s83, %s97
      %p99 = scmp.eq.s32.totalorder %s26, 0
      %p100 = por %p98, %p99
      %s102 = sadd.s32 %s101, 1
      %p105 = scmp.eq.s32.totalorder %s20, 1
      %p106 = scmp.ne.s32.totalorder %s101, %s103
      %p107 = scmp.eq.s32.totalorder %s20, 0
      %p108 = por %p106, %p107
      %p109 = scmp.ne.s32.totalorder %s101, %s103
      %p110 = scmp.eq.s32.totalorder %s25, 1
      %p111 = por %p109, %p110
      %p112 = scmp.ne.s32.totalorder %s103, %s104
      %p113 = scmp.eq.s32.totalorder %s25, 0
      %p114 = por %p112, %p113
      %p115 = scmp.ne.s32.totalorder %s103, %s104
      %p116 = scmp.eq.s32.totalorder %s26, 1
      %p117 = por %p115, %p116
      %p119 = scmp.ne.s32.totalorder %s104, %s118
      %p120 = scmp.eq.s32.totalorder %s26, 0
      %p121 = por %p119, %p120
      %s123 = sadd.s32 %s122, 1
      %p126 = scmp.eq.s32.totalorder %s20, 1
      %p127 = scmp.ne.s32.totalorder %s122, %s124
      %p128 = scmp.eq.s32.totalorder %s20, 0
      %p129 = por %p127, %p128
      %p130 = scmp.ne.s32.totalorder %s122, %s124
      %p131 = scmp.eq.s32.totalorder %s25, 1
      %p132 = por %p130, %p131
      %p133 = scmp.ne.s32.totalorder %s124, %s125
      %p134 = scmp.eq.s32.totalorder %s25, 0
      %p135 = por %p133, %p134
      %p136 = scmp.ne.s32.totalorder %s124, %s125
      %p137 = scmp.eq.s32.totalorder %s26, 1
      %p138 = por %p136, %p137
      %p140 = scmp.ne.s32.totalorder %s125, %s139
      %p141 = scmp.eq.s32.totalorder %s26, 0
      %p142 = por %p140, %p141
      %s144 = sadd.s32 %s143, 1
      %p147 = scmp.eq.s32.totalorder %s20, 1
      %p148 = scmp.ne.s32.totalorder %s143, %s145
      %p149 = scmp.eq.s32.totalorder %s20, 0
      %p150 = por %p148, %p149
      %p151 = scmp.ne.s32.totalorder %s143, %s145
      %p152 = scmp.eq.s32.totalorder %s25, 1
      %p153 = por %p151, %p152
      %p154 = scmp.ne.s32.totalorder %s145, %s146
      %p155 = scmp.eq.s32.totalorder %s25, 0
      %p156 = por %p154, %p155
      %p157 = scmp.ne.s32.totalorder %s145, %s146
      %p158 = scmp.eq.s32.totalorder %s26, 1
      %p159 = por %p157, %p158
      %p161 = scmp.ne.s32.totalorder %s146, %s160
      %p162 = scmp.eq.s32.totalorder %s26, 0
      %p163 = por %p161, %p162
      %s165 = sadd.s32 %s164, 1
      %p168 = scmp.eq.s32.totalorder %s20, 1
      %p169 = scmp.ne.s32.totalorder %s164, %s166
      %p170 = scmp.eq.s32.totalorder %s20, 0
      %p171 = por %p169, %p170
      %p172 = scmp.ne.s32.totalorder %s164, %s166
      %p173 = scmp.eq.s32.totalorder %s25, 1
      %p174 = por %p172, %p173
      %p175 = scmp.ne.s32.totalorder %s166, %s167
      %p176 = scmp.eq.s32.totalorder %s25, 0
      %p177 = por %p175, %p176
      %p178 = scmp.ne.s32.totalorder %s166, %s167
      %p179 = scmp.eq.s32.totalorder %s26, 1
      %p180 = por %p178, %p179
      %p182 = scmp.ne.s32.totalorder %s167, %s181
      %p183 = scmp.eq.s32.totalorder %s26, 0
      %p184 = por %p182, %p183
      %s186 = sadd.s32 %s185, 1
      %p189 = scmp.eq.s32.totalorder %s20, 1
      %p190 = scmp.ne.s32.totalorder %s185, %s187
      %p191 = scmp.eq.s32.totalorder %s20, 0
      %p192 = por %p190, %p191
      %p193 = scmp.ne.s32.totalorder %s185, %s187
      %p194 = scmp.eq.s32.totalorder %s25, 1
      %p195 = por %p193, %p194
      %p196 = scmp.ne.s32.totalorder %s187, %s188
      %p197 = scmp.eq.s32.totalorder %s25, 0
      %p198 = por %p196, %p197
      %p199 = scmp.ne.s32.totalorder %s187, %s188
      %p200 = scmp.eq.s32.totalorder %s26, 1
      %p201 = por %p199, %p200
      %p203 = scmp.ne.s32.totalorder %s188, %s202
      %p204 = scmp.eq.s32.totalorder %s26, 0
      %p205 = por %p203, %p204
      %s207 = sadd.s32 %s206, 1
      %p210 = scmp.eq.s32.totalorder %s20, 1
      %p211 = scmp.ne.s32.totalorder %s206, %s208
      %p212 = scmp.eq.s32.totalorder %s20, 0
      %p213 = por %p211, %p212
      %p214 = scmp.ne.s32.totalorder %s206, %s208
      %p215 = scmp.eq.s32.totalorder %s25, 1
      %p216 = por %p214, %p215
      %p217 = scmp.ne.s32.totalorder %s208, %s209
      %p218 = scmp.eq.s32.totalorder %s25, 0
      %p219 = por %p217, %p218
      %p220 = scmp.ne.s32.totalorder %s208, %s209
      %p221 = scmp.eq.s32.totalorder %s26, 1
      %p222 = por %p220, %p221
      %p224 = scmp.ne.s32.totalorder %s209, %s223
      %p225 = scmp.eq.s32.totalorder %s26, 0
      %p226 = por %p224, %p225
      %s228 = sadd.s32 %s227, 1
      %p231 = scmp.eq.s32.totalorder %s20, 1
      %p232 = scmp.ne.s32.totalorder %s227, %s229
      %p233 = scmp.eq.s32.totalorder %s20, 0
      %p234 = por %p232, %p233
      %p235 = scmp.ne.s32.totalorder %s227, %s229
      %p236 = scmp.eq.s32.totalorder %s25, 1
      %p237 = por %p235, %p236
      %p238 = scmp.ne.s32.totalorder %s229, %s230
      %p239 = scmp.eq.s32.totalorder %s25, 0
      %p240 = por %p238, %p239
      %p241 = scmp.ne.s32.totalorder %s229, %s230
      %p242 = scmp.eq.s32.totalorder %s26, 1
      %p243 = por %p241, %p242
      %p245 = scmp.ne.s32.totalorder %s230, %s244
      %p246 = scmp.eq.s32.totalorder %s26, 0
      %p247 = por %p245, %p246
      %s248 = ssub.s32 %s20, %s27
      %p249 = scmp.eq.s32.totalorder %s248, 0
      %s251 = sadd.s32 %s250, 1
      %s252 = scalar_select %p249, %s250, %s251
      %p255 = pneg %p249
      %p256 = scmp.eq.s32.totalorder %s20, 1
      %p257 = por %p255, %p256
      %p258 = scmp.ne.s32.totalorder %s250, %s253
      %p259 = scmp.eq.s32.totalorder %s20, 0
      %p260 = por %p258, %p259
      %p261 = scmp.ne.s32.totalorder %s250, %s253
      %p262 = scmp.eq.s32.totalorder %s25, 1
      %p263 = por %p261, %p262
      %p264 = scmp.ne.s32.totalorder %s253, %s254
      %p265 = scmp.eq.s32.totalorder %s25, 0
      %p266 = por %p264, %p265
      %p267 = scmp.ne.s32.totalorder %s253, %s254
      %p268 = scmp.eq.s32.totalorder %s26, 1
      %p269 = por %p267, %p268
      %p271 = scmp.ne.s32.totalorder %s254, %s270
      %p272 = scmp.eq.s32.totalorder %s26, 0
      %p273 = por %p271, %p272
      %p274 = scmp.le.s32.totalorder 1, %s20
      %p275 = scmp.lt.s32.totalorder %s20, 3
      %p276 = pnand %p274, %p275
      %p277 = pneg %p276
      // Predicated region
      $region9: #{tpu_custom_call.1} parent=5 // pred_check
        _
      $region10: #{tpu_custom_call.1} parent=5 // pred_check_branch
        %279 = sbr.rel (%p276) target = $region12
      $region11: #{tpu_custom_call.1} parent=5 // pred_region
        %s280 = ssub.s32 %s20, 1
        // Predicated region
        $region13: #{tpu_custom_call.1} parent=11 // pred_check
          %p281 = pneg %p93
        $region14: #{tpu_custom_call.1} parent=11 // pred_check_branch
          %283 = sbr.rel (%p281) target = $region16
        $region15: #{tpu_custom_call.1} parent=11 // pred_region
          _
        $region16: #{tpu_custom_call.1} parent=11 // pred_fallthru
          _
        // Predicated region
        $region17: #{tpu_custom_call.1} parent=11 // pred_check
          %p284 = pneg %p114
        $region18: #{tpu_custom_call.1} parent=11 // pred_check_branch
          %286 = sbr.rel (%p284) target = $region20
        $region19: #{tpu_custom_call.1} parent=11 // pred_region
          _
        $region20: #{tpu_custom_call.1} parent=11 // pred_fallthru
          _
        // Predicated region
        $region21: #{tpu_custom_call.1} parent=11 // pred_check
          %p287 = pneg %p135
        $region22: #{tpu_custom_call.1} parent=11 // pred_check_branch
          %289 = sbr.rel (%p287) target = $region24
        $region23: #{tpu_custom_call.1} parent=11 // pred_region
          %s291 = ssub.s32 64, 64
          %292 = vsyncadd [#allocation4], %s291
          %s294 = sshll.u32 [#allocation3], 4
          %s295 = int_to_ptr.vmem [resolvable:$true] %s294
          %297 = dma.hbm_to_vmem [thread:$0]  %s4, 64, %s295, [#allocation4]
        $region24: #{tpu_custom_call.1} parent=11 // pred_fallthru
          _
        // Predicated region
        $region25: #{tpu_custom_call.1} parent=11 // pred_check
          %p298 = pneg %p156
        $region26: #{tpu_custom_call.1} parent=11 // pred_check_branch
          %300 = sbr.rel (%p298) target = $region28
        $region27: #{tpu_custom_call.1} parent=11 // pred_region
          _
        $region28: #{tpu_custom_call.1} parent=11 // pred_fallthru
          _
        // Predicated region
        $region29: #{tpu_custom_call.1} parent=11 // pred_check
          %p301 = pneg %p177
        $region30: #{tpu_custom_call.1} parent=11 // pred_check_branch
          %303 = sbr.rel (%p301) target = $region32
        $region31: #{tpu_custom_call.1} parent=11 // pred_region
          _
        $region32: #{tpu_custom_call.1} parent=11 // pred_fallthru
          _
        // Predicated region
        $region33: #{tpu_custom_call.1} parent=11 // pred_check
          %p304 = pneg %p198
        $region34: #{tpu_custom_call.1} parent=11 // pred_check_branch
          %306 = sbr.rel (%p304) target = $region36
        $region35: #{tpu_custom_call.1} parent=11 // pred_region
          _
        $region36: #{tpu_custom_call.1} parent=11 // pred_fallthru
          _
        // Predicated region
        $region37: #{tpu_custom_call.1} parent=11 // pred_check
          %p307 = pneg %p219
        $region38: #{tpu_custom_call.1} parent=11 // pred_check_branch
          %309 = sbr.rel (%p307) target = $region40
        $region39: #{tpu_custom_call.1} parent=11 // pred_region
          _
        $region40: #{tpu_custom_call.1} parent=11 // pred_fallthru
          _
        // Predicated region
        $region41: #{tpu_custom_call.1} parent=11 // pred_check
          %p310 = pneg %p240
        $region42: #{tpu_custom_call.1} parent=11 // pred_check_branch
          %312 = sbr.rel (%p310) target = $region44
        $region43: #{tpu_custom_call.1} parent=11 // pred_region
          _
        $region44: #{tpu_custom_call.1} parent=11 // pred_fallthru
          _
      $region12: #{tpu_custom_call.1} parent=5 // pred_fallthru
        _
      %p313 = scmp.lt.s32.totalorder %s20, 2
      // Predicated region
      $region45: #{tpu_custom_call.1} parent=5 // pred_check
        %p314 = pneg %p313
      $region46: #{tpu_custom_call.1} parent=5 // pred_check_branch
        %316 = sbr.rel (%p314) target = $region48
      $region47: #{tpu_custom_call.1} parent=5 // pred_region
        // Predicated region
        $region49: #{tpu_custom_call.1} parent=47 // pred_check
          %p317 = pneg %p40
        $region50: #{tpu_custom_call.1} parent=47 // pred_check_branch
          %319 = sbr.rel (%p317) target = $region52
        $region51: #{tpu_custom_call.1} parent=47 // pred_region
          %s320 = smul.u32 2, %s20
          %p321 = scmp.lt.s32.totalorder %s320, 3
          %s322 = scalar_select %p321, %s320, 3
          %s323 = smul.addr %s322, 4
          %s324 = scalar_lea.vmem %s0, %s323
          %s325 = smul.u32 2, %s20
        $region52: #{tpu_custom_call.1} parent=47 // pred_fallthru
          _
        // Predicated region
        $region53: #{tpu_custom_call.1} parent=47 // pred_check
          %p326 = pneg %p66
        $region54: #{tpu_custom_call.1} parent=47 // pred_check_branch
          %328 = sbr.rel (%p326) target = $region56
        $region55: #{tpu_custom_call.1} parent=47 // pred_region
          %s329 = sand.u32 %s56, 1
          %s330 = sand.u32 %s56, 1
          %s331 = smul.addr %s330, 80
          %s332 = scalar_lea.vmem [#allocation2], %s331
          %s333 = smul.u32 2, %s20
          %s334 = smul.addr %s333, 4
          %s335 = scalar_lea.vmem %s1, %s334
          // Predicated region
          $region57: #{tpu_custom_call.1} parent=55 // pred_check
            _
          $region58: #{tpu_custom_call.1} parent=55 // pred_check_branch
            %337 = sbr.rel (0) target = $region60
          $region59: #{tpu_custom_call.1} parent=55 // pred_region
            // Predicated region
            $region61: #{tpu_custom_call.1} parent=59 // pred_check
              _
            $region62: #{tpu_custom_call.1} parent=59 // pred_check_branch
              %339 = sbr.rel (0) target = $region64
            $region63: #{tpu_custom_call.1} parent=59 // pred_region
              // Predicated region
              $region76: #{tpu_custom_call.1} parent=63 // pred_check
                _
              $region77: #{tpu_custom_call.1} parent=63 // pred_check_branch
                %373 = sbr.rel (0) target = $region79
              $region78: #{tpu_custom_call.1} parent=63 // pred_region
                loop: start=0, step=1, limit=1
                $region80: #{tpu_custom_call.1} parent=78 // loop_pre_header
                  _
                $region81: #{tpu_custom_call.1} parent=78 // loop_header
                  %s375 = sphi 0, %s379
                  %p376 = scmp.ge.s32.totalorder %s375, 1
                  %s380 = sphi %s335, %s335
                  %s381 = sphi %s332, %s332
                $region82: #{tpu_custom_call.1} parent=78 // loop_header_branch
                  %378 = sbr.rel (%p376) target = $region86
                $region83: #{tpu_custom_call.1} parent=78 // loop_body
                  %v382 = vld [vmem:[%s380] sm:$0xff]
                  %383 = vst [vmem:[%s381] sm:$0xff] %v382
                  %v384 = vld [vmem:[%s380 + $0x10] sm:$0xff]
                  %385 = vst [vmem:[%s381 + $0x8] sm:$0xff] %v384
                  %v386 = vld [vmem:[%s380 + $0x20] sm:$0xff]
                  %387 = vst [vmem:[%s381 + $0x10] sm:$0xff] %v386
                  %v388 = vld [vmem:[%s380 + $0x30] sm:$0xff]
                  %389 = vst [vmem:[%s381 + $0x18] sm:$0xff] %v388
                  %v390 = vld [vmem:[%s380 + $0x40] sm:$0xff]
                  %391 = vst [vmem:[%s381 + $0x20] sm:$0xff] %v390
                  %v392 = vld [vmem:[%s380 + $0x50] sm:$0xff]
                  %393 = vst [vmem:[%s381 + $0x28] sm:$0xff] %v392
                  %v394 = vld [vmem:[%s380 + $0x60] sm:$0xff]
                  %395 = vst [vmem:[%s381 + $0x30] sm:$0xff] %v394
                  %v396 = vld [vmem:[%s380 + $0x70] sm:$0xff]
                  %397 = vst [vmem:[%s381 + $0x38] sm:$0xff] %v396
                  %v398 = vld [vmem:[%s380 + $0x80] sm:$0xff]
                  %399 = vst [vmem:[%s381 + $0x40] sm:$0xff] %v398
                  %v400 = vld [vmem:[%s380 + $0x90] sm:$0xff]
                  %401 = vst [vmem:[%s381 + $0x48] sm:$0xff] %v400
                $region84: #{tpu_custom_call.1} parent=78 // loop_footer
                  %s379 = sadd.s32 1, %s375
                $region85: #{tpu_custom_call.1} parent=78 // loop_footer_branch
                  %374 = sbr.rel target = $region81
                $region86: #{tpu_custom_call.1} parent=78 // loop_exit
                  _
              $region79: #{tpu_custom_call.1} parent=63 // pred_fallthru
                _
              // Predicated region
              $region87: #{tpu_custom_call.1} parent=63 // pred_check
                _
              $region88: #{tpu_custom_call.1} parent=63 // pred_check_branch
                %403 = sbr.rel target = $region90
              $region89: #{tpu_custom_call.1} parent=63 // pred_region
                _
              $region90: #{tpu_custom_call.1} parent=63 // pred_fallthru
                _
            $region64: #{tpu_custom_call.1} parent=59 // pred_fallthru
              _
            // Predicated region
            $region65: #{tpu_custom_call.1} parent=59 // pred_check
              _
            $region66: #{tpu_custom_call.1} parent=59 // pred_check_branch
              %341 = sbr.rel target = $region68
            $region67: #{tpu_custom_call.1} parent=59 // pred_region
              %s343 = ssub.s32 256, 1
              loop: start=0, step=1, limit=1
              $region69: #{tpu_custom_call.1} parent=67 // loop_pre_header
                _
              $region70: #{tpu_custom_call.1} parent=67 // loop_header
                %s345 = sphi 0, %s349
                %p346 = scmp.ge.s32.totalorder %s345, 1
                %s350 = sphi %s335, %s335
                %s351 = sphi %s332, %s332
              $region71: #{tpu_custom_call.1} parent=67 // loop_header_branch
                %348 = sbr.rel (%p346) target = $region75
              $region72: #{tpu_custom_call.1} parent=67 // loop_body
                %v352 = vld [vmem:[%s350] sm:%s343]
                %353 = vst [vmem:[%s351] sm:%s343] %v352
                %v354 = vld [vmem:[%s350 + $0x10] sm:%s343]
                %355 = vst [vmem:[%s351 + $0x8] sm:%s343] %v354
                %v356 = vld [vmem:[%s350 + $0x20] sm:%s343]
                %357 = vst [vmem:[%s351 + $0x10] sm:%s343] %v356
                %v358 = vld [vmem:[%s350 + $0x30] sm:%s343]
                %359 = vst [vmem:[%s351 + $0x18] sm:%s343] %v358
                %v360 = vld [vmem:[%s350 + $0x40] sm:%s343]
                %361 = vst [vmem:[%s351 + $0x20] sm:%s343] %v360
                %v362 = vld [vmem:[%s350 + $0x50] sm:%s343]
                %363 = vst [vmem:[%s351 + $0x28] sm:%s343] %v362
                %v364 = vld [vmem:[%s350 + $0x60] sm:%s343]
                %365 = vst [vmem:[%s351 + $0x30] sm:%s343] %v364
                %v366 = vld [vmem:[%s350 + $0x70] sm:%s343]
                %367 = vst [vmem:[%s351 + $0x38] sm:%s343] %v366
                %v368 = vld [vmem:[%s350 + $0x80] sm:%s343]
                %369 = vst [vmem:[%s351 + $0x40] sm:%s343] %v368
                %v370 = vld [vmem:[%s350 + $0x90] sm:%s343]
                %371 = vst [vmem:[%s351 + $0x48] sm:%s343] %v370
              $region73: #{tpu_custom_call.1} parent=67 // loop_footer
                %s349 = sadd.s32 1, %s345
              $region74: #{tpu_custom_call.1} parent=67 // loop_footer_branch
                %344 = sbr.rel target = $region70
              $region75: #{tpu_custom_call.1} parent=67 // loop_exit
                _
            $region68: #{tpu_custom_call.1} parent=59 // pred_fallthru
              _
          $region60: #{tpu_custom_call.1} parent=55 // pred_fallthru
            _
          %404 = vnop
        $region56: #{tpu_custom_call.1} parent=47 // pred_fallthru
          _
      $region48: #{tpu_custom_call.1} parent=5 // pred_fallthru
        _
      %p405 = scmp.le.s32.totalorder 1, %s20
      %p406 = scmp.lt.s32.totalorder %s20, 3
      %p407 = pnand %p405, %p406
      %p408 = pneg %p407
      // Predicated region
      $region91: #{tpu_custom_call.1} parent=5 // pred_check
        _
      $region92: #{tpu_custom_call.1} parent=5 // pred_check_branch
        %410 = sbr.rel (%p407) target = $region94
      $region93: #{tpu_custom_call.1} parent=5 // pred_region
        %s411 = ssub.s32 %s20, 1
        %s412 = sand.u32 %s59, 1
        %s413 = sand.u32 %s59, 1
        %s414 = smul.addr %s413, 80
        %s415 = scalar_lea.vmem [#allocation2], %s414
        // Predicated region
        $region95: #{tpu_custom_call.1} parent=93 // pred_check
          %p416 = pneg %p72
        $region96: #{tpu_custom_call.1} parent=93 // pred_check_branch
          %418 = sbr.rel (%p416) target = $region98
        $region97: #{tpu_custom_call.1} parent=93 // pred_region
          _
        $region98: #{tpu_custom_call.1} parent=93 // pred_fallthru
          _
        // Predicated region
        $region99: #{tpu_custom_call.1} parent=93 // pred_check
          %p419 = pneg %p135
        $region100: #{tpu_custom_call.1} parent=93 // pred_check_branch
          %421 = sbr.rel (%p419) target = $region102
        $region101: #{tpu_custom_call.1} parent=93 // pred_region
          %422 = dma.done [#allocation4], 64
        $region102: #{tpu_custom_call.1} parent=93 // pred_fallthru
          _
        %s423 = smul.u32 2, %s25
        %p424 = scmp.lt.s32.totalorder %s423, 3
        %s425 = scalar_select %p424, %s423, 3
        %s426 = smul.addr %s425, 4
        %s427 = scalar_lea.vmem %s0, %s426
        %p428 = pneg %p46
        %p429 = pneg %p43
        %s430 = sand.u32 %s59, 1
        %s431 = sand.u32 %s59, 1
        %s432 = smul.addr %s431, 80
        %s433 = scalar_lea.vmem [#allocation2], %s432
        %p434 = pneg %p72
        %p435 = pneg %p69
        %p436 = pneg %p93
        %p437 = pneg %p90
        %p438 = pneg %p114
        %p439 = pneg %p111
        %p440 = pneg %p135
        %p441 = pneg %p132
        %p442 = pneg %p156
        %p443 = pneg %p153
        %p444 = pneg %p177
        %p445 = pneg %p174
        %p446 = pneg %p198
        %p447 = pneg %p195
        %p448 = pneg %p219
        %p449 = pneg %p216
        %p450 = pneg %p240
        %p451 = pneg %p237
        %p452 = pneg %p266
        %p453 = pneg %p263
        %s454 = sand.u32 %s253, 1
        %s455 = scalar_lea.sflag [#allocation5], %s454
        %s456 = sand.u32 %s253, 1
        %s457 = smul.addr %s456, 8
        %s458 = scalar_lea.vmem [#allocation6], %s457
        %s459 = smul.u32 2, %s25
        %p460 = scmp.lt.s32.totalorder %s459, 3
        %s461 = scalar_select %p460, %s459, 3
        %s462 = smul.addr %s461, 4
        %s463 = scalar_lea.vmem %s0, %s462
        %s464 = smul.u32 2, %s25
        %s465 = smul.u32 2, %s25
        %s466 = smul.u32 2, %s25
        %v467 = vld [vmem:[%s463] sm:$0xff]
        %v468 = vld [vmem:[%s2] sm:$0xff]
        %v469 = vld [vmem:[%s2 + $0x8] sm:$0xff]
        %v470 = vld [vmem:[%s2 + $0x10] sm:$0xff]
        %v471 = vld [vmem:[%s2 + $0x18] sm:$0xff]
        %v472 = vld [vmem:[%s3] sm:$0xff]
        %v473 = vld [vmem:[%s3 + $0x8] sm:$0xff]
        %v474 = vld [vmem:[%s3 + $0x10] sm:$0xff]
        %v475 = vld [vmem:[%s3 + $0x18] sm:$0xff]
        %477 = vset.pattern.permute.xlu0 0
        %478 = vperm.xlu0 %477, %v472
        %v479 = vpop.permute.xlu0 %478
        %482 = vset.pattern.permute.xlu0 0
        %483 = vperm.xlu0 %482, %v473
        %v484 = vpop.permute.xlu0 %483
        %487 = vset.pattern.permute.xlu0 0
        %488 = vperm.xlu0 %487, %v474
        %v489 = vpop.permute.xlu0 %488
        %492 = vset.pattern.permute.xlu0 0
        %493 = vperm.xlu0 %492, %v475
        %v494 = vpop.permute.xlu0 %493
        %v497 = vcombine.high %v467, %v467
        %vm498 = vcmask 31744
        %v500 = vsel %vm498, %v468, 0
        %v503 = vsel %vm498, %v469, 0
        %v506 = vsel %vm498, %v470, 0
        %v509 = vsel %vm498, %v471, 0
        %vm511 = vcmask 1043456
        %v512 = vsel %vm511, %v467, 0
        %v514 = vsel %vm511, %v497, 0
        %516 = vmatprep.subr.mxu0 0.0
        %517 = vmatpush1.msra.mxu0 0.0
        %518 = vmatprep.subr.mxu0 0.0
        %519 = vmatpush1.msra.mxu0 0.0
        %520 = vmatprep.subr.mxu0 0.0
        %521 = vmatpush1.msra.mxu0 0.0
        %522 = vmatprep.subr.mxu0 0.0
        %523 = vmatpush1.msra.mxu0 0.0
        %524 = vmatprep.subr.mxu0 0.0
        %525 = vmatpush1.msra.mxu0 0.0
        %526 = vmatprep.subr.mxu0 0.0
        %527 = vmatpush1.msra.mxu0 0.0
        %528 = vmatprep.subr.mxu0 0.0
        %529 = vmatpush1.msra.mxu0 0.0
        %530 = vmatprep.subr.mxu0 0.0
        %531 = vmatpush1.msra.mxu0 0.0
        %532 = vmatprep.subr.mxu0 0.0
        %533 = vmatpush1.msra.mxu0 0.0
        %534 = vmatprep.subr.mxu0 0.0
        %535 = vmatpush1.msra.mxu0 0.0
        %536 = vmatprep.subr.mxu0 0.0
        %537 = vmatpush1.msra.mxu0 0.0
        %538 = vmatprep.subr.mxu0 0.0
        %539 = vmatpush1.msra.mxu0 0.0
        %540 = vmatprep.subr.mxu0 0.0
        %541 = vmatpush1.msra.mxu0 0.0
        %542 = vmatprep.subr.mxu0 0.0
        %543 = vmatpush1.msra.mxu0 0.0
        %544 = vmatprep.subr.mxu0 0.0
        %545 = vmatpush1.msra.mxu0 0.0
        %546 = vmatprep.subr.mxu0 %v514
        %547 = vmatpush1.msra.mxu0 %v512
        %548 = vmatprep.subr.mxu0 0.0
        %549 = vmatpush2.msra.mxu0 0.0
        %550 = vmatprep.subr.mxu0 0.0
        %551 = vmatpush2.msra.mxu0 0.0
        %552 = vmatprep.subr.mxu0 0.0
        %553 = vmatpush2.msra.mxu0 0.0
        %554 = vmatprep.subr.mxu0 0.0
        %555 = vmatpush2.msra.mxu0 0.0
        %556 = vmatprep.subr.mxu0 0.0
        %557 = vmatpush2.msra.mxu0 0.0
        %558 = vmatprep.subr.mxu0 0.0
        %559 = vmatpush2.msra.mxu0 0.0
        %560 = vmatprep.subr.mxu0 0.0
        %561 = vmatpush2.msra.mxu0 0.0
        %562 = vmatprep.subr.mxu0 0.0
        %563 = vmatpush2.msra.mxu0 0.0
        %564 = vmatprep.subr.mxu0 0.0
        %565 = vmatpush2.msra.mxu0 0.0
        %566 = vmatprep.subr.mxu0 0.0
        %567 = vmatpush2.msra.mxu0 0.0
        %568 = vmatprep.subr.mxu0 0.0
        %569 = vmatpush2.msra.mxu0 0.0
        %570 = vmatprep.subr.mxu0 0.0
        %571 = vmatpush2.msra.mxu0 0.0
        %572 = vmatprep.subr.mxu0 0.0
        %573 = vmatpush2.msra.mxu0 0.0
        %574 = vmatprep.subr.mxu0 0.0
        %575 = vmatpush2.msra.mxu0 0.0
        %576 = vmatprep.subr.mxu0 0.0
        %577 = vmatpush2.msra.mxu0 0.0
        %578 = vmatprep.subr.mxu0 0.0
        %579 = vmatpush2.msra.mxu0 0.0
        %580 = vmatprep.mubr.f32.mxu0 0.0
        %581 = vmatmul.mubr.f32.gmra.mxu0 %v500
        %v582 = vpop.f32.mrf.mxu0
        %v583 = vadd.f32 %v479, %v582
        %v584 = vpop.f32.mrf.mxu0
        %v585 = vadd.f32 %v479, %v584
        %586 = vmatprep.mubr.f32.mxu0 0.0
        %587 = vmatmul.mubr.f32.gmra.mxu0 %v503
        %v588 = vpop.f32.mrf.mxu0
        %v589 = vadd.f32 %v484, %v588
        %v590 = vpop.f32.mrf.mxu0
        %v591 = vadd.f32 %v484, %v590
        %592 = vmatprep.mubr.f32.mxu0 0.0
        %593 = vmatmul.mubr.f32.gmra.mxu0 %v506
        %v594 = vpop.f32.mrf.mxu0
        %v595 = vadd.f32 %v489, %v594
        %v596 = vpop.f32.mrf.mxu0
        %v597 = vadd.f32 %v489, %v596
        %598 = vmatprep.mubr.f32.mxu0 0.0
        %599 = vmatmul.mubr.f32.gmra.mxu0 %v509
        %v600 = vpop.f32.mrf.mxu0
        %v601 = vadd.f32 %v494, %v600
        %v602 = vpop.f32.mrf.mxu0
        %v603 = vadd.f32 %v494, %v602
        %604 = vdwg.mxu0
        %v605 = vmax.f32 %v583, 0.0
        %v606 = vmax.f32 %v585, 0.0
        %v607 = vmax.f32 %v589, 0.0
        %v608 = vmax.f32 %v591, 0.0
        %v609 = vmax.f32 %v595, 0.0
        %v610 = vmax.f32 %v597, 0.0
        %v611 = vmax.f32 %v601, 0.0
        %v612 = vmax.f32 %v603, 0.0
        %v613 = vld [vmem:[#allocation3] sm:$0xf]
        %v614 = vld [vmem:[%s5] sm:$0xf]
        %616 = vset.pattern.permute.xlu0 0
        %617 = vperm.xlu0 %616, %v614
        %v618 = vpop.permute.xlu0 %617
        %vm620 = vcmask 261120
        %v622 = vsel %vm620, %v613, 0
        %624 = vmatprep.subr.mxu0 0.0
        %625 = vmatpush1.msra.mxu0 0.0
        %626 = vmatprep.subr.mxu0 0.0
        %627 = vmatpush1.msra.mxu0 0.0
        %628 = vmatprep.subr.mxu0 0.0
        %629 = vmatpush1.msra.mxu0 0.0
        %630 = vmatprep.subr.mxu0 0.0
        %631 = vmatpush1.msra.mxu0 0.0
        %632 = vmatprep.subr.mxu0 0.0
        %633 = vmatpush1.msra.mxu0 0.0
        %634 = vmatprep.subr.mxu0 0.0
        %635 = vmatpush1.msra.mxu0 0.0
        %636 = vmatprep.subr.mxu0 0.0
        %637 = vmatpush1.msra.mxu0 0.0
        %638 = vmatprep.subr.mxu0 0.0
        %639 = vmatpush1.msra.mxu0 0.0
        %640 = vmatprep.subr.mxu0 0.0
        %641 = vmatpush1.msra.mxu0 0.0
        %642 = vmatprep.subr.mxu0 0.0
        %643 = vmatpush1.msra.mxu0 0.0
        %644 = vmatprep.subr.mxu0 0.0
        %645 = vmatpush1.msra.mxu0 0.0
        %646 = vmatprep.subr.mxu0 0.0
        %647 = vmatpush1.msra.mxu0 0.0
        %648 = vmatprep.subr.mxu0 %v612
        %649 = vmatpush1.msra.mxu0 %v611
        %650 = vmatprep.subr.mxu0 %v610
        %651 = vmatpush1.msra.mxu0 %v609
        %652 = vmatprep.subr.mxu0 %v608
        %653 = vmatpush1.msra.mxu0 %v607
        %654 = vmatprep.subr.mxu0 %v606
        %655 = vmatpush1.msra.mxu0 %v605
        %656 = vmatprep.subr.mxu0 0.0
        %657 = vmatpush2.msra.mxu0 0.0
        %658 = vmatprep.subr.mxu0 0.0
        %659 = vmatpush2.msra.mxu0 0.0
        %660 = vmatprep.subr.mxu0 0.0
        %661 = vmatpush2.msra.mxu0 0.0
        %662 = vmatprep.subr.mxu0 0.0
        %663 = vmatpush2.msra.mxu0 0.0
        %664 = vmatprep.subr.mxu0 0.0
        %665 = vmatpush2.msra.mxu0 0.0
        %666 = vmatprep.subr.mxu0 0.0
        %667 = vmatpush2.msra.mxu0 0.0
        %668 = vmatprep.subr.mxu0 0.0
        %669 = vmatpush2.msra.mxu0 0.0
        %670 = vmatprep.subr.mxu0 0.0
        %671 = vmatpush2.msra.mxu0 0.0
        %672 = vmatprep.subr.mxu0 0.0
        %673 = vmatpush2.msra.mxu0 0.0
        %674 = vmatprep.subr.mxu0 0.0
        %675 = vmatpush2.msra.mxu0 0.0
        %676 = vmatprep.subr.mxu0 0.0
        %677 = vmatpush2.msra.mxu0 0.0
        %678 = vmatprep.subr.mxu0 0.0
        %679 = vmatpush2.msra.mxu0 0.0
        %680 = vmatprep.subr.mxu0 0.0
        %681 = vmatpush2.msra.mxu0 0.0
        %682 = vmatprep.subr.mxu0 0.0
        %683 = vmatpush2.msra.mxu0 0.0
        %684 = vmatprep.subr.mxu0 0.0
        %685 = vmatpush2.msra.mxu0 0.0
        %686 = vmatprep.subr.mxu0 0.0
        %687 = vmatpush2.msra.mxu0 0.0
        %688 = vmatprep.mubr.f32.mxu0 0.0
        %689 = vmatmul.mubr.f32.gmra.mxu0 %v622
        %v690 = vpop.f32.mrf.mxu0
        %v691 = vadd.f32 %v618, %v690
        %v692 = vpop.f32.mrf.mxu0
        %v693 = vadd.f32 %v618, %v692
        %694 = vdwg.mxu0
        %v695 = vld [vmem:[%s6] sm:$0xff]
        %v696 = vld [vmem:[%s6 + $0x8] sm:$0xff]
        %v697 = vld [vmem:[%s6 + $0x10] sm:$0xff]
        %v698 = vld [vmem:[%s6 + $0x18] sm:$0xff]
        %v699 = vld [vmem:[%s7] sm:$0xf]
        %v700 = vld [vmem:[%s8] sm:$0xff]
        %v701 = vld [vmem:[%s8 + $0x8] sm:$0xff]
        %v702 = vld [vmem:[%s8 + $0x10] sm:$0xff]
        %v703 = vld [vmem:[%s8 + $0x18] sm:$0xff]
        %v704 = vld [vmem:[%s9] sm:$0xff]
        %v705 = vld [vmem:[%s9 + $0x8] sm:$0xff]
        %v706 = vld [vmem:[%s9 + $0x10] sm:$0xff]
        %v707 = vld [vmem:[%s9 + $0x18] sm:$0xff]
        %709 = vset.pattern.permute.xlu0 0
        %710 = vperm.xlu0 %709, %v700
        %v711 = vpop.permute.xlu0 %710
        %714 = vset.pattern.permute.xlu0 0
        %715 = vperm.xlu0 %714, %v701
        %v716 = vpop.permute.xlu0 %715
        %719 = vset.pattern.permute.xlu0 0
        %720 = vperm.xlu0 %719, %v702
        %v721 = vpop.permute.xlu0 %720
        %724 = vset.pattern.permute.xlu0 0
        %725 = vperm.xlu0 %724, %v703
        %v726 = vpop.permute.xlu0 %725
        %v729 = vsel %vm498, %v695, 0
        %v732 = vsel %vm498, %v696, 0
        %v735 = vsel %vm498, %v697, 0
        %v738 = vsel %vm498, %v698, 0
        %v741 = vsel %vm511, %v691, 0
        %v744 = vsel %vm511, %v693, 0
        %746 = vmatprep.subr.mxu0 0.0
        %747 = vmatpush1.msra.mxu0 0.0
        %748 = vmatprep.subr.mxu0 0.0
        %749 = vmatpush1.msra.mxu0 0.0
        %750 = vmatprep.subr.mxu0 0.0
        %751 = vmatpush1.msra.mxu0 0.0
        %752 = vmatprep.subr.mxu0 0.0
        %753 = vmatpush1.msra.mxu0 0.0
        %754 = vmatprep.subr.mxu0 0.0
        %755 = vmatpush1.msra.mxu0 0.0
        %756 = vmatprep.subr.mxu0 0.0
        %757 = vmatpush1.msra.mxu0 0.0
        %758 = vmatprep.subr.mxu0 0.0
        %759 = vmatpush1.msra.mxu0 0.0
        %760 = vmatprep.subr.mxu0 0.0
        %761 = vmatpush1.msra.mxu0 0.0
        %762 = vmatprep.subr.mxu0 0.0
        %763 = vmatpush1.msra.mxu0 0.0
        %764 = vmatprep.subr.mxu0 0.0
        %765 = vmatpush1.msra.mxu0 0.0
        %766 = vmatprep.subr.mxu0 0.0
        %767 = vmatpush1.msra.mxu0 0.0
        %768 = vmatprep.subr.mxu0 0.0
        %769 = vmatpush1.msra.mxu0 0.0
        %770 = vmatprep.subr.mxu0 0.0
        %771 = vmatpush1.msra.mxu0 0.0
        %772 = vmatprep.subr.mxu0 0.0
        %773 = vmatpush1.msra.mxu0 0.0
        %774 = vmatprep.subr.mxu0 0.0
        %775 = vmatpush1.msra.mxu0 0.0
        %776 = vmatprep.subr.mxu0 %v744
        %777 = vmatpush1.msra.mxu0 %v741
        %778 = vmatprep.subr.mxu0 0.0
        %779 = vmatpush2.msra.mxu0 0.0
        %780 = vmatprep.subr.mxu0 0.0
        %781 = vmatpush2.msra.mxu0 0.0
        %782 = vmatprep.subr.mxu0 0.0
        %783 = vmatpush2.msra.mxu0 0.0
        %784 = vmatprep.subr.mxu0 0.0
        %785 = vmatpush2.msra.mxu0 0.0
        %786 = vmatprep.subr.mxu0 0.0
        %787 = vmatpush2.msra.mxu0 0.0
        %788 = vmatprep.subr.mxu0 0.0
        %789 = vmatpush2.msra.mxu0 0.0
        %790 = vmatprep.subr.mxu0 0.0
        %791 = vmatpush2.msra.mxu0 0.0
        %792 = vmatprep.subr.mxu0 0.0
        %793 = vmatpush2.msra.mxu0 0.0
        %794 = vmatprep.subr.mxu0 0.0
        %795 = vmatpush2.msra.mxu0 0.0
        %796 = vmatprep.subr.mxu0 0.0
        %797 = vmatpush2.msra.mxu0 0.0
        %798 = vmatprep.subr.mxu0 0.0
        %799 = vmatpush2.msra.mxu0 0.0
        %800 = vmatprep.subr.mxu0 0.0
        %801 = vmatpush2.msra.mxu0 0.0
        %802 = vmatprep.subr.mxu0 0.0
        %803 = vmatpush2.msra.mxu0 0.0
        %804 = vmatprep.subr.mxu0 0.0
        %805 = vmatpush2.msra.mxu0 0.0
        %806 = vmatprep.subr.mxu0 0.0
        %807 = vmatpush2.msra.mxu0 0.0
        %808 = vmatprep.subr.mxu0 0.0
        %809 = vmatpush2.msra.mxu0 0.0
        %810 = vmatprep.mubr.f32.mxu0 0.0
        %811 = vmatmul.mubr.f32.gmra.mxu0 %v729
        %v812 = vpop.f32.mrf.mxu0
        %v813 = vadd.f32 %v711, %v812
        %v814 = vpop.f32.mrf.mxu0
        %v815 = vadd.f32 %v711, %v814
        %816 = vmatprep.mubr.f32.mxu0 0.0
        %817 = vmatmul.mubr.f32.gmra.mxu0 %v732
        %v818 = vpop.f32.mrf.mxu0
        %v819 = vadd.f32 %v716, %v818
        %v820 = vpop.f32.mrf.mxu0
        %v821 = vadd.f32 %v716, %v820
        %822 = vmatprep.mubr.f32.mxu0 0.0
        %823 = vmatmul.mubr.f32.gmra.mxu0 %v735
        %v824 = vpop.f32.mrf.mxu0
        %v825 = vadd.f32 %v721, %v824
        %v826 = vpop.f32.mrf.mxu0
        %v827 = vadd.f32 %v721, %v826
        %828 = vmatprep.mubr.f32.mxu0 0.0
        %829 = vmatmul.mubr.f32.gmra.mxu0 %v738
        %v830 = vpop.f32.mrf.mxu0
        %v831 = vadd.f32 %v726, %v830
        %v832 = vpop.f32.mrf.mxu0
        %v833 = vadd.f32 %v726, %v832
        %834 = vdwg.mxu0
        %v835 = vtanh.pop %v813
        %v836 = vtanh.pop %v815
        %v837 = vtanh.pop %v819
        %v838 = vtanh.pop %v821
        %v839 = vtanh.pop %v825
        %v840 = vtanh.pop %v827
        %v841 = vtanh.pop %v831
        %v842 = vtanh.pop %v833
        %v843 = vmul.f32 %v835, %v835
        %v844 = vmul.f32 %v836, %v836
        %v845 = vmul.f32 %v837, %v837
        %v846 = vmul.f32 %v838, %v838
        %v847 = vmul.f32 %v839, %v839
        %v848 = vmul.f32 %v840, %v840
        %v849 = vmul.f32 %v841, %v841
        %v850 = vmul.f32 %v842, %v842
        %v851 = vsub.f32 1.0, %v843
        %v852 = vsub.f32 1.0, %v844
        %v853 = vsub.f32 1.0, %v845
        %v854 = vsub.f32 1.0, %v846
        %v855 = vsub.f32 1.0, %v847
        %v856 = vsub.f32 1.0, %v848
        %v857 = vsub.f32 1.0, %v849
        %v858 = vsub.f32 1.0, %v850
        %860 = vset.pattern.permute.xlu0 0
        %861 = vperm.xlu0 %860, %v704
        %v862 = vpop.permute.xlu0 %861
        %865 = vset.pattern.permute.xlu0 0
        %866 = vperm.xlu0 %865, %v705
        %v867 = vpop.permute.xlu0 %866
        %870 = vset.pattern.permute.xlu0 0
        %871 = vperm.xlu0 %870, %v706
        %v872 = vpop.permute.xlu0 %871
        %875 = vset.pattern.permute.xlu0 0
        %876 = vperm.xlu0 %875, %v707
        %v877 = vpop.permute.xlu0 %876
        %v879 = vmul.f32 %v851, %v862
        %v880 = vmul.f32 %v852, %v862
        %v881 = vmul.f32 %v853, %v867
        %v882 = vmul.f32 %v854, %v867
        %v883 = vmul.f32 %v855, %v872
        %v884 = vmul.f32 %v856, %v872
        %v885 = vmul.f32 %v857, %v877
        %v886 = vmul.f32 %v858, %v877
        %v888 = vsel %vm620, %v699, 0
        %890 = vmatprep.subr.mxu0 0.0
        %891 = vmatpush1.msra.mxu0 0.0
        %892 = vmatprep.subr.mxu0 0.0
        %893 = vmatpush1.msra.mxu0 0.0
        %894 = vmatprep.subr.mxu0 0.0
        %895 = vmatpush1.msra.mxu0 0.0
        %896 = vmatprep.subr.mxu0 0.0
        %897 = vmatpush1.msra.mxu0 0.0
        %898 = vmatprep.subr.mxu0 0.0
        %899 = vmatpush1.msra.mxu0 0.0
        %900 = vmatprep.subr.mxu0 0.0
        %901 = vmatpush1.msra.mxu0 0.0
        %902 = vmatprep.subr.mxu0 0.0
        %903 = vmatpush1.msra.mxu0 0.0
        %904 = vmatprep.subr.mxu0 0.0
        %905 = vmatpush1.msra.mxu0 0.0
        %906 = vmatprep.subr.mxu0 0.0
        %907 = vmatpush1.msra.mxu0 0.0
        %908 = vmatprep.subr.mxu0 0.0
        %909 = vmatpush1.msra.mxu0 0.0
        %910 = vmatprep.subr.mxu0 0.0
        %911 = vmatpush1.msra.mxu0 0.0
        %912 = vmatprep.subr.mxu0 0.0
        %913 = vmatpush1.msra.mxu0 0.0
        %914 = vmatprep.subr.mxu0 %v886
        %915 = vmatpush1.msra.mxu0 %v885
        %916 = vmatprep.subr.mxu0 %v884
        %917 = vmatpush1.msra.mxu0 %v883
        %918 = vmatprep.subr.mxu0 %v882
        %919 = vmatpush1.msra.mxu0 %v881
        %920 = vmatprep.subr.mxu0 %v880
        %921 = vmatpush1.msra.mxu0 %v879
        %922 = vmatprep.subr.mxu0 0.0
        %923 = vmatpush2.msra.mxu0 0.0
        %924 = vmatprep.subr.mxu0 0.0
        %925 = vmatpush2.msra.mxu0 0.0
        %926 = vmatprep.subr.mxu0 0.0
        %927 = vmatpush2.msra.mxu0 0.0
        %928 = vmatprep.subr.mxu0 0.0
        %929 = vmatpush2.msra.mxu0 0.0
        %930 = vmatprep.subr.mxu0 0.0
        %931 = vmatpush2.msra.mxu0 0.0
        %932 = vmatprep.subr.mxu0 0.0
        %933 = vmatpush2.msra.mxu0 0.0
        %934 = vmatprep.subr.mxu0 0.0
        %935 = vmatpush2.msra.mxu0 0.0
        %936 = vmatprep.subr.mxu0 0.0
        %937 = vmatpush2.msra.mxu0 0.0
        %938 = vmatprep.subr.mxu0 0.0
        %939 = vmatpush2.msra.mxu0 0.0
        %940 = vmatprep.subr.mxu0 0.0
        %941 = vmatpush2.msra.mxu0 0.0
        %942 = vmatprep.subr.mxu0 0.0
        %943 = vmatpush2.msra.mxu0 0.0
        %944 = vmatprep.subr.mxu0 0.0
        %945 = vmatpush2.msra.mxu0 0.0
        %946 = vmatprep.subr.mxu0 0.0
        %947 = vmatpush2.msra.mxu0 0.0
        %948 = vmatprep.subr.mxu0 0.0
        %949 = vmatpush2.msra.mxu0 0.0
        %950 = vmatprep.subr.mxu0 0.0
        %951 = vmatpush2.msra.mxu0 0.0
        %952 = vmatprep.subr.mxu0 0.0
        %953 = vmatpush2.msra.mxu0 0.0
        %954 = vmatprep.mubr.f32.mxu0 0.0
        %955 = vmatmul.mubr.f32.gmra.mxu0 %v888
        %v956 = vpop.f32.mrf.mxu0
        %v957 = vadd.f32 0.0, %v956
        %v958 = vpop.f32.mrf.mxu0
        %v959 = vadd.f32 0.0, %v958
        %960 = vdwg.mxu0
        %v962 = vsub.f32 %v691, %v467
        %v963 = vsub.f32 %v693, %v497
        %v964 = vsub.f32 %v957, %v962
        %v965 = vsub.f32 %v959, %v963
        %v966 = vmul.f32 %v964, 0.05
        %v967 = vmul.f32 %v965, 0.05
        %v968 = vadd.f32 %v691, %v966
        %v969 = vadd.f32 %v693, %v967
        %v970 = vld [vmem:[%s415] sm:$0xff]
        %v971 = vmul.f32 %v970, 0.31622776
        %v973 = vcombine.high %v971, %v971
        %v975 = vadd.f32 %v968, %v971
        %v976 = vadd.f32 %v969, %v973
        %v978 = vsel %vm511, %v975, 0
        %v981 = vsel %vm511, %v976, 0
        %983 = vmatprep.subr.mxu0 0.0
        %984 = vmatpush1.msra.mxu0 0.0
        %985 = vmatprep.subr.mxu0 0.0
        %986 = vmatpush1.msra.mxu0 0.0
        %987 = vmatprep.subr.mxu0 0.0
        %988 = vmatpush1.msra.mxu0 0.0
        %989 = vmatprep.subr.mxu0 0.0
        %990 = vmatpush1.msra.mxu0 0.0
        %991 = vmatprep.subr.mxu0 0.0
        %992 = vmatpush1.msra.mxu0 0.0
        %993 = vmatprep.subr.mxu0 0.0
        %994 = vmatpush1.msra.mxu0 0.0
        %995 = vmatprep.subr.mxu0 0.0
        %996 = vmatpush1.msra.mxu0 0.0
        %997 = vmatprep.subr.mxu0 0.0
        %998 = vmatpush1.msra.mxu0 0.0
        %999 = vmatprep.subr.mxu0 0.0
        %1000 = vmatpush1.msra.mxu0 0.0
        %1001 = vmatprep.subr.mxu0 0.0
        %1002 = vmatpush1.msra.mxu0 0.0
        %1003 = vmatprep.subr.mxu0 0.0
        %1004 = vmatpush1.msra.mxu0 0.0
        %1005 = vmatprep.subr.mxu0 0.0
        %1006 = vmatpush1.msra.mxu0 0.0
        %1007 = vmatprep.subr.mxu0 0.0
        %1008 = vmatpush1.msra.mxu0 0.0
        %1009 = vmatprep.subr.mxu0 0.0
        %1010 = vmatpush1.msra.mxu0 0.0
        %1011 = vmatprep.subr.mxu0 0.0
        %1012 = vmatpush1.msra.mxu0 0.0
        %1013 = vmatprep.subr.mxu0 %v981
        %1014 = vmatpush1.msra.mxu0 %v978
        %1015 = vmatprep.subr.mxu0 0.0
        %1016 = vmatpush2.msra.mxu0 0.0
        %1017 = vmatprep.subr.mxu0 0.0
        %1018 = vmatpush2.msra.mxu0 0.0
        %1019 = vmatprep.subr.mxu0 0.0
        %1020 = vmatpush2.msra.mxu0 0.0
        %1021 = vmatprep.subr.mxu0 0.0
        %1022 = vmatpush2.msra.mxu0 0.0
        %1023 = vmatprep.subr.mxu0 0.0
        %1024 = vmatpush2.msra.mxu0 0.0
        %1025 = vmatprep.subr.mxu0 0.0
        %1026 = vmatpush2.msra.mxu0 0.0
        %1027 = vmatprep.subr.mxu0 0.0
        %1028 = vmatpush2.msra.mxu0 0.0
        %1029 = vmatprep.subr.mxu0 0.0
        %1030 = vmatpush2.msra.mxu0 0.0
        %1031 = vmatprep.subr.mxu0 0.0
        %1032 = vmatpush2.msra.mxu0 0.0
        %1033 = vmatprep.subr.mxu0 0.0
        %1034 = vmatpush2.msra.mxu0 0.0
        %1035 = vmatprep.subr.mxu0 0.0
        %1036 = vmatpush2.msra.mxu0 0.0
        %1037 = vmatprep.subr.mxu0 0.0
        %1038 = vmatpush2.msra.mxu0 0.0
        %1039 = vmatprep.subr.mxu0 0.0
        %1040 = vmatpush2.msra.mxu0 0.0
        %1041 = vmatprep.subr.mxu0 0.0
        %1042 = vmatpush2.msra.mxu0 0.0
        %1043 = vmatprep.subr.mxu0 0.0
        %1044 = vmatpush2.msra.mxu0 0.0
        %1045 = vmatprep.subr.mxu0 0.0
        %1046 = vmatpush2.msra.mxu0 0.0
        %1047 = vmatprep.mubr.f32.mxu0 0.0
        %1048 = vmatmul.mubr.f32.gmra.mxu0 %v729
        %v1049 = vpop.f32.mrf.mxu0
        %v1050 = vadd.f32 %v711, %v1049
        %v1051 = vpop.f32.mrf.mxu0
        %v1052 = vadd.f32 %v711, %v1051
        %1053 = vmatprep.mubr.f32.mxu0 0.0
        %1054 = vmatmul.mubr.f32.gmra.mxu0 %v732
        %v1055 = vpop.f32.mrf.mxu0
        %v1056 = vadd.f32 %v716, %v1055
        %v1057 = vpop.f32.mrf.mxu0
        %v1058 = vadd.f32 %v716, %v1057
        %1059 = vmatprep.mubr.f32.mxu0 0.0
        %1060 = vmatmul.mubr.f32.gmra.mxu0 %v735
        %v1061 = vpop.f32.mrf.mxu0
        %v1062 = vadd.f32 %v721, %v1061
        %v1063 = vpop.f32.mrf.mxu0
        %v1064 = vadd.f32 %v721, %v1063
        %1065 = vmatprep.mubr.f32.mxu0 0.0
        %1066 = vmatmul.mubr.f32.gmra.mxu0 %v738
        %v1067 = vpop.f32.mrf.mxu0
        %v1068 = vadd.f32 %v726, %v1067
        %v1069 = vpop.f32.mrf.mxu0
        %v1070 = vadd.f32 %v726, %v1069
        %1071 = vdwg.mxu0
        %v1072 = vtanh.pop %v1050
        %v1073 = vtanh.pop %v1052
        %v1074 = vtanh.pop %v1056
        %v1075 = vtanh.pop %v1058
        %v1076 = vtanh.pop %v1062
        %v1077 = vtanh.pop %v1064
        %v1078 = vtanh.pop %v1068
        %v1079 = vtanh.pop %v1070
        %v1080 = vmul.f32 %v1072, %v1072
        %v1081 = vmul.f32 %v1073, %v1073
        %v1082 = vmul.f32 %v1074, %v1074
        %v1083 = vmul.f32 %v1075, %v1075
        %v1084 = vmul.f32 %v1076, %v1076
        %v1085 = vmul.f32 %v1077, %v1077
        %v1086 = vmul.f32 %v1078, %v1078
        %v1087 = vmul.f32 %v1079, %v1079
        %v1088 = vsub.f32 1.0, %v1080
        %v1089 = vsub.f32 1.0, %v1081
        %v1090 = vsub.f32 1.0, %v1082
        %v1091 = vsub.f32 1.0, %v1083
        %v1092 = vsub.f32 1.0, %v1084
        %v1093 = vsub.f32 1.0, %v1085
        %v1094 = vsub.f32 1.0, %v1086
        %v1095 = vsub.f32 1.0, %v1087
        %v1096 = vmul.f32 %v1088, %v862
        %v1097 = vmul.f32 %v1089, %v862
        %v1098 = vmul.f32 %v1090, %v867
        %v1099 = vmul.f32 %v1091, %v867
        %v1100 = vmul.f32 %v1092, %v872
        %v1101 = vmul.f32 %v1093, %v872
        %v1102 = vmul.f32 %v1094, %v877
        %v1103 = vmul.f32 %v1095, %v877
        %1104 = vmatprep.subr.mxu0 0.0
        %1105 = vmatpush1.msra.mxu0 0.0
        %1106 = vmatprep.subr.mxu0 0.0
        %1107 = vmatpush1.msra.mxu0 0.0
        %1108 = vmatprep.subr.mxu0 0.0
        %1109 = vmatpush1.msra.mxu0 0.0
        %1110 = vmatprep.subr.mxu0 0.0
        %1111 = vmatpush1.msra.mxu0 0.0
        %1112 = vmatprep.subr.mxu0 0.0
        %1113 = vmatpush1.msra.mxu0 0.0
        %1114 = vmatprep.subr.mxu0 0.0
        %1115 = vmatpush1.msra.mxu0 0.0
        %1116 = vmatprep.subr.mxu0 0.0
        %1117 = vmatpush1.msra.mxu0 0.0
        %1118 = vmatprep.subr.mxu0 0.0
        %1119 = vmatpush1.msra.mxu0 0.0
        %1120 = vmatprep.subr.mxu0 0.0
        %1121 = vmatpush1.msra.mxu0 0.0
        %1122 = vmatprep.subr.mxu0 0.0
        %1123 = vmatpush1.msra.mxu0 0.0
        %1124 = vmatprep.subr.mxu0 0.0
        %1125 = vmatpush1.msra.mxu0 0.0
        %1126 = vmatprep.subr.mxu0 0.0
        %1127 = vmatpush1.msra.mxu0 0.0
        %1128 = vmatprep.subr.mxu0 %v1103
        %1129 = vmatpush1.msra.mxu0 %v1102
        %1130 = vmatprep.subr.mxu0 %v1101
        %1131 = vmatpush1.msra.mxu0 %v1100
        %1132 = vmatprep.subr.mxu0 %v1099
        %1133 = vmatpush1.msra.mxu0 %v1098
        %1134 = vmatprep.subr.mxu0 %v1097
        %1135 = vmatpush1.msra.mxu0 %v1096
        %1136 = vmatprep.subr.mxu0 0.0
        %1137 = vmatpush2.msra.mxu0 0.0
        %1138 = vmatprep.subr.mxu0 0.0
        %1139 = vmatpush2.msra.mxu0 0.0
        %1140 = vmatprep.subr.mxu0 0.0
        %1141 = vmatpush2.msra.mxu0 0.0
        %1142 = vmatprep.subr.mxu0 0.0
        %1143 = vmatpush2.msra.mxu0 0.0
        %1144 = vmatprep.subr.mxu0 0.0
        %1145 = vmatpush2.msra.mxu0 0.0
        %1146 = vmatprep.subr.mxu0 0.0
        %1147 = vmatpush2.msra.mxu0 0.0
        %1148 = vmatprep.subr.mxu0 0.0
        %1149 = vmatpush2.msra.mxu0 0.0
        %1150 = vmatprep.subr.mxu0 0.0
        %1151 = vmatpush2.msra.mxu0 0.0
        %1152 = vmatprep.subr.mxu0 0.0
        %1153 = vmatpush2.msra.mxu0 0.0
        %1154 = vmatprep.subr.mxu0 0.0
        %1155 = vmatpush2.msra.mxu0 0.0
        %1156 = vmatprep.subr.mxu0 0.0
        %1157 = vmatpush2.msra.mxu0 0.0
        %1158 = vmatprep.subr.mxu0 0.0
        %1159 = vmatpush2.msra.mxu0 0.0
        %1160 = vmatprep.subr.mxu0 0.0
        %1161 = vmatpush2.msra.mxu0 0.0
        %1162 = vmatprep.subr.mxu0 0.0
        %1163 = vmatpush2.msra.mxu0 0.0
        %1164 = vmatprep.subr.mxu0 0.0
        %1165 = vmatpush2.msra.mxu0 0.0
        %1166 = vmatprep.subr.mxu0 0.0
        %1167 = vmatpush2.msra.mxu0 0.0
        %1168 = vmatprep.mubr.f32.mxu0 0.0
        %1169 = vmatmul.mubr.f32.gmra.mxu0 %v888
        %v1170 = vpop.f32.mrf.mxu0
        %v1171 = vadd.f32 0.0, %v1170
        %v1172 = vpop.f32.mrf.mxu0
        %v1173 = vadd.f32 0.0, %v1172
        %1174 = vdwg.mxu0
        %v1175 = vsub.f32 %v975, %v467
        %v1176 = vsub.f32 %v976, %v497
        %v1177 = vsub.f32 %v1171, %v1175
        %v1178 = vsub.f32 %v1173, %v1176
        %v1179 = vmul.f32 %v1177, 0.05
        %v1180 = vmul.f32 %v1178, 0.05
        %v1181 = vadd.f32 %v975, %v1179
        %v1182 = vadd.f32 %v976, %v1180
        %s1183 = scalar_lea.vmem %s415, 8 [#allocation2]
        %v1184 = vld [vmem:[%s1183] sm:$0xff]
        %v1185 = vmul.f32 %v1184, 0.31622776
        %v1187 = vcombine.high %v1185, %v1185
        %v1189 = vadd.f32 %v1181, %v1185
        %v1190 = vadd.f32 %v1182, %v1187
        %v1192 = vsel %vm511, %v1189, 0
        %v1195 = vsel %vm511, %v1190, 0
        %1197 = vmatprep.subr.mxu0 0.0
        %1198 = vmatpush1.msra.mxu0 0.0
        %1199 = vmatprep.subr.mxu0 0.0
        %1200 = vmatpush1.msra.mxu0 0.0
        %1201 = vmatprep.subr.mxu0 0.0
        %1202 = vmatpush1.msra.mxu0 0.0
        %1203 = vmatprep.subr.mxu0 0.0
        %1204 = vmatpush1.msra.mxu0 0.0
        %1205 = vmatprep.subr.mxu0 0.0
        %1206 = vmatpush1.msra.mxu0 0.0
        %1207 = vmatprep.subr.mxu0 0.0
        %1208 = vmatpush1.msra.mxu0 0.0
        %1209 = vmatprep.subr.mxu0 0.0
        %1210 = vmatpush1.msra.mxu0 0.0
        %1211 = vmatprep.subr.mxu0 0.0
        %1212 = vmatpush1.msra.mxu0 0.0
        %1213 = vmatprep.subr.mxu0 0.0
        %1214 = vmatpush1.msra.mxu0 0.0
        %1215 = vmatprep.subr.mxu0 0.0
        %1216 = vmatpush1.msra.mxu0 0.0
        %1217 = vmatprep.subr.mxu0 0.0
        %1218 = vmatpush1.msra.mxu0 0.0
        %1219 = vmatprep.subr.mxu0 0.0
        %1220 = vmatpush1.msra.mxu0 0.0
        %1221 = vmatprep.subr.mxu0 0.0
        %1222 = vmatpush1.msra.mxu0 0.0
        %1223 = vmatprep.subr.mxu0 0.0
        %1224 = vmatpush1.msra.mxu0 0.0
        %1225 = vmatprep.subr.mxu0 0.0
        %1226 = vmatpush1.msra.mxu0 0.0
        %1227 = vmatprep.subr.mxu0 %v1195
        %1228 = vmatpush1.msra.mxu0 %v1192
        %1229 = vmatprep.subr.mxu0 0.0
        %1230 = vmatpush2.msra.mxu0 0.0
        %1231 = vmatprep.subr.mxu0 0.0
        %1232 = vmatpush2.msra.mxu0 0.0
        %1233 = vmatprep.subr.mxu0 0.0
        %1234 = vmatpush2.msra.mxu0 0.0
        %1235 = vmatprep.subr.mxu0 0.0
        %1236 = vmatpush2.msra.mxu0 0.0
        %1237 = vmatprep.subr.mxu0 0.0
        %1238 = vmatpush2.msra.mxu0 0.0
        %1239 = vmatprep.subr.mxu0 0.0
        %1240 = vmatpush2.msra.mxu0 0.0
        %1241 = vmatprep.subr.mxu0 0.0
        %1242 = vmatpush2.msra.mxu0 0.0
        %1243 = vmatprep.subr.mxu0 0.0
        %1244 = vmatpush2.msra.mxu0 0.0
        %1245 = vmatprep.subr.mxu0 0.0
        %1246 = vmatpush2.msra.mxu0 0.0
        %1247 = vmatprep.subr.mxu0 0.0
        %1248 = vmatpush2.msra.mxu0 0.0
        %1249 = vmatprep.subr.mxu0 0.0
        %1250 = vmatpush2.msra.mxu0 0.0
        %1251 = vmatprep.subr.mxu0 0.0
        %1252 = vmatpush2.msra.mxu0 0.0
        %1253 = vmatprep.subr.mxu0 0.0
        %1254 = vmatpush2.msra.mxu0 0.0
        %1255 = vmatprep.subr.mxu0 0.0
        %1256 = vmatpush2.msra.mxu0 0.0
        %1257 = vmatprep.subr.mxu0 0.0
        %1258 = vmatpush2.msra.mxu0 0.0
        %1259 = vmatprep.subr.mxu0 0.0
        %1260 = vmatpush2.msra.mxu0 0.0
        %1261 = vmatprep.mubr.f32.mxu0 0.0
        %1262 = vmatmul.mubr.f32.gmra.mxu0 %v729
        %v1263 = vpop.f32.mrf.mxu0
        %v1264 = vadd.f32 %v711, %v1263
        %v1265 = vpop.f32.mrf.mxu0
        %v1266 = vadd.f32 %v711, %v1265
        %1267 = vmatprep.mubr.f32.mxu0 0.0
        %1268 = vmatmul.mubr.f32.gmra.mxu0 %v732
        %v1269 = vpop.f32.mrf.mxu0
        %v1270 = vadd.f32 %v716, %v1269
        %v1271 = vpop.f32.mrf.mxu0
        %v1272 = vadd.f32 %v716, %v1271
        %1273 = vmatprep.mubr.f32.mxu0 0.0
        %1274 = vmatmul.mubr.f32.gmra.mxu0 %v735
        %v1275 = vpop.f32.mrf.mxu0
        %v1276 = vadd.f32 %v721, %v1275
        %v1277 = vpop.f32.mrf.mxu0
        %v1278 = vadd.f32 %v721, %v1277
        %1279 = vmatprep.mubr.f32.mxu0 0.0
        %1280 = vmatmul.mubr.f32.gmra.mxu0 %v738
        %v1281 = vpop.f32.mrf.mxu0
        %v1282 = vadd.f32 %v726, %v1281
        %v1283 = vpop.f32.mrf.mxu0
        %v1284 = vadd.f32 %v726, %v1283
        %1285 = vdwg.mxu0
        %v1286 = vtanh.pop %v1264
        %v1287 = vtanh.pop %v1266
        %v1288 = vtanh.pop %v1270
        %v1289 = vtanh.pop %v1272
        %v1290 = vtanh.pop %v1276
        %v1291 = vtanh.pop %v1278
        %v1292 = vtanh.pop %v1282
        %v1293 = vtanh.pop %v1284
        %v1294 = vmul.f32 %v1286, %v1286
        %v1295 = vmul.f32 %v1287, %v1287
        %v1296 = vmul.f32 %v1288, %v1288
        %v1297 = vmul.f32 %v1289, %v1289
        %v1298 = vmul.f32 %v1290, %v1290
        %v1299 = vmul.f32 %v1291, %v1291
        %v1300 = vmul.f32 %v1292, %v1292
        %v1301 = vmul.f32 %v1293, %v1293
        %v1302 = vsub.f32 1.0, %v1294
        %v1303 = vsub.f32 1.0, %v1295
        %v1304 = vsub.f32 1.0, %v1296
        %v1305 = vsub.f32 1.0, %v1297
        %v1306 = vsub.f32 1.0, %v1298
        %v1307 = vsub.f32 1.0, %v1299
        %v1308 = vsub.f32 1.0, %v1300
        %v1309 = vsub.f32 1.0, %v1301
        %v1310 = vmul.f32 %v1302, %v862
        %v1311 = vmul.f32 %v1303, %v862
        %v1312 = vmul.f32 %v1304, %v867
        %v1313 = vmul.f32 %v1305, %v867
        %v1314 = vmul.f32 %v1306, %v872
        %v1315 = vmul.f32 %v1307, %v872
        %v1316 = vmul.f32 %v1308, %v877
        %v1317 = vmul.f32 %v1309, %v877
        %1318 = vmatprep.subr.mxu0 0.0
        %1319 = vmatpush1.msra.mxu0 0.0
        %1320 = vmatprep.subr.mxu0 0.0
        %1321 = vmatpush1.msra.mxu0 0.0
        %1322 = vmatprep.subr.mxu0 0.0
        %1323 = vmatpush1.msra.mxu0 0.0
        %1324 = vmatprep.subr.mxu0 0.0
        %1325 = vmatpush1.msra.mxu0 0.0
        %1326 = vmatprep.subr.mxu0 0.0
        %1327 = vmatpush1.msra.mxu0 0.0
        %1328 = vmatprep.subr.mxu0 0.0
        %1329 = vmatpush1.msra.mxu0 0.0
        %1330 = vmatprep.subr.mxu0 0.0
        %1331 = vmatpush1.msra.mxu0 0.0
        %1332 = vmatprep.subr.mxu0 0.0
        %1333 = vmatpush1.msra.mxu0 0.0
        %1334 = vmatprep.subr.mxu0 0.0
        %1335 = vmatpush1.msra.mxu0 0.0
        %1336 = vmatprep.subr.mxu0 0.0
        %1337 = vmatpush1.msra.mxu0 0.0
        %1338 = vmatprep.subr.mxu0 0.0
        %1339 = vmatpush1.msra.mxu0 0.0
        %1340 = vmatprep.subr.mxu0 0.0
        %1341 = vmatpush1.msra.mxu0 0.0
        %1342 = vmatprep.subr.mxu0 %v1317
        %1343 = vmatpush1.msra.mxu0 %v1316
        %1344 = vmatprep.subr.mxu0 %v1315
        %1345 = vmatpush1.msra.mxu0 %v1314
        %1346 = vmatprep.subr.mxu0 %v1313
        %1347 = vmatpush1.msra.mxu0 %v1312
        %1348 = vmatprep.subr.mxu0 %v1311
        %1349 = vmatpush1.msra.mxu0 %v1310
        %1350 = vmatprep.subr.mxu0 0.0
        %1351 = vmatpush2.msra.mxu0 0.0
        %1352 = vmatprep.subr.mxu0 0.0
        %1353 = vmatpush2.msra.mxu0 0.0
        %1354 = vmatprep.subr.mxu0 0.0
        %1355 = vmatpush2.msra.mxu0 0.0
        %1356 = vmatprep.subr.mxu0 0.0
        %1357 = vmatpush2.msra.mxu0 0.0
        %1358 = vmatprep.subr.mxu0 0.0
        %1359 = vmatpush2.msra.mxu0 0.0
        %1360 = vmatprep.subr.mxu0 0.0
        %1361 = vmatpush2.msra.mxu0 0.0
        %1362 = vmatprep.subr.mxu0 0.0
        %1363 = vmatpush2.msra.mxu0 0.0
        %1364 = vmatprep.subr.mxu0 0.0
        %1365 = vmatpush2.msra.mxu0 0.0
        %1366 = vmatprep.subr.mxu0 0.0
        %1367 = vmatpush2.msra.mxu0 0.0
        %1368 = vmatprep.subr.mxu0 0.0
        %1369 = vmatpush2.msra.mxu0 0.0
        %1370 = vmatprep.subr.mxu0 0.0
        %1371 = vmatpush2.msra.mxu0 0.0
        %1372 = vmatprep.subr.mxu0 0.0
        %1373 = vmatpush2.msra.mxu0 0.0
        %1374 = vmatprep.subr.mxu0 0.0
        %1375 = vmatpush2.msra.mxu0 0.0
        %1376 = vmatprep.subr.mxu0 0.0
        %1377 = vmatpush2.msra.mxu0 0.0
        %1378 = vmatprep.subr.mxu0 0.0
        %1379 = vmatpush2.msra.mxu0 0.0
        %1380 = vmatprep.subr.mxu0 0.0
        %1381 = vmatpush2.msra.mxu0 0.0
        %1382 = vmatprep.mubr.f32.mxu0 0.0
        %1383 = vmatmul.mubr.f32.gmra.mxu0 %v888
        %v1384 = vpop.f32.mrf.mxu0
        %v1385 = vadd.f32 0.0, %v1384
        %v1386 = vpop.f32.mrf.mxu0
        %v1387 = vadd.f32 0.0, %v1386
        %1388 = vdwg.mxu0
        %v1389 = vsub.f32 %v1189, %v467
        %v1390 = vsub.f32 %v1190, %v497
        %v1391 = vsub.f32 %v1385, %v1389
        %v1392 = vsub.f32 %v1387, %v1390
        %v1393 = vmul.f32 %v1391, 0.05
        %v1394 = vmul.f32 %v1392, 0.05
        %v1395 = vadd.f32 %v1189, %v1393
        %v1396 = vadd.f32 %v1190, %v1394
        %s1397 = scalar_lea.vmem %s415, 16 [#allocation2]
        %v1398 = vld [vmem:[%s1397] sm:$0xff]
        %v1399 = vmul.f32 %v1398, 0.31622776
        %v1401 = vcombine.high %v1399, %v1399
        %v1403 = vadd.f32 %v1395, %v1399
        %v1404 = vadd.f32 %v1396, %v1401
        %v1406 = vsel %vm511, %v1403, 0
        %v1409 = vsel %vm511, %v1404, 0
        %1411 = vmatprep.subr.mxu0 0.0
        %1412 = vmatpush1.msra.mxu0 0.0
        %1413 = vmatprep.subr.mxu0 0.0
        %1414 = vmatpush1.msra.mxu0 0.0
        %1415 = vmatprep.subr.mxu0 0.0
        %1416 = vmatpush1.msra.mxu0 0.0
        %1417 = vmatprep.subr.mxu0 0.0
        %1418 = vmatpush1.msra.mxu0 0.0
        %1419 = vmatprep.subr.mxu0 0.0
        %1420 = vmatpush1.msra.mxu0 0.0
        %1421 = vmatprep.subr.mxu0 0.0
        %1422 = vmatpush1.msra.mxu0 0.0
        %1423 = vmatprep.subr.mxu0 0.0
        %1424 = vmatpush1.msra.mxu0 0.0
        %1425 = vmatprep.subr.mxu0 0.0
        %1426 = vmatpush1.msra.mxu0 0.0
        %1427 = vmatprep.subr.mxu0 0.0
        %1428 = vmatpush1.msra.mxu0 0.0
        %1429 = vmatprep.subr.mxu0 0.0
        %1430 = vmatpush1.msra.mxu0 0.0
        %1431 = vmatprep.subr.mxu0 0.0
        %1432 = vmatpush1.msra.mxu0 0.0
        %1433 = vmatprep.subr.mxu0 0.0
        %1434 = vmatpush1.msra.mxu0 0.0
        %1435 = vmatprep.subr.mxu0 0.0
        %1436 = vmatpush1.msra.mxu0 0.0
        %1437 = vmatprep.subr.mxu0 0.0
        %1438 = vmatpush1.msra.mxu0 0.0
        %1439 = vmatprep.subr.mxu0 0.0
        %1440 = vmatpush1.msra.mxu0 0.0
        %1441 = vmatprep.subr.mxu0 %v1409
        %1442 = vmatpush1.msra.mxu0 %v1406
        %1443 = vmatprep.subr.mxu0 0.0
        %1444 = vmatpush2.msra.mxu0 0.0
        %1445 = vmatprep.subr.mxu0 0.0
        %1446 = vmatpush2.msra.mxu0 0.0
        %1447 = vmatprep.subr.mxu0 0.0
        %1448 = vmatpush2.msra.mxu0 0.0
        %1449 = vmatprep.subr.mxu0 0.0
        %1450 = vmatpush2.msra.mxu0 0.0
        %1451 = vmatprep.subr.mxu0 0.0
        %1452 = vmatpush2.msra.mxu0 0.0
        %1453 = vmatprep.subr.mxu0 0.0
        %1454 = vmatpush2.msra.mxu0 0.0
        %1455 = vmatprep.subr.mxu0 0.0
        %1456 = vmatpush2.msra.mxu0 0.0
        %1457 = vmatprep.subr.mxu0 0.0
        %1458 = vmatpush2.msra.mxu0 0.0
        %1459 = vmatprep.subr.mxu0 0.0
        %1460 = vmatpush2.msra.mxu0 0.0
        %1461 = vmatprep.subr.mxu0 0.0
        %1462 = vmatpush2.msra.mxu0 0.0
        %1463 = vmatprep.subr.mxu0 0.0
        %1464 = vmatpush2.msra.mxu0 0.0
        %1465 = vmatprep.subr.mxu0 0.0
        %1466 = vmatpush2.msra.mxu0 0.0
        %1467 = vmatprep.subr.mxu0 0.0
        %1468 = vmatpush2.msra.mxu0 0.0
        %1469 = vmatprep.subr.mxu0 0.0
        %1470 = vmatpush2.msra.mxu0 0.0
        %1471 = vmatprep.subr.mxu0 0.0
        %1472 = vmatpush2.msra.mxu0 0.0
        %1473 = vmatprep.subr.mxu0 0.0
        %1474 = vmatpush2.msra.mxu0 0.0
        %1475 = vmatprep.mubr.f32.mxu0 0.0
        %1476 = vmatmul.mubr.f32.gmra.mxu0 %v729
        %v1477 = vpop.f32.mrf.mxu0
        %v1478 = vadd.f32 %v711, %v1477
        %v1479 = vpop.f32.mrf.mxu0
        %v1480 = vadd.f32 %v711, %v1479
        %1481 = vmatprep.mubr.f32.mxu0 0.0
        %1482 = vmatmul.mubr.f32.gmra.mxu0 %v732
        %v1483 = vpop.f32.mrf.mxu0
        %v1484 = vadd.f32 %v716, %v1483
        %v1485 = vpop.f32.mrf.mxu0
        %v1486 = vadd.f32 %v716, %v1485
        %1487 = vmatprep.mubr.f32.mxu0 0.0
        %1488 = vmatmul.mubr.f32.gmra.mxu0 %v735
        %v1489 = vpop.f32.mrf.mxu0
        %v1490 = vadd.f32 %v721, %v1489
        %v1491 = vpop.f32.mrf.mxu0
        %v1492 = vadd.f32 %v721, %v1491
        %1493 = vmatprep.mubr.f32.mxu0 0.0
        %1494 = vmatmul.mubr.f32.gmra.mxu0 %v738
        %v1495 = vpop.f32.mrf.mxu0
        %v1496 = vadd.f32 %v726, %v1495
        %v1497 = vpop.f32.mrf.mxu0
        %v1498 = vadd.f32 %v726, %v1497
        %1499 = vdwg.mxu0
        %v1500 = vtanh.pop %v1478
        %v1501 = vtanh.pop %v1480
        %v1502 = vtanh.pop %v1484
        %v1503 = vtanh.pop %v1486
        %v1504 = vtanh.pop %v1490
        %v1505 = vtanh.pop %v1492
        %v1506 = vtanh.pop %v1496
        %v1507 = vtanh.pop %v1498
        %v1508 = vmul.f32 %v1500, %v1500
        %v1509 = vmul.f32 %v1501, %v1501
        %v1510 = vmul.f32 %v1502, %v1502
        %v1511 = vmul.f32 %v1503, %v1503
        %v1512 = vmul.f32 %v1504, %v1504
        %v1513 = vmul.f32 %v1505, %v1505
        %v1514 = vmul.f32 %v1506, %v1506
        %v1515 = vmul.f32 %v1507, %v1507
        %v1516 = vsub.f32 1.0, %v1508
        %v1517 = vsub.f32 1.0, %v1509
        %v1518 = vsub.f32 1.0, %v1510
        %v1519 = vsub.f32 1.0, %v1511
        %v1520 = vsub.f32 1.0, %v1512
        %v1521 = vsub.f32 1.0, %v1513
        %v1522 = vsub.f32 1.0, %v1514
        %v1523 = vsub.f32 1.0, %v1515
        %v1524 = vmul.f32 %v1516, %v862
        %v1525 = vmul.f32 %v1517, %v862
        %v1526 = vmul.f32 %v1518, %v867
        %v1527 = vmul.f32 %v1519, %v867
        %v1528 = vmul.f32 %v1520, %v872
        %v1529 = vmul.f32 %v1521, %v872
        %v1530 = vmul.f32 %v1522, %v877
        %v1531 = vmul.f32 %v1523, %v877
        %1532 = vmatprep.subr.mxu0 0.0
        %1533 = vmatpush1.msra.mxu0 0.0
        %1534 = vmatprep.subr.mxu0 0.0
        %1535 = vmatpush1.msra.mxu0 0.0
        %1536 = vmatprep.subr.mxu0 0.0
        %1537 = vmatpush1.msra.mxu0 0.0
        %1538 = vmatprep.subr.mxu0 0.0
        %1539 = vmatpush1.msra.mxu0 0.0
        %1540 = vmatprep.subr.mxu0 0.0
        %1541 = vmatpush1.msra.mxu0 0.0
        %1542 = vmatprep.subr.mxu0 0.0
        %1543 = vmatpush1.msra.mxu0 0.0
        %1544 = vmatprep.subr.mxu0 0.0
        %1545 = vmatpush1.msra.mxu0 0.0
        %1546 = vmatprep.subr.mxu0 0.0
        %1547 = vmatpush1.msra.mxu0 0.0
        %1548 = vmatprep.subr.mxu0 0.0
        %1549 = vmatpush1.msra.mxu0 0.0
        %1550 = vmatprep.subr.mxu0 0.0
        %1551 = vmatpush1.msra.mxu0 0.0
        %1552 = vmatprep.subr.mxu0 0.0
        %1553 = vmatpush1.msra.mxu0 0.0
        %1554 = vmatprep.subr.mxu0 0.0
        %1555 = vmatpush1.msra.mxu0 0.0
        %1556 = vmatprep.subr.mxu0 %v1531
        %1557 = vmatpush1.msra.mxu0 %v1530
        %1558 = vmatprep.subr.mxu0 %v1529
        %1559 = vmatpush1.msra.mxu0 %v1528
        %1560 = vmatprep.subr.mxu0 %v1527
        %1561 = vmatpush1.msra.mxu0 %v1526
        %1562 = vmatprep.subr.mxu0 %v1525
        %1563 = vmatpush1.msra.mxu0 %v1524
        %1564 = vmatprep.subr.mxu0 0.0
        %1565 = vmatpush2.msra.mxu0 0.0
        %1566 = vmatprep.subr.mxu0 0.0
        %1567 = vmatpush2.msra.mxu0 0.0
        %1568 = vmatprep.subr.mxu0 0.0
        %1569 = vmatpush2.msra.mxu0 0.0
        %1570 = vmatprep.subr.mxu0 0.0
        %1571 = vmatpush2.msra.mxu0 0.0
        %1572 = vmatprep.subr.mxu0 0.0
        %1573 = vmatpush2.msra.mxu0 0.0
        %1574 = vmatprep.subr.mxu0 0.0
        %1575 = vmatpush2.msra.mxu0 0.0
        %1576 = vmatprep.subr.mxu0 0.0
        %1577 = vmatpush2.msra.mxu0 0.0
        %1578 = vmatprep.subr.mxu0 0.0
        %1579 = vmatpush2.msra.mxu0 0.0
        %1580 = vmatprep.subr.mxu0 0.0
        %1581 = vmatpush2.msra.mxu0 0.0
        %1582 = vmatprep.subr.mxu0 0.0
        %1583 = vmatpush2.msra.mxu0 0.0
        %1584 = vmatprep.subr.mxu0 0.0
        %1585 = vmatpush2.msra.mxu0 0.0
        %1586 = vmatprep.subr.mxu0 0.0
        %1587 = vmatpush2.msra.mxu0 0.0
        %1588 = vmatprep.subr.mxu0 0.0
        %1589 = vmatpush2.msra.mxu0 0.0
        %1590 = vmatprep.subr.mxu0 0.0
        %1591 = vmatpush2.msra.mxu0 0.0
        %1592 = vmatprep.subr.mxu0 0.0
        %1593 = vmatpush2.msra.mxu0 0.0
        %1594 = vmatprep.subr.mxu0 0.0
        %1595 = vmatpush2.msra.mxu0 0.0
        %1596 = vmatprep.mubr.f32.mxu0 0.0
        %1597 = vmatmul.mubr.f32.gmra.mxu0 %v888
        %v1598 = vpop.f32.mrf.mxu0
        %v1599 = vadd.f32 0.0, %v1598
        %v1600 = vpop.f32.mrf.mxu0
        %v1601 = vadd.f32 0.0, %v1600
        %1602 = vdwg.mxu0
        %v1603 = vsub.f32 %v1403, %v467
        %v1604 = vsub.f32 %v1404, %v497
        %v1605 = vsub.f32 %v1599, %v1603
        %v1606 = vsub.f32 %v1601, %v1604
        %v1607 = vmul.f32 %v1605, 0.05
        %v1608 = vmul.f32 %v1606, 0.05
        %v1609 = vadd.f32 %v1403, %v1607
        %v1610 = vadd.f32 %v1404, %v1608
        %s1611 = scalar_lea.vmem %s415, 24 [#allocation2]
        %v1612 = vld [vmem:[%s1611] sm:$0xff]
        %v1613 = vmul.f32 %v1612, 0.31622776
        %v1615 = vcombine.high %v1613, %v1613
        %v1617 = vadd.f32 %v1609, %v1613
        %v1618 = vadd.f32 %v1610, %v1615
        %v1620 = vsel %vm511, %v1617, 0
        %v1623 = vsel %vm511, %v1618, 0
        %1625 = vmatprep.subr.mxu0 0.0
        %1626 = vmatpush1.msra.mxu0 0.0
        %1627 = vmatprep.subr.mxu0 0.0
        %1628 = vmatpush1.msra.mxu0 0.0
        %1629 = vmatprep.subr.mxu0 0.0
        %1630 = vmatpush1.msra.mxu0 0.0
        %1631 = vmatprep.subr.mxu0 0.0
        %1632 = vmatpush1.msra.mxu0 0.0
        %1633 = vmatprep.subr.mxu0 0.0
        %1634 = vmatpush1.msra.mxu0 0.0
        %1635 = vmatprep.subr.mxu0 0.0
        %1636 = vmatpush1.msra.mxu0 0.0
        %1637 = vmatprep.subr.mxu0 0.0
        %1638 = vmatpush1.msra.mxu0 0.0
        %1639 = vmatprep.subr.mxu0 0.0
        %1640 = vmatpush1.msra.mxu0 0.0
        %1641 = vmatprep.subr.mxu0 0.0
        %1642 = vmatpush1.msra.mxu0 0.0
        %1643 = vmatprep.subr.mxu0 0.0
        %1644 = vmatpush1.msra.mxu0 0.0
        %1645 = vmatprep.subr.mxu0 0.0
        %1646 = vmatpush1.msra.mxu0 0.0
        %1647 = vmatprep.subr.mxu0 0.0
        %1648 = vmatpush1.msra.mxu0 0.0
        %1649 = vmatprep.subr.mxu0 0.0
        %1650 = vmatpush1.msra.mxu0 0.0
        %1651 = vmatprep.subr.mxu0 0.0
        %1652 = vmatpush1.msra.mxu0 0.0
        %1653 = vmatprep.subr.mxu0 0.0
        %1654 = vmatpush1.msra.mxu0 0.0
        %1655 = vmatprep.subr.mxu0 %v1623
        %1656 = vmatpush1.msra.mxu0 %v1620
        %1657 = vmatprep.subr.mxu0 0.0
        %1658 = vmatpush2.msra.mxu0 0.0
        %1659 = vmatprep.subr.mxu0 0.0
        %1660 = vmatpush2.msra.mxu0 0.0
        %1661 = vmatprep.subr.mxu0 0.0
        %1662 = vmatpush2.msra.mxu0 0.0
        %1663 = vmatprep.subr.mxu0 0.0
        %1664 = vmatpush2.msra.mxu0 0.0
        %1665 = vmatprep.subr.mxu0 0.0
        %1666 = vmatpush2.msra.mxu0 0.0
        %1667 = vmatprep.subr.mxu0 0.0
        %1668 = vmatpush2.msra.mxu0 0.0
        %1669 = vmatprep.subr.mxu0 0.0
        %1670 = vmatpush2.msra.mxu0 0.0
        %1671 = vmatprep.subr.mxu0 0.0
        %1672 = vmatpush2.msra.mxu0 0.0
        %1673 = vmatprep.subr.mxu0 0.0
        %1674 = vmatpush2.msra.mxu0 0.0
        %1675 = vmatprep.subr.mxu0 0.0
        %1676 = vmatpush2.msra.mxu0 0.0
        %1677 = vmatprep.subr.mxu0 0.0
        %1678 = vmatpush2.msra.mxu0 0.0
        %1679 = vmatprep.subr.mxu0 0.0
        %1680 = vmatpush2.msra.mxu0 0.0
        %1681 = vmatprep.subr.mxu0 0.0
        %1682 = vmatpush2.msra.mxu0 0.0
        %1683 = vmatprep.subr.mxu0 0.0
        %1684 = vmatpush2.msra.mxu0 0.0
        %1685 = vmatprep.subr.mxu0 0.0
        %1686 = vmatpush2.msra.mxu0 0.0
        %1687 = vmatprep.subr.mxu0 0.0
        %1688 = vmatpush2.msra.mxu0 0.0
        %1689 = vmatprep.mubr.f32.mxu0 0.0
        %1690 = vmatmul.mubr.f32.gmra.mxu0 %v729
        %v1691 = vpop.f32.mrf.mxu0
        %v1692 = vadd.f32 %v711, %v1691
        %v1693 = vpop.f32.mrf.mxu0
        %v1694 = vadd.f32 %v711, %v1693
        %1695 = vmatprep.mubr.f32.mxu0 0.0
        %1696 = vmatmul.mubr.f32.gmra.mxu0 %v732
        %v1697 = vpop.f32.mrf.mxu0
        %v1698 = vadd.f32 %v716, %v1697
        %v1699 = vpop.f32.mrf.mxu0
        %v1700 = vadd.f32 %v716, %v1699
        %1701 = vmatprep.mubr.f32.mxu0 0.0
        %1702 = vmatmul.mubr.f32.gmra.mxu0 %v735
        %v1703 = vpop.f32.mrf.mxu0
        %v1704 = vadd.f32 %v721, %v1703
        %v1705 = vpop.f32.mrf.mxu0
        %v1706 = vadd.f32 %v721, %v1705
        %1707 = vmatprep.mubr.f32.mxu0 0.0
        %1708 = vmatmul.mubr.f32.gmra.mxu0 %v738
        %v1709 = vpop.f32.mrf.mxu0
        %v1710 = vadd.f32 %v726, %v1709
        %v1711 = vpop.f32.mrf.mxu0
        %v1712 = vadd.f32 %v726, %v1711
        %1713 = vdwg.mxu0
        %v1714 = vtanh.pop %v1692
        %v1715 = vtanh.pop %v1694
        %v1716 = vtanh.pop %v1698
        %v1717 = vtanh.pop %v1700
        %v1718 = vtanh.pop %v1704
        %v1719 = vtanh.pop %v1706
        %v1720 = vtanh.pop %v1710
        %v1721 = vtanh.pop %v1712
        %v1722 = vmul.f32 %v1714, %v1714
        %v1723 = vmul.f32 %v1715, %v1715
        %v1724 = vmul.f32 %v1716, %v1716
        %v1725 = vmul.f32 %v1717, %v1717
        %v1726 = vmul.f32 %v1718, %v1718
        %v1727 = vmul.f32 %v1719, %v1719
        %v1728 = vmul.f32 %v1720, %v1720
        %v1729 = vmul.f32 %v1721, %v1721
        %v1730 = vsub.f32 1.0, %v1722
        %v1731 = vsub.f32 1.0, %v1723
        %v1732 = vsub.f32 1.0, %v1724
        %v1733 = vsub.f32 1.0, %v1725
        %v1734 = vsub.f32 1.0, %v1726
        %v1735 = vsub.f32 1.0, %v1727
        %v1736 = vsub.f32 1.0, %v1728
        %v1737 = vsub.f32 1.0, %v1729
        %v1738 = vmul.f32 %v1730, %v862
        %v1739 = vmul.f32 %v1731, %v862
        %v1740 = vmul.f32 %v1732, %v867
        %v1741 = vmul.f32 %v1733, %v867
        %v1742 = vmul.f32 %v1734, %v872
        %v1743 = vmul.f32 %v1735, %v872
        %v1744 = vmul.f32 %v1736, %v877
        %v1745 = vmul.f32 %v1737, %v877
        %1746 = vmatprep.subr.mxu0 0.0
        %1747 = vmatpush1.msra.mxu0 0.0
        %1748 = vmatprep.subr.mxu0 0.0
        %1749 = vmatpush1.msra.mxu0 0.0
        %1750 = vmatprep.subr.mxu0 0.0
        %1751 = vmatpush1.msra.mxu0 0.0
        %1752 = vmatprep.subr.mxu0 0.0
        %1753 = vmatpush1.msra.mxu0 0.0
        %1754 = vmatprep.subr.mxu0 0.0
        %1755 = vmatpush1.msra.mxu0 0.0
        %1756 = vmatprep.subr.mxu0 0.0
        %1757 = vmatpush1.msra.mxu0 0.0
        %1758 = vmatprep.subr.mxu0 0.0
        %1759 = vmatpush1.msra.mxu0 0.0
        %1760 = vmatprep.subr.mxu0 0.0
        %1761 = vmatpush1.msra.mxu0 0.0
        %1762 = vmatprep.subr.mxu0 0.0
        %1763 = vmatpush1.msra.mxu0 0.0
        %1764 = vmatprep.subr.mxu0 0.0
        %1765 = vmatpush1.msra.mxu0 0.0
        %1766 = vmatprep.subr.mxu0 0.0
        %1767 = vmatpush1.msra.mxu0 0.0
        %1768 = vmatprep.subr.mxu0 0.0
        %1769 = vmatpush1.msra.mxu0 0.0
        %1770 = vmatprep.subr.mxu0 %v1745
        %1771 = vmatpush1.msra.mxu0 %v1744
        %1772 = vmatprep.subr.mxu0 %v1743
        %1773 = vmatpush1.msra.mxu0 %v1742
        %1774 = vmatprep.subr.mxu0 %v1741
        %1775 = vmatpush1.msra.mxu0 %v1740
        %1776 = vmatprep.subr.mxu0 %v1739
        %1777 = vmatpush1.msra.mxu0 %v1738
        %1778 = vmatprep.subr.mxu0 0.0
        %1779 = vmatpush2.msra.mxu0 0.0
        %1780 = vmatprep.subr.mxu0 0.0
        %1781 = vmatpush2.msra.mxu0 0.0
        %1782 = vmatprep.subr.mxu0 0.0
        %1783 = vmatpush2.msra.mxu0 0.0
        %1784 = vmatprep.subr.mxu0 0.0
        %1785 = vmatpush2.msra.mxu0 0.0
        %1786 = vmatprep.subr.mxu0 0.0
        %1787 = vmatpush2.msra.mxu0 0.0
        %1788 = vmatprep.subr.mxu0 0.0
        %1789 = vmatpush2.msra.mxu0 0.0
        %1790 = vmatprep.subr.mxu0 0.0
        %1791 = vmatpush2.msra.mxu0 0.0
        %1792 = vmatprep.subr.mxu0 0.0
        %1793 = vmatpush2.msra.mxu0 0.0
        %1794 = vmatprep.subr.mxu0 0.0
        %1795 = vmatpush2.msra.mxu0 0.0
        %1796 = vmatprep.subr.mxu0 0.0
        %1797 = vmatpush2.msra.mxu0 0.0
        %1798 = vmatprep.subr.mxu0 0.0
        %1799 = vmatpush2.msra.mxu0 0.0
        %1800 = vmatprep.subr.mxu0 0.0
        %1801 = vmatpush2.msra.mxu0 0.0
        %1802 = vmatprep.subr.mxu0 0.0
        %1803 = vmatpush2.msra.mxu0 0.0
        %1804 = vmatprep.subr.mxu0 0.0
        %1805 = vmatpush2.msra.mxu0 0.0
        %1806 = vmatprep.subr.mxu0 0.0
        %1807 = vmatpush2.msra.mxu0 0.0
        %1808 = vmatprep.subr.mxu0 0.0
        %1809 = vmatpush2.msra.mxu0 0.0
        %1810 = vmatprep.mubr.f32.mxu0 0.0
        %1811 = vmatmul.mubr.f32.gmra.mxu0 %v888
        %v1812 = vpop.f32.mrf.mxu0
        %v1813 = vadd.f32 0.0, %v1812
        %v1814 = vpop.f32.mrf.mxu0
        %v1815 = vadd.f32 0.0, %v1814
        %1816 = vdwg.mxu0
        %v1817 = vsub.f32 %v1617, %v467
        %v1818 = vsub.f32 %v1618, %v497
        %v1819 = vsub.f32 %v1813, %v1817
        %v1820 = vsub.f32 %v1815, %v1818
        %v1821 = vmul.f32 %v1819, 0.05
        %v1822 = vmul.f32 %v1820, 0.05
        %v1823 = vadd.f32 %v1617, %v1821
        %v1824 = vadd.f32 %v1618, %v1822
        %s1825 = scalar_lea.vmem %s415, 32 [#allocation2]
        %v1826 = vld [vmem:[%s1825] sm:$0xff]
        %v1827 = vmul.f32 %v1826, 0.31622776
        %v1829 = vcombine.high %v1827, %v1827
        %v1831 = vadd.f32 %v1823, %v1827
        %v1832 = vadd.f32 %v1824, %v1829
        %v1834 = vsel %vm511, %v1831, 0
        %v1837 = vsel %vm511, %v1832, 0
        %1839 = vmatprep.subr.mxu0 0.0
        %1840 = vmatpush1.msra.mxu0 0.0
        %1841 = vmatprep.subr.mxu0 0.0
        %1842 = vmatpush1.msra.mxu0 0.0
        %1843 = vmatprep.subr.mxu0 0.0
        %1844 = vmatpush1.msra.mxu0 0.0
        %1845 = vmatprep.subr.mxu0 0.0
        %1846 = vmatpush1.msra.mxu0 0.0
        %1847 = vmatprep.subr.mxu0 0.0
        %1848 = vmatpush1.msra.mxu0 0.0
        %1849 = vmatprep.subr.mxu0 0.0
        %1850 = vmatpush1.msra.mxu0 0.0
        %1851 = vmatprep.subr.mxu0 0.0
        %1852 = vmatpush1.msra.mxu0 0.0
        %1853 = vmatprep.subr.mxu0 0.0
        %1854 = vmatpush1.msra.mxu0 0.0
        %1855 = vmatprep.subr.mxu0 0.0
        %1856 = vmatpush1.msra.mxu0 0.0
        %1857 = vmatprep.subr.mxu0 0.0
        %1858 = vmatpush1.msra.mxu0 0.0
        %1859 = vmatprep.subr.mxu0 0.0
        %1860 = vmatpush1.msra.mxu0 0.0
        %1861 = vmatprep.subr.mxu0 0.0
        %1862 = vmatpush1.msra.mxu0 0.0
        %1863 = vmatprep.subr.mxu0 0.0
        %1864 = vmatpush1.msra.mxu0 0.0
        %1865 = vmatprep.subr.mxu0 0.0
        %1866 = vmatpush1.msra.mxu0 0.0
        %1867 = vmatprep.subr.mxu0 0.0
        %1868 = vmatpush1.msra.mxu0 0.0
        %1869 = vmatprep.subr.mxu0 %v1837
        %1870 = vmatpush1.msra.mxu0 %v1834
        %1871 = vmatprep.subr.mxu0 0.0
        %1872 = vmatpush2.msra.mxu0 0.0
        %1873 = vmatprep.subr.mxu0 0.0
        %1874 = vmatpush2.msra.mxu0 0.0
        %1875 = vmatprep.subr.mxu0 0.0
        %1876 = vmatpush2.msra.mxu0 0.0
        %1877 = vmatprep.subr.mxu0 0.0
        %1878 = vmatpush2.msra.mxu0 0.0
        %1879 = vmatprep.subr.mxu0 0.0
        %1880 = vmatpush2.msra.mxu0 0.0
        %1881 = vmatprep.subr.mxu0 0.0
        %1882 = vmatpush2.msra.mxu0 0.0
        %1883 = vmatprep.subr.mxu0 0.0
        %1884 = vmatpush2.msra.mxu0 0.0
        %1885 = vmatprep.subr.mxu0 0.0
        %1886 = vmatpush2.msra.mxu0 0.0
        %1887 = vmatprep.subr.mxu0 0.0
        %1888 = vmatpush2.msra.mxu0 0.0
        %1889 = vmatprep.subr.mxu0 0.0
        %1890 = vmatpush2.msra.mxu0 0.0
        %1891 = vmatprep.subr.mxu0 0.0
        %1892 = vmatpush2.msra.mxu0 0.0
        %1893 = vmatprep.subr.mxu0 0.0
        %1894 = vmatpush2.msra.mxu0 0.0
        %1895 = vmatprep.subr.mxu0 0.0
        %1896 = vmatpush2.msra.mxu0 0.0
        %1897 = vmatprep.subr.mxu0 0.0
        %1898 = vmatpush2.msra.mxu0 0.0
        %1899 = vmatprep.subr.mxu0 0.0
        %1900 = vmatpush2.msra.mxu0 0.0
        %1901 = vmatprep.subr.mxu0 0.0
        %1902 = vmatpush2.msra.mxu0 0.0
        %1903 = vmatprep.mubr.f32.mxu0 0.0
        %1904 = vmatmul.mubr.f32.gmra.mxu0 %v729
        %v1905 = vpop.f32.mrf.mxu0
        %v1906 = vadd.f32 %v711, %v1905
        %v1907 = vpop.f32.mrf.mxu0
        %v1908 = vadd.f32 %v711, %v1907
        %1909 = vmatprep.mubr.f32.mxu0 0.0
        %1910 = vmatmul.mubr.f32.gmra.mxu0 %v732
        %v1911 = vpop.f32.mrf.mxu0
        %v1912 = vadd.f32 %v716, %v1911
        %v1913 = vpop.f32.mrf.mxu0
        %v1914 = vadd.f32 %v716, %v1913
        %1915 = vmatprep.mubr.f32.mxu0 0.0
        %1916 = vmatmul.mubr.f32.gmra.mxu0 %v735
        %v1917 = vpop.f32.mrf.mxu0
        %v1918 = vadd.f32 %v721, %v1917
        %v1919 = vpop.f32.mrf.mxu0
        %v1920 = vadd.f32 %v721, %v1919
        %1921 = vmatprep.mubr.f32.mxu0 0.0
        %1922 = vmatmul.mubr.f32.gmra.mxu0 %v738
        %v1923 = vpop.f32.mrf.mxu0
        %v1924 = vadd.f32 %v726, %v1923
        %v1925 = vpop.f32.mrf.mxu0
        %v1926 = vadd.f32 %v726, %v1925
        %1927 = vdwg.mxu0
        %v1928 = vtanh.pop %v1906
        %v1929 = vtanh.pop %v1908
        %v1930 = vtanh.pop %v1912
        %v1931 = vtanh.pop %v1914
        %v1932 = vtanh.pop %v1918
        %v1933 = vtanh.pop %v1920
        %v1934 = vtanh.pop %v1924
        %v1935 = vtanh.pop %v1926
        %v1936 = vmul.f32 %v1928, %v1928
        %v1937 = vmul.f32 %v1929, %v1929
        %v1938 = vmul.f32 %v1930, %v1930
        %v1939 = vmul.f32 %v1931, %v1931
        %v1940 = vmul.f32 %v1932, %v1932
        %v1941 = vmul.f32 %v1933, %v1933
        %v1942 = vmul.f32 %v1934, %v1934
        %v1943 = vmul.f32 %v1935, %v1935
        %v1944 = vsub.f32 1.0, %v1936
        %v1945 = vsub.f32 1.0, %v1937
        %v1946 = vsub.f32 1.0, %v1938
        %v1947 = vsub.f32 1.0, %v1939
        %v1948 = vsub.f32 1.0, %v1940
        %v1949 = vsub.f32 1.0, %v1941
        %v1950 = vsub.f32 1.0, %v1942
        %v1951 = vsub.f32 1.0, %v1943
        %v1952 = vmul.f32 %v1944, %v862
        %v1953 = vmul.f32 %v1945, %v862
        %v1954 = vmul.f32 %v1946, %v867
        %v1955 = vmul.f32 %v1947, %v867
        %v1956 = vmul.f32 %v1948, %v872
        %v1957 = vmul.f32 %v1949, %v872
        %v1958 = vmul.f32 %v1950, %v877
        %v1959 = vmul.f32 %v1951, %v877
        %1960 = vmatprep.subr.mxu0 0.0
        %1961 = vmatpush1.msra.mxu0 0.0
        %1962 = vmatprep.subr.mxu0 0.0
        %1963 = vmatpush1.msra.mxu0 0.0
        %1964 = vmatprep.subr.mxu0 0.0
        %1965 = vmatpush1.msra.mxu0 0.0
        %1966 = vmatprep.subr.mxu0 0.0
        %1967 = vmatpush1.msra.mxu0 0.0
        %1968 = vmatprep.subr.mxu0 0.0
        %1969 = vmatpush1.msra.mxu0 0.0
        %1970 = vmatprep.subr.mxu0 0.0
        %1971 = vmatpush1.msra.mxu0 0.0
        %1972 = vmatprep.subr.mxu0 0.0
        %1973 = vmatpush1.msra.mxu0 0.0
        %1974 = vmatprep.subr.mxu0 0.0
        %1975 = vmatpush1.msra.mxu0 0.0
        %1976 = vmatprep.subr.mxu0 0.0
        %1977 = vmatpush1.msra.mxu0 0.0
        %1978 = vmatprep.subr.mxu0 0.0
        %1979 = vmatpush1.msra.mxu0 0.0
        %1980 = vmatprep.subr.mxu0 0.0
        %1981 = vmatpush1.msra.mxu0 0.0
        %1982 = vmatprep.subr.mxu0 0.0
        %1983 = vmatpush1.msra.mxu0 0.0
        %1984 = vmatprep.subr.mxu0 %v1959
        %1985 = vmatpush1.msra.mxu0 %v1958
        %1986 = vmatprep.subr.mxu0 %v1957
        %1987 = vmatpush1.msra.mxu0 %v1956
        %1988 = vmatprep.subr.mxu0 %v1955
        %1989 = vmatpush1.msra.mxu0 %v1954
        %1990 = vmatprep.subr.mxu0 %v1953
        %1991 = vmatpush1.msra.mxu0 %v1952
        %1992 = vmatprep.subr.mxu0 0.0
        %1993 = vmatpush2.msra.mxu0 0.0
        %1994 = vmatprep.subr.mxu0 0.0
        %1995 = vmatpush2.msra.mxu0 0.0
        %1996 = vmatprep.subr.mxu0 0.0
        %1997 = vmatpush2.msra.mxu0 0.0
        %1998 = vmatprep.subr.mxu0 0.0
        %1999 = vmatpush2.msra.mxu0 0.0
        %2000 = vmatprep.subr.mxu0 0.0
        %2001 = vmatpush2.msra.mxu0 0.0
        %2002 = vmatprep.subr.mxu0 0.0
        %2003 = vmatpush2.msra.mxu0 0.0
        %2004 = vmatprep.subr.mxu0 0.0
        %2005 = vmatpush2.msra.mxu0 0.0
        %2006 = vmatprep.subr.mxu0 0.0
        %2007 = vmatpush2.msra.mxu0 0.0
        %2008 = vmatprep.subr.mxu0 0.0
        %2009 = vmatpush2.msra.mxu0 0.0
        %2010 = vmatprep.subr.mxu0 0.0
        %2011 = vmatpush2.msra.mxu0 0.0
        %2012 = vmatprep.subr.mxu0 0.0
        %2013 = vmatpush2.msra.mxu0 0.0
        %2014 = vmatprep.subr.mxu0 0.0
        %2015 = vmatpush2.msra.mxu0 0.0
        %2016 = vmatprep.subr.mxu0 0.0
        %2017 = vmatpush2.msra.mxu0 0.0
        %2018 = vmatprep.subr.mxu0 0.0
        %2019 = vmatpush2.msra.mxu0 0.0
        %2020 = vmatprep.subr.mxu0 0.0
        %2021 = vmatpush2.msra.mxu0 0.0
        %2022 = vmatprep.subr.mxu0 0.0
        %2023 = vmatpush2.msra.mxu0 0.0
        %2024 = vmatprep.mubr.f32.mxu0 0.0
        %2025 = vmatmul.mubr.f32.gmra.mxu0 %v888
        %v2026 = vpop.f32.mrf.mxu0
        %v2027 = vadd.f32 0.0, %v2026
        %v2028 = vpop.f32.mrf.mxu0
        %v2029 = vadd.f32 0.0, %v2028
        %2030 = vdwg.mxu0
        %v2031 = vsub.f32 %v1831, %v467
        %v2032 = vsub.f32 %v1832, %v497
        %v2033 = vsub.f32 %v2027, %v2031
        %v2034 = vsub.f32 %v2029, %v2032
        %v2035 = vmul.f32 %v2033, 0.05
        %v2036 = vmul.f32 %v2034, 0.05
        %v2037 = vadd.f32 %v1831, %v2035
        %v2038 = vadd.f32 %v1832, %v2036
        %s2039 = scalar_lea.vmem %s415, 40 [#allocation2]
        %v2040 = vld [vmem:[%s2039] sm:$0xff]
        %v2041 = vmul.f32 %v2040, 0.31622776
        %v2043 = vcombine.high %v2041, %v2041
        %v2045 = vadd.f32 %v2037, %v2041
        %v2046 = vadd.f32 %v2038, %v2043
        %v2048 = vsel %vm511, %v2045, 0
        %v2051 = vsel %vm511, %v2046, 0
        %2053 = vmatprep.subr.mxu0 0.0
        %2054 = vmatpush1.msra.mxu0 0.0
        %2055 = vmatprep.subr.mxu0 0.0
        %2056 = vmatpush1.msra.mxu0 0.0
        %2057 = vmatprep.subr.mxu0 0.0
        %2058 = vmatpush1.msra.mxu0 0.0
        %2059 = vmatprep.subr.mxu0 0.0
        %2060 = vmatpush1.msra.mxu0 0.0
        %2061 = vmatprep.subr.mxu0 0.0
        %2062 = vmatpush1.msra.mxu0 0.0
        %2063 = vmatprep.subr.mxu0 0.0
        %2064 = vmatpush1.msra.mxu0 0.0
        %2065 = vmatprep.subr.mxu0 0.0
        %2066 = vmatpush1.msra.mxu0 0.0
        %2067 = vmatprep.subr.mxu0 0.0
        %2068 = vmatpush1.msra.mxu0 0.0
        %2069 = vmatprep.subr.mxu0 0.0
        %2070 = vmatpush1.msra.mxu0 0.0
        %2071 = vmatprep.subr.mxu0 0.0
        %2072 = vmatpush1.msra.mxu0 0.0
        %2073 = vmatprep.subr.mxu0 0.0
        %2074 = vmatpush1.msra.mxu0 0.0
        %2075 = vmatprep.subr.mxu0 0.0
        %2076 = vmatpush1.msra.mxu0 0.0
        %2077 = vmatprep.subr.mxu0 0.0
        %2078 = vmatpush1.msra.mxu0 0.0
        %2079 = vmatprep.subr.mxu0 0.0
        %2080 = vmatpush1.msra.mxu0 0.0
        %2081 = vmatprep.subr.mxu0 0.0
        %2082 = vmatpush1.msra.mxu0 0.0
        %2083 = vmatprep.subr.mxu0 %v2051
        %2084 = vmatpush1.msra.mxu0 %v2048
        %2085 = vmatprep.subr.mxu0 0.0
        %2086 = vmatpush2.msra.mxu0 0.0
        %2087 = vmatprep.subr.mxu0 0.0
        %2088 = vmatpush2.msra.mxu0 0.0
        %2089 = vmatprep.subr.mxu0 0.0
        %2090 = vmatpush2.msra.mxu0 0.0
        %2091 = vmatprep.subr.mxu0 0.0
        %2092 = vmatpush2.msra.mxu0 0.0
        %2093 = vmatprep.subr.mxu0 0.0
        %2094 = vmatpush2.msra.mxu0 0.0
        %2095 = vmatprep.subr.mxu0 0.0
        %2096 = vmatpush2.msra.mxu0 0.0
        %2097 = vmatprep.subr.mxu0 0.0
        %2098 = vmatpush2.msra.mxu0 0.0
        %2099 = vmatprep.subr.mxu0 0.0
        %2100 = vmatpush2.msra.mxu0 0.0
        %2101 = vmatprep.subr.mxu0 0.0
        %2102 = vmatpush2.msra.mxu0 0.0
        %2103 = vmatprep.subr.mxu0 0.0
        %2104 = vmatpush2.msra.mxu0 0.0
        %2105 = vmatprep.subr.mxu0 0.0
        %2106 = vmatpush2.msra.mxu0 0.0
        %2107 = vmatprep.subr.mxu0 0.0
        %2108 = vmatpush2.msra.mxu0 0.0
        %2109 = vmatprep.subr.mxu0 0.0
        %2110 = vmatpush2.msra.mxu0 0.0
        %2111 = vmatprep.subr.mxu0 0.0
        %2112 = vmatpush2.msra.mxu0 0.0
        %2113 = vmatprep.subr.mxu0 0.0
        %2114 = vmatpush2.msra.mxu0 0.0
        %2115 = vmatprep.subr.mxu0 0.0
        %2116 = vmatpush2.msra.mxu0 0.0
        %2117 = vmatprep.mubr.f32.mxu0 0.0
        %2118 = vmatmul.mubr.f32.gmra.mxu0 %v729
        %v2119 = vpop.f32.mrf.mxu0
        %v2120 = vadd.f32 %v711, %v2119
        %v2121 = vpop.f32.mrf.mxu0
        %v2122 = vadd.f32 %v711, %v2121
        %2123 = vmatprep.mubr.f32.mxu0 0.0
        %2124 = vmatmul.mubr.f32.gmra.mxu0 %v732
        %v2125 = vpop.f32.mrf.mxu0
        %v2126 = vadd.f32 %v716, %v2125
        %v2127 = vpop.f32.mrf.mxu0
        %v2128 = vadd.f32 %v716, %v2127
        %2129 = vmatprep.mubr.f32.mxu0 0.0
        %2130 = vmatmul.mubr.f32.gmra.mxu0 %v735
        %v2131 = vpop.f32.mrf.mxu0
        %v2132 = vadd.f32 %v721, %v2131
        %v2133 = vpop.f32.mrf.mxu0
        %v2134 = vadd.f32 %v721, %v2133
        %2135 = vmatprep.mubr.f32.mxu0 0.0
        %2136 = vmatmul.mubr.f32.gmra.mxu0 %v738
        %v2137 = vpop.f32.mrf.mxu0
        %v2138 = vadd.f32 %v726, %v2137
        %v2139 = vpop.f32.mrf.mxu0
        %v2140 = vadd.f32 %v726, %v2139
        %2141 = vdwg.mxu0
        %v2142 = vtanh.pop %v2120
        %v2143 = vtanh.pop %v2122
        %v2144 = vtanh.pop %v2126
        %v2145 = vtanh.pop %v2128
        %v2146 = vtanh.pop %v2132
        %v2147 = vtanh.pop %v2134
        %v2148 = vtanh.pop %v2138
        %v2149 = vtanh.pop %v2140
        %v2150 = vmul.f32 %v2142, %v2142
        %v2151 = vmul.f32 %v2143, %v2143
        %v2152 = vmul.f32 %v2144, %v2144
        %v2153 = vmul.f32 %v2145, %v2145
        %v2154 = vmul.f32 %v2146, %v2146
        %v2155 = vmul.f32 %v2147, %v2147
        %v2156 = vmul.f32 %v2148, %v2148
        %v2157 = vmul.f32 %v2149, %v2149
        %v2158 = vsub.f32 1.0, %v2150
        %v2159 = vsub.f32 1.0, %v2151
        %v2160 = vsub.f32 1.0, %v2152
        %v2161 = vsub.f32 1.0, %v2153
        %v2162 = vsub.f32 1.0, %v2154
        %v2163 = vsub.f32 1.0, %v2155
        %v2164 = vsub.f32 1.0, %v2156
        %v2165 = vsub.f32 1.0, %v2157
        %v2166 = vmul.f32 %v2158, %v862
        %v2167 = vmul.f32 %v2159, %v862
        %v2168 = vmul.f32 %v2160, %v867
        %v2169 = vmul.f32 %v2161, %v867
        %v2170 = vmul.f32 %v2162, %v872
        %v2171 = vmul.f32 %v2163, %v872
        %v2172 = vmul.f32 %v2164, %v877
        %v2173 = vmul.f32 %v2165, %v877
        %2174 = vmatprep.subr.mxu0 0.0
        %2175 = vmatpush1.msra.mxu0 0.0
        %2176 = vmatprep.subr.mxu0 0.0
        %2177 = vmatpush1.msra.mxu0 0.0
        %2178 = vmatprep.subr.mxu0 0.0
        %2179 = vmatpush1.msra.mxu0 0.0
        %2180 = vmatprep.subr.mxu0 0.0
        %2181 = vmatpush1.msra.mxu0 0.0
        %2182 = vmatprep.subr.mxu0 0.0
        %2183 = vmatpush1.msra.mxu0 0.0
        %2184 = vmatprep.subr.mxu0 0.0
        %2185 = vmatpush1.msra.mxu0 0.0
        %2186 = vmatprep.subr.mxu0 0.0
        %2187 = vmatpush1.msra.mxu0 0.0
        %2188 = vmatprep.subr.mxu0 0.0
        %2189 = vmatpush1.msra.mxu0 0.0
        %2190 = vmatprep.subr.mxu0 0.0
        %2191 = vmatpush1.msra.mxu0 0.0
        %2192 = vmatprep.subr.mxu0 0.0
        %2193 = vmatpush1.msra.mxu0 0.0
        %2194 = vmatprep.subr.mxu0 0.0
        %2195 = vmatpush1.msra.mxu0 0.0
        %2196 = vmatprep.subr.mxu0 0.0
        %2197 = vmatpush1.msra.mxu0 0.0
        %2198 = vmatprep.subr.mxu0 %v2173
        %2199 = vmatpush1.msra.mxu0 %v2172
        %2200 = vmatprep.subr.mxu0 %v2171
        %2201 = vmatpush1.msra.mxu0 %v2170
        %2202 = vmatprep.subr.mxu0 %v2169
        %2203 = vmatpush1.msra.mxu0 %v2168
        %2204 = vmatprep.subr.mxu0 %v2167
        %2205 = vmatpush1.msra.mxu0 %v2166
        %2206 = vmatprep.subr.mxu0 0.0
        %2207 = vmatpush2.msra.mxu0 0.0
        %2208 = vmatprep.subr.mxu0 0.0
        %2209 = vmatpush2.msra.mxu0 0.0
        %2210 = vmatprep.subr.mxu0 0.0
        %2211 = vmatpush2.msra.mxu0 0.0
        %2212 = vmatprep.subr.mxu0 0.0
        %2213 = vmatpush2.msra.mxu0 0.0
        %2214 = vmatprep.subr.mxu0 0.0
        %2215 = vmatpush2.msra.mxu0 0.0
        %2216 = vmatprep.subr.mxu0 0.0
        %2217 = vmatpush2.msra.mxu0 0.0
        %2218 = vmatprep.subr.mxu0 0.0
        %2219 = vmatpush2.msra.mxu0 0.0
        %2220 = vmatprep.subr.mxu0 0.0
        %2221 = vmatpush2.msra.mxu0 0.0
        %2222 = vmatprep.subr.mxu0 0.0
        %2223 = vmatpush2.msra.mxu0 0.0
        %2224 = vmatprep.subr.mxu0 0.0
        %2225 = vmatpush2.msra.mxu0 0.0
        %2226 = vmatprep.subr.mxu0 0.0
        %2227 = vmatpush2.msra.mxu0 0.0
        %2228 = vmatprep.subr.mxu0 0.0
        %2229 = vmatpush2.msra.mxu0 0.0
        %2230 = vmatprep.subr.mxu0 0.0
        %2231 = vmatpush2.msra.mxu0 0.0
        %2232 = vmatprep.subr.mxu0 0.0
        %2233 = vmatpush2.msra.mxu0 0.0
        %2234 = vmatprep.subr.mxu0 0.0
        %2235 = vmatpush2.msra.mxu0 0.0
        %2236 = vmatprep.subr.mxu0 0.0
        %2237 = vmatpush2.msra.mxu0 0.0
        %2238 = vmatprep.mubr.f32.mxu0 0.0
        %2239 = vmatmul.mubr.f32.gmra.mxu0 %v888
        %v2240 = vpop.f32.mrf.mxu0
        %v2241 = vadd.f32 0.0, %v2240
        %v2242 = vpop.f32.mrf.mxu0
        %v2243 = vadd.f32 0.0, %v2242
        %2244 = vdwg.mxu0
        %v2245 = vsub.f32 %v2045, %v467
        %v2246 = vsub.f32 %v2046, %v497
        %v2247 = vsub.f32 %v2241, %v2245
        %v2248 = vsub.f32 %v2243, %v2246
        %v2249 = vmul.f32 %v2247, 0.05
        %v2250 = vmul.f32 %v2248, 0.05
        %v2251 = vadd.f32 %v2045, %v2249
        %v2252 = vadd.f32 %v2046, %v2250
        %s2253 = scalar_lea.vmem %s415, 48 [#allocation2]
        %v2254 = vld [vmem:[%s2253] sm:$0xff]
        %v2255 = vmul.f32 %v2254, 0.31622776
        %v2257 = vcombine.high %v2255, %v2255
        %v2259 = vadd.f32 %v2251, %v2255
        %v2260 = vadd.f32 %v2252, %v2257
        %v2262 = vsel %vm511, %v2259, 0
        %v2265 = vsel %vm511, %v2260, 0
        %2267 = vmatprep.subr.mxu0 0.0
        %2268 = vmatpush1.msra.mxu0 0.0
        %2269 = vmatprep.subr.mxu0 0.0
        %2270 = vmatpush1.msra.mxu0 0.0
        %2271 = vmatprep.subr.mxu0 0.0
        %2272 = vmatpush1.msra.mxu0 0.0
        %2273 = vmatprep.subr.mxu0 0.0
        %2274 = vmatpush1.msra.mxu0 0.0
        %2275 = vmatprep.subr.mxu0 0.0
        %2276 = vmatpush1.msra.mxu0 0.0
        %2277 = vmatprep.subr.mxu0 0.0
        %2278 = vmatpush1.msra.mxu0 0.0
        %2279 = vmatprep.subr.mxu0 0.0
        %2280 = vmatpush1.msra.mxu0 0.0
        %2281 = vmatprep.subr.mxu0 0.0
        %2282 = vmatpush1.msra.mxu0 0.0
        %2283 = vmatprep.subr.mxu0 0.0
        %2284 = vmatpush1.msra.mxu0 0.0
        %2285 = vmatprep.subr.mxu0 0.0
        %2286 = vmatpush1.msra.mxu0 0.0
        %2287 = vmatprep.subr.mxu0 0.0
        %2288 = vmatpush1.msra.mxu0 0.0
        %2289 = vmatprep.subr.mxu0 0.0
        %2290 = vmatpush1.msra.mxu0 0.0
        %2291 = vmatprep.subr.mxu0 0.0
        %2292 = vmatpush1.msra.mxu0 0.0
        %2293 = vmatprep.subr.mxu0 0.0
        %2294 = vmatpush1.msra.mxu0 0.0
        %2295 = vmatprep.subr.mxu0 0.0
        %2296 = vmatpush1.msra.mxu0 0.0
        %2297 = vmatprep.subr.mxu0 %v2265
        %2298 = vmatpush1.msra.mxu0 %v2262
        %2299 = vmatprep.subr.mxu0 0.0
        %2300 = vmatpush2.msra.mxu0 0.0
        %2301 = vmatprep.subr.mxu0 0.0
        %2302 = vmatpush2.msra.mxu0 0.0
        %2303 = vmatprep.subr.mxu0 0.0
        %2304 = vmatpush2.msra.mxu0 0.0
        %2305 = vmatprep.subr.mxu0 0.0
        %2306 = vmatpush2.msra.mxu0 0.0
        %2307 = vmatprep.subr.mxu0 0.0
        %2308 = vmatpush2.msra.mxu0 0.0
        %2309 = vmatprep.subr.mxu0 0.0
        %2310 = vmatpush2.msra.mxu0 0.0
        %2311 = vmatprep.subr.mxu0 0.0
        %2312 = vmatpush2.msra.mxu0 0.0
        %2313 = vmatprep.subr.mxu0 0.0
        %2314 = vmatpush2.msra.mxu0 0.0
        %2315 = vmatprep.subr.mxu0 0.0
        %2316 = vmatpush2.msra.mxu0 0.0
        %2317 = vmatprep.subr.mxu0 0.0
        %2318 = vmatpush2.msra.mxu0 0.0
        %2319 = vmatprep.subr.mxu0 0.0
        %2320 = vmatpush2.msra.mxu0 0.0
        %2321 = vmatprep.subr.mxu0 0.0
        %2322 = vmatpush2.msra.mxu0 0.0
        %2323 = vmatprep.subr.mxu0 0.0
        %2324 = vmatpush2.msra.mxu0 0.0
        %2325 = vmatprep.subr.mxu0 0.0
        %2326 = vmatpush2.msra.mxu0 0.0
        %2327 = vmatprep.subr.mxu0 0.0
        %2328 = vmatpush2.msra.mxu0 0.0
        %2329 = vmatprep.subr.mxu0 0.0
        %2330 = vmatpush2.msra.mxu0 0.0
        %2331 = vmatprep.mubr.f32.mxu0 0.0
        %2332 = vmatmul.mubr.f32.gmra.mxu0 %v729
        %v2333 = vpop.f32.mrf.mxu0
        %v2334 = vadd.f32 %v711, %v2333
        %v2335 = vpop.f32.mrf.mxu0
        %v2336 = vadd.f32 %v711, %v2335
        %2337 = vmatprep.mubr.f32.mxu0 0.0
        %2338 = vmatmul.mubr.f32.gmra.mxu0 %v732
        %v2339 = vpop.f32.mrf.mxu0
        %v2340 = vadd.f32 %v716, %v2339
        %v2341 = vpop.f32.mrf.mxu0
        %v2342 = vadd.f32 %v716, %v2341
        %2343 = vmatprep.mubr.f32.mxu0 0.0
        %2344 = vmatmul.mubr.f32.gmra.mxu0 %v735
        %v2345 = vpop.f32.mrf.mxu0
        %v2346 = vadd.f32 %v721, %v2345
        %v2347 = vpop.f32.mrf.mxu0
        %v2348 = vadd.f32 %v721, %v2347
        %2349 = vmatprep.mubr.f32.mxu0 0.0
        %2350 = vmatmul.mubr.f32.gmra.mxu0 %v738
        %v2351 = vpop.f32.mrf.mxu0
        %v2352 = vadd.f32 %v726, %v2351
        %v2353 = vpop.f32.mrf.mxu0
        %v2354 = vadd.f32 %v726, %v2353
        %2355 = vdwg.mxu0
        %v2356 = vtanh.pop %v2334
        %v2357 = vtanh.pop %v2336
        %v2358 = vtanh.pop %v2340
        %v2359 = vtanh.pop %v2342
        %v2360 = vtanh.pop %v2346
        %v2361 = vtanh.pop %v2348
        %v2362 = vtanh.pop %v2352
        %v2363 = vtanh.pop %v2354
        %v2364 = vmul.f32 %v2356, %v2356
        %v2365 = vmul.f32 %v2357, %v2357
        %v2366 = vmul.f32 %v2358, %v2358
        %v2367 = vmul.f32 %v2359, %v2359
        %v2368 = vmul.f32 %v2360, %v2360
        %v2369 = vmul.f32 %v2361, %v2361
        %v2370 = vmul.f32 %v2362, %v2362
        %v2371 = vmul.f32 %v2363, %v2363
        %v2372 = vsub.f32 1.0, %v2364
        %v2373 = vsub.f32 1.0, %v2365
        %v2374 = vsub.f32 1.0, %v2366
        %v2375 = vsub.f32 1.0, %v2367
        %v2376 = vsub.f32 1.0, %v2368
        %v2377 = vsub.f32 1.0, %v2369
        %v2378 = vsub.f32 1.0, %v2370
        %v2379 = vsub.f32 1.0, %v2371
        %v2380 = vmul.f32 %v2372, %v862
        %v2381 = vmul.f32 %v2373, %v862
        %v2382 = vmul.f32 %v2374, %v867
        %v2383 = vmul.f32 %v2375, %v867
        %v2384 = vmul.f32 %v2376, %v872
        %v2385 = vmul.f32 %v2377, %v872
        %v2386 = vmul.f32 %v2378, %v877
        %v2387 = vmul.f32 %v2379, %v877
        %2388 = vmatprep.subr.mxu0 0.0
        %2389 = vmatpush1.msra.mxu0 0.0
        %2390 = vmatprep.subr.mxu0 0.0
        %2391 = vmatpush1.msra.mxu0 0.0
        %2392 = vmatprep.subr.mxu0 0.0
        %2393 = vmatpush1.msra.mxu0 0.0
        %2394 = vmatprep.subr.mxu0 0.0
        %2395 = vmatpush1.msra.mxu0 0.0
        %2396 = vmatprep.subr.mxu0 0.0
        %2397 = vmatpush1.msra.mxu0 0.0
        %2398 = vmatprep.subr.mxu0 0.0
        %2399 = vmatpush1.msra.mxu0 0.0
        %2400 = vmatprep.subr.mxu0 0.0
        %2401 = vmatpush1.msra.mxu0 0.0
        %2402 = vmatprep.subr.mxu0 0.0
        %2403 = vmatpush1.msra.mxu0 0.0
        %2404 = vmatprep.subr.mxu0 0.0
        %2405 = vmatpush1.msra.mxu0 0.0
        %2406 = vmatprep.subr.mxu0 0.0
        %2407 = vmatpush1.msra.mxu0 0.0
        %2408 = vmatprep.subr.mxu0 0.0
        %2409 = vmatpush1.msra.mxu0 0.0
        %2410 = vmatprep.subr.mxu0 0.0
        %2411 = vmatpush1.msra.mxu0 0.0
        %2412 = vmatprep.subr.mxu0 %v2387
        %2413 = vmatpush1.msra.mxu0 %v2386
        %2414 = vmatprep.subr.mxu0 %v2385
        %2415 = vmatpush1.msra.mxu0 %v2384
        %2416 = vmatprep.subr.mxu0 %v2383
        %2417 = vmatpush1.msra.mxu0 %v2382
        %2418 = vmatprep.subr.mxu0 %v2381
        %2419 = vmatpush1.msra.mxu0 %v2380
        %2420 = vmatprep.subr.mxu0 0.0
        %2421 = vmatpush2.msra.mxu0 0.0
        %2422 = vmatprep.subr.mxu0 0.0
        %2423 = vmatpush2.msra.mxu0 0.0
        %2424 = vmatprep.subr.mxu0 0.0
        %2425 = vmatpush2.msra.mxu0 0.0
        %2426 = vmatprep.subr.mxu0 0.0
        %2427 = vmatpush2.msra.mxu0 0.0
        %2428 = vmatprep.subr.mxu0 0.0
        %2429 = vmatpush2.msra.mxu0 0.0
        %2430 = vmatprep.subr.mxu0 0.0
        %2431 = vmatpush2.msra.mxu0 0.0
        %2432 = vmatprep.subr.mxu0 0.0
        %2433 = vmatpush2.msra.mxu0 0.0
        %2434 = vmatprep.subr.mxu0 0.0
        %2435 = vmatpush2.msra.mxu0 0.0
        %2436 = vmatprep.subr.mxu0 0.0
        %2437 = vmatpush2.msra.mxu0 0.0
        %2438 = vmatprep.subr.mxu0 0.0
        %2439 = vmatpush2.msra.mxu0 0.0
        %2440 = vmatprep.subr.mxu0 0.0
        %2441 = vmatpush2.msra.mxu0 0.0
        %2442 = vmatprep.subr.mxu0 0.0
        %2443 = vmatpush2.msra.mxu0 0.0
        %2444 = vmatprep.subr.mxu0 0.0
        %2445 = vmatpush2.msra.mxu0 0.0
        %2446 = vmatprep.subr.mxu0 0.0
        %2447 = vmatpush2.msra.mxu0 0.0
        %2448 = vmatprep.subr.mxu0 0.0
        %2449 = vmatpush2.msra.mxu0 0.0
        %2450 = vmatprep.subr.mxu0 0.0
        %2451 = vmatpush2.msra.mxu0 0.0
        %2452 = vmatprep.mubr.f32.mxu0 0.0
        %2453 = vmatmul.mubr.f32.gmra.mxu0 %v888
        %v2454 = vpop.f32.mrf.mxu0
        %v2455 = vadd.f32 0.0, %v2454
        %v2456 = vpop.f32.mrf.mxu0
        %v2457 = vadd.f32 0.0, %v2456
        %2458 = vdwg.mxu0
        %v2459 = vsub.f32 %v2259, %v467
        %v2460 = vsub.f32 %v2260, %v497
        %v2461 = vsub.f32 %v2455, %v2459
        %v2462 = vsub.f32 %v2457, %v2460
        %v2463 = vmul.f32 %v2461, 0.05
        %v2464 = vmul.f32 %v2462, 0.05
        %v2465 = vadd.f32 %v2259, %v2463
        %v2466 = vadd.f32 %v2260, %v2464
        %s2467 = scalar_lea.vmem %s415, 56 [#allocation2]
        %v2468 = vld [vmem:[%s2467] sm:$0xff]
        %v2469 = vmul.f32 %v2468, 0.31622776
        %v2471 = vcombine.high %v2469, %v2469
        %v2473 = vadd.f32 %v2465, %v2469
        %v2474 = vadd.f32 %v2466, %v2471
        %v2476 = vsel %vm511, %v2473, 0
        %v2479 = vsel %vm511, %v2474, 0
        %2481 = vmatprep.subr.mxu0 0.0
        %2482 = vmatpush1.msra.mxu0 0.0
        %2483 = vmatprep.subr.mxu0 0.0
        %2484 = vmatpush1.msra.mxu0 0.0
        %2485 = vmatprep.subr.mxu0 0.0
        %2486 = vmatpush1.msra.mxu0 0.0
        %2487 = vmatprep.subr.mxu0 0.0
        %2488 = vmatpush1.msra.mxu0 0.0
        %2489 = vmatprep.subr.mxu0 0.0
        %2490 = vmatpush1.msra.mxu0 0.0
        %2491 = vmatprep.subr.mxu0 0.0
        %2492 = vmatpush1.msra.mxu0 0.0
        %2493 = vmatprep.subr.mxu0 0.0
        %2494 = vmatpush1.msra.mxu0 0.0
        %2495 = vmatprep.subr.mxu0 0.0
        %2496 = vmatpush1.msra.mxu0 0.0
        %2497 = vmatprep.subr.mxu0 0.0
        %2498 = vmatpush1.msra.mxu0 0.0
        %2499 = vmatprep.subr.mxu0 0.0
        %2500 = vmatpush1.msra.mxu0 0.0
        %2501 = vmatprep.subr.mxu0 0.0
        %2502 = vmatpush1.msra.mxu0 0.0
        %2503 = vmatprep.subr.mxu0 0.0
        %2504 = vmatpush1.msra.mxu0 0.0
        %2505 = vmatprep.subr.mxu0 0.0
        %2506 = vmatpush1.msra.mxu0 0.0
        %2507 = vmatprep.subr.mxu0 0.0
        %2508 = vmatpush1.msra.mxu0 0.0
        %2509 = vmatprep.subr.mxu0 0.0
        %2510 = vmatpush1.msra.mxu0 0.0
        %2511 = vmatprep.subr.mxu0 %v2479
        %2512 = vmatpush1.msra.mxu0 %v2476
        %2513 = vmatprep.subr.mxu0 0.0
        %2514 = vmatpush2.msra.mxu0 0.0
        %2515 = vmatprep.subr.mxu0 0.0
        %2516 = vmatpush2.msra.mxu0 0.0
        %2517 = vmatprep.subr.mxu0 0.0
        %2518 = vmatpush2.msra.mxu0 0.0
        %2519 = vmatprep.subr.mxu0 0.0
        %2520 = vmatpush2.msra.mxu0 0.0
        %2521 = vmatprep.subr.mxu0 0.0
        %2522 = vmatpush2.msra.mxu0 0.0
        %2523 = vmatprep.subr.mxu0 0.0
        %2524 = vmatpush2.msra.mxu0 0.0
        %2525 = vmatprep.subr.mxu0 0.0
        %2526 = vmatpush2.msra.mxu0 0.0
        %2527 = vmatprep.subr.mxu0 0.0
        %2528 = vmatpush2.msra.mxu0 0.0
        %2529 = vmatprep.subr.mxu0 0.0
        %2530 = vmatpush2.msra.mxu0 0.0
        %2531 = vmatprep.subr.mxu0 0.0
        %2532 = vmatpush2.msra.mxu0 0.0
        %2533 = vmatprep.subr.mxu0 0.0
        %2534 = vmatpush2.msra.mxu0 0.0
        %2535 = vmatprep.subr.mxu0 0.0
        %2536 = vmatpush2.msra.mxu0 0.0
        %2537 = vmatprep.subr.mxu0 0.0
        %2538 = vmatpush2.msra.mxu0 0.0
        %2539 = vmatprep.subr.mxu0 0.0
        %2540 = vmatpush2.msra.mxu0 0.0
        %2541 = vmatprep.subr.mxu0 0.0
        %2542 = vmatpush2.msra.mxu0 0.0
        %2543 = vmatprep.subr.mxu0 0.0
        %2544 = vmatpush2.msra.mxu0 0.0
        %2545 = vmatprep.mubr.f32.mxu0 0.0
        %2546 = vmatmul.mubr.f32.gmra.mxu0 %v729
        %v2547 = vpop.f32.mrf.mxu0
        %v2548 = vadd.f32 %v711, %v2547
        %v2549 = vpop.f32.mrf.mxu0
        %v2550 = vadd.f32 %v711, %v2549
        %2551 = vmatprep.mubr.f32.mxu0 0.0
        %2552 = vmatmul.mubr.f32.gmra.mxu0 %v732
        %v2553 = vpop.f32.mrf.mxu0
        %v2554 = vadd.f32 %v716, %v2553
        %v2555 = vpop.f32.mrf.mxu0
        %v2556 = vadd.f32 %v716, %v2555
        %2557 = vmatprep.mubr.f32.mxu0 0.0
        %2558 = vmatmul.mubr.f32.gmra.mxu0 %v735
        %v2559 = vpop.f32.mrf.mxu0
        %v2560 = vadd.f32 %v721, %v2559
        %v2561 = vpop.f32.mrf.mxu0
        %v2562 = vadd.f32 %v721, %v2561
        %2563 = vmatprep.mubr.f32.mxu0 0.0
        %2564 = vmatmul.mubr.f32.gmra.mxu0 %v738
        %v2565 = vpop.f32.mrf.mxu0
        %v2566 = vadd.f32 %v726, %v2565
        %v2567 = vpop.f32.mrf.mxu0
        %v2568 = vadd.f32 %v726, %v2567
        %2569 = vdwg.mxu0
        %v2570 = vtanh.pop %v2548
        %v2571 = vtanh.pop %v2550
        %v2572 = vtanh.pop %v2554
        %v2573 = vtanh.pop %v2556
        %v2574 = vtanh.pop %v2560
        %v2575 = vtanh.pop %v2562
        %v2576 = vtanh.pop %v2566
        %v2577 = vtanh.pop %v2568
        %v2578 = vmul.f32 %v2570, %v2570
        %v2579 = vmul.f32 %v2571, %v2571
        %v2580 = vmul.f32 %v2572, %v2572
        %v2581 = vmul.f32 %v2573, %v2573
        %v2582 = vmul.f32 %v2574, %v2574
        %v2583 = vmul.f32 %v2575, %v2575
        %v2584 = vmul.f32 %v2576, %v2576
        %v2585 = vmul.f32 %v2577, %v2577
        %v2586 = vsub.f32 1.0, %v2578
        %v2587 = vsub.f32 1.0, %v2579
        %v2588 = vsub.f32 1.0, %v2580
        %v2589 = vsub.f32 1.0, %v2581
        %v2590 = vsub.f32 1.0, %v2582
        %v2591 = vsub.f32 1.0, %v2583
        %v2592 = vsub.f32 1.0, %v2584
        %v2593 = vsub.f32 1.0, %v2585
        %v2594 = vmul.f32 %v2586, %v862
        %v2595 = vmul.f32 %v2587, %v862
        %v2596 = vmul.f32 %v2588, %v867
        %v2597 = vmul.f32 %v2589, %v867
        %v2598 = vmul.f32 %v2590, %v872
        %v2599 = vmul.f32 %v2591, %v872
        %v2600 = vmul.f32 %v2592, %v877
        %v2601 = vmul.f32 %v2593, %v877
        %2602 = vmatprep.subr.mxu0 0.0
        %2603 = vmatpush1.msra.mxu0 0.0
        %2604 = vmatprep.subr.mxu0 0.0
        %2605 = vmatpush1.msra.mxu0 0.0
        %2606 = vmatprep.subr.mxu0 0.0
        %2607 = vmatpush1.msra.mxu0 0.0
        %2608 = vmatprep.subr.mxu0 0.0
        %2609 = vmatpush1.msra.mxu0 0.0
        %2610 = vmatprep.subr.mxu0 0.0
        %2611 = vmatpush1.msra.mxu0 0.0
        %2612 = vmatprep.subr.mxu0 0.0
        %2613 = vmatpush1.msra.mxu0 0.0
        %2614 = vmatprep.subr.mxu0 0.0
        %2615 = vmatpush1.msra.mxu0 0.0
        %2616 = vmatprep.subr.mxu0 0.0
        %2617 = vmatpush1.msra.mxu0 0.0
        %2618 = vmatprep.subr.mxu0 0.0
        %2619 = vmatpush1.msra.mxu0 0.0
        %2620 = vmatprep.subr.mxu0 0.0
        %2621 = vmatpush1.msra.mxu0 0.0
        %2622 = vmatprep.subr.mxu0 0.0
        %2623 = vmatpush1.msra.mxu0 0.0
        %2624 = vmatprep.subr.mxu0 0.0
        %2625 = vmatpush1.msra.mxu0 0.0
        %2626 = vmatprep.subr.mxu0 %v2601
        %2627 = vmatpush1.msra.mxu0 %v2600
        %2628 = vmatprep.subr.mxu0 %v2599
        %2629 = vmatpush1.msra.mxu0 %v2598
        %2630 = vmatprep.subr.mxu0 %v2597
        %2631 = vmatpush1.msra.mxu0 %v2596
        %2632 = vmatprep.subr.mxu0 %v2595
        %2633 = vmatpush1.msra.mxu0 %v2594
        %2634 = vmatprep.subr.mxu0 0.0
        %2635 = vmatpush2.msra.mxu0 0.0
        %2636 = vmatprep.subr.mxu0 0.0
        %2637 = vmatpush2.msra.mxu0 0.0
        %2638 = vmatprep.subr.mxu0 0.0
        %2639 = vmatpush2.msra.mxu0 0.0
        %2640 = vmatprep.subr.mxu0 0.0
        %2641 = vmatpush2.msra.mxu0 0.0
        %2642 = vmatprep.subr.mxu0 0.0
        %2643 = vmatpush2.msra.mxu0 0.0
        %2644 = vmatprep.subr.mxu0 0.0
        %2645 = vmatpush2.msra.mxu0 0.0
        %2646 = vmatprep.subr.mxu0 0.0
        %2647 = vmatpush2.msra.mxu0 0.0
        %2648 = vmatprep.subr.mxu0 0.0
        %2649 = vmatpush2.msra.mxu0 0.0
        %2650 = vmatprep.subr.mxu0 0.0
        %2651 = vmatpush2.msra.mxu0 0.0
        %2652 = vmatprep.subr.mxu0 0.0
        %2653 = vmatpush2.msra.mxu0 0.0
        %2654 = vmatprep.subr.mxu0 0.0
        %2655 = vmatpush2.msra.mxu0 0.0
        %2656 = vmatprep.subr.mxu0 0.0
        %2657 = vmatpush2.msra.mxu0 0.0
        %2658 = vmatprep.subr.mxu0 0.0
        %2659 = vmatpush2.msra.mxu0 0.0
        %2660 = vmatprep.subr.mxu0 0.0
        %2661 = vmatpush2.msra.mxu0 0.0
        %2662 = vmatprep.subr.mxu0 0.0
        %2663 = vmatpush2.msra.mxu0 0.0
        %2664 = vmatprep.subr.mxu0 0.0
        %2665 = vmatpush2.msra.mxu0 0.0
        %2666 = vmatprep.mubr.f32.mxu0 0.0
        %2667 = vmatmul.mubr.f32.gmra.mxu0 %v888
        %v2668 = vpop.f32.mrf.mxu0
        %v2669 = vadd.f32 0.0, %v2668
        %v2670 = vpop.f32.mrf.mxu0
        %v2671 = vadd.f32 0.0, %v2670
        %2672 = vdwg.mxu0
        %v2673 = vsub.f32 %v2473, %v467
        %v2674 = vsub.f32 %v2474, %v497
        %v2675 = vsub.f32 %v2669, %v2673
        %v2676 = vsub.f32 %v2671, %v2674
        %v2677 = vmul.f32 %v2675, 0.05
        %v2678 = vmul.f32 %v2676, 0.05
        %v2679 = vadd.f32 %v2473, %v2677
        %v2680 = vadd.f32 %v2474, %v2678
        %s2681 = scalar_lea.vmem %s415, 64 [#allocation2]
        %v2682 = vld [vmem:[%s2681] sm:$0xff]
        %v2683 = vmul.f32 %v2682, 0.31622776
        %v2685 = vcombine.high %v2683, %v2683
        %v2687 = vadd.f32 %v2679, %v2683
        %v2688 = vadd.f32 %v2680, %v2685
        %v2690 = vsel %vm511, %v2687, 0
        %v2693 = vsel %vm511, %v2688, 0
        %2695 = vmatprep.subr.mxu0 0.0
        %2696 = vmatpush1.msra.mxu0 0.0
        %2697 = vmatprep.subr.mxu0 0.0
        %2698 = vmatpush1.msra.mxu0 0.0
        %2699 = vmatprep.subr.mxu0 0.0
        %2700 = vmatpush1.msra.mxu0 0.0
        %2701 = vmatprep.subr.mxu0 0.0
        %2702 = vmatpush1.msra.mxu0 0.0
        %2703 = vmatprep.subr.mxu0 0.0
        %2704 = vmatpush1.msra.mxu0 0.0
        %2705 = vmatprep.subr.mxu0 0.0
        %2706 = vmatpush1.msra.mxu0 0.0
        %2707 = vmatprep.subr.mxu0 0.0
        %2708 = vmatpush1.msra.mxu0 0.0
        %2709 = vmatprep.subr.mxu0 0.0
        %2710 = vmatpush1.msra.mxu0 0.0
        %2711 = vmatprep.subr.mxu0 0.0
        %2712 = vmatpush1.msra.mxu0 0.0
        %2713 = vmatprep.subr.mxu0 0.0
        %2714 = vmatpush1.msra.mxu0 0.0
        %2715 = vmatprep.subr.mxu0 0.0
        %2716 = vmatpush1.msra.mxu0 0.0
        %2717 = vmatprep.subr.mxu0 0.0
        %2718 = vmatpush1.msra.mxu0 0.0
        %2719 = vmatprep.subr.mxu0 0.0
        %2720 = vmatpush1.msra.mxu0 0.0
        %2721 = vmatprep.subr.mxu0 0.0
        %2722 = vmatpush1.msra.mxu0 0.0
        %2723 = vmatprep.subr.mxu0 0.0
        %2724 = vmatpush1.msra.mxu0 0.0
        %2725 = vmatprep.subr.mxu0 %v2693
        %2726 = vmatpush1.msra.mxu0 %v2690
        %2727 = vmatprep.subr.mxu0 0.0
        %2728 = vmatpush2.msra.mxu0 0.0
        %2729 = vmatprep.subr.mxu0 0.0
        %2730 = vmatpush2.msra.mxu0 0.0
        %2731 = vmatprep.subr.mxu0 0.0
        %2732 = vmatpush2.msra.mxu0 0.0
        %2733 = vmatprep.subr.mxu0 0.0
        %2734 = vmatpush2.msra.mxu0 0.0
        %2735 = vmatprep.subr.mxu0 0.0
        %2736 = vmatpush2.msra.mxu0 0.0
        %2737 = vmatprep.subr.mxu0 0.0
        %2738 = vmatpush2.msra.mxu0 0.0
        %2739 = vmatprep.subr.mxu0 0.0
        %2740 = vmatpush2.msra.mxu0 0.0
        %2741 = vmatprep.subr.mxu0 0.0
        %2742 = vmatpush2.msra.mxu0 0.0
        %2743 = vmatprep.subr.mxu0 0.0
        %2744 = vmatpush2.msra.mxu0 0.0
        %2745 = vmatprep.subr.mxu0 0.0
        %2746 = vmatpush2.msra.mxu0 0.0
        %2747 = vmatprep.subr.mxu0 0.0
        %2748 = vmatpush2.msra.mxu0 0.0
        %2749 = vmatprep.subr.mxu0 0.0
        %2750 = vmatpush2.msra.mxu0 0.0
        %2751 = vmatprep.subr.mxu0 0.0
        %2752 = vmatpush2.msra.mxu0 0.0
        %2753 = vmatprep.subr.mxu0 0.0
        %2754 = vmatpush2.msra.mxu0 0.0
        %2755 = vmatprep.subr.mxu0 0.0
        %2756 = vmatpush2.msra.mxu0 0.0
        %2757 = vmatprep.subr.mxu0 0.0
        %2758 = vmatpush2.msra.mxu0 0.0
        %2759 = vmatprep.mubr.f32.mxu0 0.0
        %2760 = vmatmul.mubr.f32.gmra.mxu0 %v729
        %v2761 = vpop.f32.mrf.mxu0
        %v2762 = vadd.f32 %v711, %v2761
        %v2763 = vpop.f32.mrf.mxu0
        %v2764 = vadd.f32 %v711, %v2763
        %2765 = vmatprep.mubr.f32.mxu0 0.0
        %2766 = vmatmul.mubr.f32.gmra.mxu0 %v732
        %v2767 = vpop.f32.mrf.mxu0
        %v2768 = vadd.f32 %v716, %v2767
        %v2769 = vpop.f32.mrf.mxu0
        %v2770 = vadd.f32 %v716, %v2769
        %2771 = vmatprep.mubr.f32.mxu0 0.0
        %2772 = vmatmul.mubr.f32.gmra.mxu0 %v735
        %v2773 = vpop.f32.mrf.mxu0
        %v2774 = vadd.f32 %v721, %v2773
        %v2775 = vpop.f32.mrf.mxu0
        %v2776 = vadd.f32 %v721, %v2775
        %2777 = vmatprep.mubr.f32.mxu0 0.0
        %2778 = vmatmul.mubr.f32.gmra.mxu0 %v738
        %v2779 = vpop.f32.mrf.mxu0
        %v2780 = vadd.f32 %v726, %v2779
        %v2781 = vpop.f32.mrf.mxu0
        %v2782 = vadd.f32 %v726, %v2781
        %2783 = vdwg.mxu0
        %v2784 = vtanh.pop %v2762
        %v2785 = vtanh.pop %v2764
        %v2786 = vtanh.pop %v2768
        %v2787 = vtanh.pop %v2770
        %v2788 = vtanh.pop %v2774
        %v2789 = vtanh.pop %v2776
        %v2790 = vtanh.pop %v2780
        %v2791 = vtanh.pop %v2782
        %v2792 = vmul.f32 %v2784, %v2784
        %v2793 = vmul.f32 %v2785, %v2785
        %v2794 = vmul.f32 %v2786, %v2786
        %v2795 = vmul.f32 %v2787, %v2787
        %v2796 = vmul.f32 %v2788, %v2788
        %v2797 = vmul.f32 %v2789, %v2789
        %v2798 = vmul.f32 %v2790, %v2790
        %v2799 = vmul.f32 %v2791, %v2791
        %v2800 = vsub.f32 1.0, %v2792
        %v2801 = vsub.f32 1.0, %v2793
        %v2802 = vsub.f32 1.0, %v2794
        %v2803 = vsub.f32 1.0, %v2795
        %v2804 = vsub.f32 1.0, %v2796
        %v2805 = vsub.f32 1.0, %v2797
        %v2806 = vsub.f32 1.0, %v2798
        %v2807 = vsub.f32 1.0, %v2799
        %v2808 = vmul.f32 %v2800, %v862
        %v2809 = vmul.f32 %v2801, %v862
        %v2810 = vmul.f32 %v2802, %v867
        %v2811 = vmul.f32 %v2803, %v867
        %v2812 = vmul.f32 %v2804, %v872
        %v2813 = vmul.f32 %v2805, %v872
        %v2814 = vmul.f32 %v2806, %v877
        %v2815 = vmul.f32 %v2807, %v877
        %2816 = vmatprep.subr.mxu0 0.0
        %2817 = vmatpush1.msra.mxu0 0.0
        %2818 = vmatprep.subr.mxu0 0.0
        %2819 = vmatpush1.msra.mxu0 0.0
        %2820 = vmatprep.subr.mxu0 0.0
        %2821 = vmatpush1.msra.mxu0 0.0
        %2822 = vmatprep.subr.mxu0 0.0
        %2823 = vmatpush1.msra.mxu0 0.0
        %2824 = vmatprep.subr.mxu0 0.0
        %2825 = vmatpush1.msra.mxu0 0.0
        %2826 = vmatprep.subr.mxu0 0.0
        %2827 = vmatpush1.msra.mxu0 0.0
        %2828 = vmatprep.subr.mxu0 0.0
        %2829 = vmatpush1.msra.mxu0 0.0
        %2830 = vmatprep.subr.mxu0 0.0
        %2831 = vmatpush1.msra.mxu0 0.0
        %2832 = vmatprep.subr.mxu0 0.0
        %2833 = vmatpush1.msra.mxu0 0.0
        %2834 = vmatprep.subr.mxu0 0.0
        %2835 = vmatpush1.msra.mxu0 0.0
        %2836 = vmatprep.subr.mxu0 0.0
        %2837 = vmatpush1.msra.mxu0 0.0
        %2838 = vmatprep.subr.mxu0 0.0
        %2839 = vmatpush1.msra.mxu0 0.0
        %2840 = vmatprep.subr.mxu0 %v2815
        %2841 = vmatpush1.msra.mxu0 %v2814
        %2842 = vmatprep.subr.mxu0 %v2813
        %2843 = vmatpush1.msra.mxu0 %v2812
        %2844 = vmatprep.subr.mxu0 %v2811
        %2845 = vmatpush1.msra.mxu0 %v2810
        %2846 = vmatprep.subr.mxu0 %v2809
        %2847 = vmatpush1.msra.mxu0 %v2808
        %2848 = vmatprep.subr.mxu0 0.0
        %2849 = vmatpush2.msra.mxu0 0.0
        %2850 = vmatprep.subr.mxu0 0.0
        %2851 = vmatpush2.msra.mxu0 0.0
        %2852 = vmatprep.subr.mxu0 0.0
        %2853 = vmatpush2.msra.mxu0 0.0
        %2854 = vmatprep.subr.mxu0 0.0
        %2855 = vmatpush2.msra.mxu0 0.0
        %2856 = vmatprep.subr.mxu0 0.0
        %2857 = vmatpush2.msra.mxu0 0.0
        %2858 = vmatprep.subr.mxu0 0.0
        %2859 = vmatpush2.msra.mxu0 0.0
        %2860 = vmatprep.subr.mxu0 0.0
        %2861 = vmatpush2.msra.mxu0 0.0
        %2862 = vmatprep.subr.mxu0 0.0
        %2863 = vmatpush2.msra.mxu0 0.0
        %2864 = vmatprep.subr.mxu0 0.0
        %2865 = vmatpush2.msra.mxu0 0.0
        %2866 = vmatprep.subr.mxu0 0.0
        %2867 = vmatpush2.msra.mxu0 0.0
        %2868 = vmatprep.subr.mxu0 0.0
        %2869 = vmatpush2.msra.mxu0 0.0
        %2870 = vmatprep.subr.mxu0 0.0
        %2871 = vmatpush2.msra.mxu0 0.0
        %2872 = vmatprep.subr.mxu0 0.0
        %2873 = vmatpush2.msra.mxu0 0.0
        %2874 = vmatprep.subr.mxu0 0.0
        %2875 = vmatpush2.msra.mxu0 0.0
        %2876 = vmatprep.subr.mxu0 0.0
        %2877 = vmatpush2.msra.mxu0 0.0
        %2878 = vmatprep.subr.mxu0 0.0
        %2879 = vmatpush2.msra.mxu0 0.0
        %2880 = vmatprep.mubr.f32.mxu0 0.0
        %2881 = vmatmul.mubr.f32.gmra.mxu0 %v888
        %v2882 = vpop.f32.mrf.mxu0
        %v2883 = vadd.f32 0.0, %v2882
        %v2884 = vpop.f32.mrf.mxu0
        %v2885 = vadd.f32 0.0, %v2884
        %2886 = vdwg.mxu0
        %v2887 = vsub.f32 %v2687, %v467
        %v2888 = vsub.f32 %v2688, %v497
        %v2889 = vsub.f32 %v2883, %v2887
        %v2890 = vsub.f32 %v2885, %v2888
        %v2891 = vmul.f32 %v2889, 0.05
        %v2892 = vmul.f32 %v2890, 0.05
        %v2893 = vadd.f32 %v2687, %v2891
        %v2894 = vadd.f32 %v2688, %v2892
        %s2895 = scalar_lea.vmem %s415, 72 [#allocation2]
        %v2896 = vld [vmem:[%s2895] sm:$0xff]
        %v2897 = vmul.f32 %v2896, 0.31622776
        %v2899 = vcombine.high %v2897, %v2897
        %v2901 = vadd.f32 %v2893, %v2897
        %v2902 = vadd.f32 %v2894, %v2899
        %v2905 = vcombine.low %v2901, %v2902
        %2907 = vst [vmem:[%s458] sm:$0xff] %v2905
        %s2908 = sand.u32 %s253, 1
        %s2909 = scalar_lea.sflag [#allocation5], %s2908
        %s2910 = sand.u32 %s253, 1
        %s2911 = smul.addr %s2910, 8
        %s2912 = scalar_lea.vmem [#allocation6], %s2911
        // Predicated region
        $region103: #{tpu_custom_call.1} parent=93 // pred_check
          %p2913 = pneg %p263
        $region104: #{tpu_custom_call.1} parent=93 // pred_check_branch
          %2915 = sbr.rel (%p2913) target = $region106
        $region105: #{tpu_custom_call.1} parent=93 // pred_region
          %s2916 = smul.u32 2, %s25
          %s2918 = ssub.s32 128, 128
          %2919 = vsyncadd %s2909, %s2918
          %s2920 = smul.addr %s2916, 64
          %s2921 = scalar_lea.hbm %s10, %s2920
          %s2923 = sshll.u32 %s2912, 4
          %s2924 = int_to_ptr.vmem [resolvable:$true] %s2923
          %2926 = dma.vmem_to_hbm [thread:$0]  %s2924, 128, %s2921, %s2909
        $region106: #{tpu_custom_call.1} parent=93 // pred_fallthru
          _
      $region94: #{tpu_custom_call.1} parent=5 // pred_fallthru
        _
      %p2927 = scmp.le.s32.totalorder 2, %s20
      // Predicated region
      $region107: #{tpu_custom_call.1} parent=5 // pred_check
        %p2928 = pneg %p2927
      $region108: #{tpu_custom_call.1} parent=5 // pred_check_branch
        %2930 = sbr.rel (%p2928) target = $region110
      $region109: #{tpu_custom_call.1} parent=5 // pred_region
        %s2931 = ssub.s32 %s20, 2
        // Predicated region
        $region111: #{tpu_custom_call.1} parent=109 // pred_check
          %p2932 = pneg %p269
        $region112: #{tpu_custom_call.1} parent=109 // pred_check_branch
          %2934 = sbr.rel (%p2932) target = $region114
        $region113: #{tpu_custom_call.1} parent=109 // pred_region
          %s2935 = sand.u32 %s254, 1
          %s2936 = scalar_lea.sflag [#allocation5], %s2935
          %s2937 = sand.u32 %s254, 1
          %s2938 = smul.addr %s2937, 8
          %s2939 = scalar_lea.vmem [#allocation6], %s2938
          %2940 = dma.done %s2936, 128
        $region114: #{tpu_custom_call.1} parent=109 // pred_fallthru
          _
      $region110: #{tpu_custom_call.1} parent=5 // pred_fallthru
        _
    $region6: #{tpu_custom_call.1} parent=1 // loop_footer
      %s24 = sadd.s32 1, %s20
    $region7: #{tpu_custom_call.1} parent=1 // loop_footer_branch
      %19 = sbr.rel target = $region3
    $region8: #{tpu_custom_call.1} parent=1 // loop_exit
      _
    %2941 = vsyncpa [#allocation4], 1
    %s2942 = scalar_lea.sflag [#allocation4], 1
    %2943 = vsyncpa %s2942, 1
    %2944 = vsyncpa [#allocation5], 1
    %s2945 = scalar_lea.sflag [#allocation5], 1
    %2946 = vsyncpa %s2945, 1

</llo_original>
